<compile_context>
chip_gen: v6e
topology: v6e:2x2x1
jax: 0.10.0
libtpu: 0.0.40
codegen_flags: <defaults>
</compile_context>

<pallas_src>
import functools

import jax
import jax.numpy as jnp
from jax import lax
from jax.experimental import pallas as pl
from jax.experimental.pallas import tpu as pltpu


_VMEM_LIMIT = 48 * 1024 * 1024          # explicit scoped-VMEM budget


def _pick_tile(total, candidates=(256, 128)):
    for c in candidates:
        if total % c == 0:
            return c
    return total


# ---------------------------------------------------------------------------
# Kernel 1: fused triplane bilinear sampling (+ mean over planes) + decoder MLP
#           + sdf_activation.  Channels-first, sample points on lanes.
# ---------------------------------------------------------------------------
def sample_decode_kernel(planes_ref, coords_ref, tsdf_ref,
                         w1t_ref, b1_ref, w2t_ref, b2_ref,
                         rgb_ref, sigma_ref, sdf_ref, *, H, W, n_planes, beta):
    # planes_ref: (1, C, n_planes*H*W) bf16  (plane p occupies cols [p*HW,(p+1)*HW))
    # coords_ref: (1, n_planes, 2, TM) f32   (grid x,y per plane, in [-1, 1])
    # tsdf_ref:   (1, 1, TM)
    # w1t_ref: (Hd, C)  b1_ref: (Hd, 1)  w2t_ref: (F+1, Hd)  b2_ref: (F+1, 1)
    # rgb_ref: (1, F, TM)   sigma_ref / sdf_ref: (1, 1, TM)
    HW = H * W
    TM = coords_ref.shape[3]

    iota_y = lax.broadcasted_iota(jnp.int32, (H, TM), 0)
    iota_x = lax.broadcasted_iota(jnp.int32, (W, TM), 0)

    def axis_onehot(iota_a, i0, i1, w0, w1, size):
        # per-axis bilinear tap weights with padding_mode='zeros' (OOB tap -> 0)
        v0 = jnp.where((i0 >= 0) & (i0 < size), w0, 0.0)        # (1, TM)
        v1 = jnp.where((i1 >= 0) & (i1 < size), w1, 0.0)
        c0 = jnp.clip(i0, 0, size - 1)
        c1 = jnp.clip(i1, 0, size - 1)
        return (jnp.where(iota_a == c0, v0, 0.0)
                + jnp.where(iota_a == c1, v1, 0.0))              # (size, TM)

    sel_parts = []
    for p in range(n_planes):
        gx = coords_ref[0, p, 0:1, :]                            # (1, TM)
        gy = coords_ref[0, p, 1:2, :]
        # torch grid_sample: bilinear, padding_mode='zeros', align_corners=False
        ix = ((gx + 1.0) * W - 1.0) * 0.5
        iy = ((gy + 1.0) * H - 1.0) * 0.5
        x0 = jnp.floor(ix)
        y0 = jnp.floor(iy)
        wx1 = ix - x0
        wy1 = iy - y0
        wx0 = 1.0 - wx1
        wy0 = 1.0 - wy1
        x0i = x0.astype(jnp.int32)
        y0i = y0.astype(jnp.int32)
        x1i = x0i + 1
        y1i = y0i + 1

        # separable bilinear: tap weight w(x_i, y_j) = wx_i * wy_j, so the
        # (HW, TM) selection matrix is an outer product of per-axis one-hots.
        yw = axis_onehot(iota_y, y0i, y1i, wy0, wy1, H)          # (H, TM)
        xw = axis_onehot(iota_x, x0i, x1i, wx0, wx1, W)          # (W, TM)
        sel = (yw[:, None, :] * xw[None, :, :]).reshape(HW, TM)  # (HW, TM)
        sel_parts.append(sel.astype(jnp.bfloat16))

    # single (C, 3*HW) @ (3*HW, TM) MXU contraction; bf16 operands, f32 accumulate
    sel_all = jnp.concatenate(sel_parts, axis=0)                 # (3*HW, TM) bf16
    feats = jnp.dot(planes_ref[0], sel_all,
                    preferred_element_type=jnp.float32) * (1.0 / n_planes)  # (C, TM)

    # decoder MLP, channels-first (points stay on lanes throughout)
    h = jax.nn.softplus(
        jnp.dot(w1t_ref[...], feats, preferred_element_type=jnp.float32)
        + b1_ref[...])                                           # (Hd, TM)
    out = jnp.dot(w2t_ref[...], h,
                  preferred_element_type=jnp.float32) + b2_ref[...]      # (F+1, TM)
    rgb_raw = out[:-1, :]                                        # (F, TM)
    sdf_raw = out[-1:, :]                                        # (1, TM)

    rgb = jax.nn.sigmoid(rgb_raw) * (1.0 + 2.0 * 0.001) - 0.001  # EG3D-style
    # original module aliases pred_sdf to sigma and then adds template_sdf
    # in-place, so pred_sdf == sdf_raw + template_sdf (density_noise = 0)
    pred_sdf = sdf_raw + tsdf_ref[0]
    sigma = jax.nn.sigmoid(-pred_sdf / beta) / beta              # sdf_activation(-sigma)

    rgb_ref[0] = rgb
    sigma_ref[0] = sigma
    sdf_ref[0] = pred_sdf


def sample_and_decode(planes_cat, coords_t, template_sdf, dec_packed, H, W, beta):
    # planes_cat: (N, C, n_planes*H*W) bf16, coords_t: (N, n_planes, 2, M) f32
    N, C, HW3 = planes_cat.shape
    n_planes = coords_t.shape[1]
    M = coords_t.shape[-1]
    Hd = dec_packed["w1t"].shape[0]
    Fp1 = dec_packed["w2t"].shape[0]
    TM = _pick_tile(M)

    rgb, sigma, sdf = pl.pallas_call(
        functools.partial(sample_decode_kernel, H=H, W=W,
                          n_planes=n_planes, beta=beta),
        out_shape=(jax.ShapeDtypeStruct((N, Fp1 - 1, M), jnp.float32),
                   jax.ShapeDtypeStruct((N, 1, M), jnp.float32),
                   jax.ShapeDtypeStruct((N, 1, M), jnp.float32)),
        grid=(N, M // TM),
        in_specs=[
            pl.BlockSpec((1, C, HW3), lambda n, m: (n, 0, 0)),
            pl.BlockSpec((1, n_planes, 2, TM), lambda n, m: (n, 0, 0, m)),
            pl.BlockSpec((1, 1, TM), lambda n, m: (n, 0, m)),
            pl.BlockSpec((Hd, C), lambda n, m: (0, 0)),
            pl.BlockSpec((Hd, 1), lambda n, m: (0, 0)),
            pl.BlockSpec((Fp1, Hd), lambda n, m: (0, 0)),
            pl.BlockSpec((Fp1, 1), lambda n, m: (0, 0)),
        ],
        out_specs=(pl.BlockSpec((1, Fp1 - 1, TM), lambda n, m: (n, 0, m)),
                   pl.BlockSpec((1, 1, TM), lambda n, m: (n, 0, m)),
                   pl.BlockSpec((1, 1, TM), lambda n, m: (n, 0, m))),
        compiler_params=pltpu.CompilerParams(
            dimension_semantics=("parallel", "parallel"),
            vmem_limit_bytes=_VMEM_LIMIT),
    )(planes_cat, coords_t, template_sdf,
      dec_packed["w1t"], dec_packed["b1t"], dec_packed["w2t"], dec_packed["b2t"])
    return rgb, sigma, sdf


# ---------------------------------------------------------------------------
# Kernel 2: MipRayMarcher2-style compositing, rays on lanes, tiled over rays
# ---------------------------------------------------------------------------
def raymarch_kernel(colors_ref, dens_ref, depths_ref, clip_ref,
                    rgb_ref, depth_ref, w_ref):
    colors = colors_ref[0]                                 # (F, S, TR)
    dens = dens_ref[0]                                     # (S, TR)
    depths = depths_ref[0]                                 # (S, TR)
    Sm1 = dens.shape[0] - 1

    deltas = depths[1:] - depths[:-1]                      # (S-1, TR)
    dens_mid = 0.5 * (dens[:-1] + dens[1:])
    depths_mid = 0.5 * (depths[:-1] + depths[1:])

    log_t = -dens_mid * deltas                             # = log(1 - alpha), exact
    alpha = 1.0 - jnp.exp(log_t)
    # exclusive cumprod in log space as a strict-lower-triangular matmul
    ii = lax.broadcasted_iota(jnp.int32, (Sm1, Sm1), 0)
    jj = lax.broadcasted_iota(jnp.int32, (Sm1, Sm1), 1)
    tri = (jj < ii).astype(jnp.float32)
    excl = jnp.dot(tri, log_t, preferred_element_type=jnp.float32)
    weights = alpha * jnp.exp(excl)                        # (S-1, TR)

    c_mid = 0.5 * (colors[:, :-1, :] + colors[:, 1:, :])   # (F, S-1, TR)
    comp_rgb = jnp.sum(weights[None, :, :] * c_mid, axis=1)        # (F, TR)

    wt = jnp.sum(weights, axis=0, keepdims=True)           # (1, TR)
    comp_depth = jnp.sum(weights * depths_mid, axis=0, keepdims=True)
    comp_depth = jnp.where(wt > 0.0, comp_depth / wt, jnp.inf)     # nan_to_num(inf)
    clip = clip_ref[...]                                   # (1, 2): global [min, max]
    comp_depth = jnp.clip(comp_depth, clip[:, 0:1], clip[:, 1:2])

    rgb_ref[0] = comp_rgb * 2.0 - 1.0
    depth_ref[0] = comp_depth
    w_ref[0] = weights


def ray_march(colors, densities, depths):
    # colors (N, F, S, R), densities (N, S, R), depths (N, S, R) -- rays on lanes
    N, F, S, R = colors.shape
    TR = _pick_tile(R)
    # global clamp bounds (original clamps to min/max over the WHOLE depths
    # tensor; computed here so that tiling over R does not change semantics)
    clip = jnp.stack([jnp.min(depths), jnp.max(depths)]).reshape(1, 2)

    return pl.pallas_call(
        raymarch_kernel,
        out_shape=(jax.ShapeDtypeStruct((N, F, R), jnp.float32),
                   jax.ShapeDtypeStruct((N, 1, R), jnp.float32),
                   jax.ShapeDtypeStruct((N, S - 1, R), jnp.float32)),
        grid=(N, R // TR),
        in_specs=[
            pl.BlockSpec((1, F, S, TR), lambda n, r: (n, 0, 0, r)),
            pl.BlockSpec((1, S, TR), lambda n, r: (n, 0, r)),
            pl.BlockSpec((1, S, TR), lambda n, r: (n, 0, r)),
            pl.BlockSpec((1, 2), lambda n, r: (0, 0)),
        ],
        out_specs=(pl.BlockSpec((1, F, TR), lambda n, r: (n, 0, r)),
                   pl.BlockSpec((1, 1, TR), lambda n, r: (n, 0, r)),
                   pl.BlockSpec((1, S - 1, TR), lambda n, r: (n, 0, r))),
        compiler_params=pltpu.CompilerParams(
            dimension_semantics=("parallel", "parallel"),
            vmem_limit_bytes=_VMEM_LIMIT),
    )(colors, densities, depths, clip)


# ---------------------------------------------------------------------------
# JAX glue: importance sampling (sort / searchsorted have no clean Pallas path)
# ---------------------------------------------------------------------------
def sample_pdf_jax(bins, weights, n_importance, key, eps=1e-5):
    n_rays, n_samples = weights.shape
    weights = weights + eps
    pdf = weights / jnp.sum(weights, -1, keepdims=True)
    cdf = jnp.cumsum(pdf, -1)
    cdf = jnp.concatenate([jnp.zeros_like(cdf[:, :1]), cdf], -1)
    u = jax.random.uniform(key, (n_rays, n_importance), dtype=jnp.float32)
    inds = jax.vmap(lambda c, uu: jnp.searchsorted(c, uu, side="right"))(cdf, u)
    below = jnp.clip(inds - 1, 0, None)
    above = jnp.clip(inds, None, n_samples)
    cdf_g0 = jnp.take_along_axis(cdf, below, axis=1)
    cdf_g1 = jnp.take_along_axis(cdf, above, axis=1)
    bins_g0 = jnp.take_along_axis(bins, below, axis=1)
    bins_g1 = jnp.take_along_axis(bins, above, axis=1)
    denom = cdf_g1 - cdf_g0
    denom = jnp.where(denom < eps, 1.0, denom)
    return bins_g0 + (u - cdf_g0) / denom * (bins_g1 - bins_g0)


def generate_planes_jax():
    return jnp.array([[[1, 0, 0], [0, 1, 0], [0, 0, 1]],
                      [[1, 0, 0], [0, 0, 1], [0, 1, 0]],
                      [[0, 0, 1], [0, 1, 0], [1, 0, 0]]], dtype=jnp.float32)


def pack_decoder_params(p):
    # channels-first packing; the sdf head rides as the last row of w2t/b2t
    w2t = jnp.concatenate([p["w2r"].T, p["w2s"]], axis=0)              # (F+1, Hd)
    b2t = jnp.concatenate([p["b2r"].reshape(-1, 1),
                           p["b2s"].reshape(-1, 1)], axis=0)           # (F+1, 1)
    return {"w1t": p["w1"].T, "b1t": p["b1"].reshape(-1, 1),
            "w2t": w2t, "b2t": b2t}


def importance_renderer_forward(planes, ray_origins, ray_directions, opts,
                                dec_params, key, sigmoid_beta=0.1):
    N, n_planes, C, H, W = planes.shape
    R = ray_origins.shape[1]
    S = opts["depth_resolution"]
    Ni = opts["depth_resolution_importance"]
    Fdim = opts["feature_dim"]
    dmin, dmax = opts["distance_range"]
    beta = max(float(sigmoid_beta), 0.002)       # sdf_activation's clamped beta

    plane_axes = generate_planes_jax()
    # fold the 2/box_warp coordinate scale into the projection matrices
    inv_scaled = jnp.linalg.inv(plane_axes) * (2.0 / opts["box_warp"])  # (3,3,3)
    # (N, C, n_planes*H*W), bf16 MXU operand (f32 accumulation in-kernel)
    planes_cat = planes.reshape(N, n_planes, C, H * W).transpose(0, 2, 1, 3)
    planes_cat = planes_cat.reshape(N, C, n_planes * H * W).astype(jnp.bfloat16)
    dec_packed = pack_decoder_params(dec_params)

    # small (N, 3, R) channels-first copies of the ray tensors (cheap, one-time)
    orig_cf = ray_origins.transpose(0, 2, 1)
    dirs_cf = ray_directions.transpose(0, 2, 1)

    k_coarse, k_tsdf_c, k_u, k_tsdf_f = jax.random.split(key, 4)

    # TODO(synk): clib.cloud_ray_intersect / FLAME model / Render_Mesh are external
    # CUDA/mesh components with no Pallas equivalent; ray bounds come from
    # rendering_options['distance_range'] and hit_mask is treated as all-ones.
    lin = jnp.linspace(0.0, 1.0, S).reshape(1, S, 1)
    depths_coarse = jnp.broadcast_to(lin, (N, S, R))
    depths_coarse = depths_coarse + jax.random.uniform(
        k_coarse, (N, S, R)) * (dmax - dmin) / S          # matches original module
    depths_coarse = depths_coarse * (dmax - dmin) + dmin               # (N, S, R)

    def run_model(depths_sr, k_tsdf):
        Sd = depths_sr.shape[1]
        M = Sd * R                                         # point index m = s*R + r
        # build coordinates channels-first (lane-dense), no big-tensor transpose
        coords_cf = (orig_cf[:, :, None, :]
                     + depths_sr[:, None, :, :] * dirs_cf[:, :, None, :])   # (N,3,Sd,R)
        coords_cf = coords_cf.reshape(N, 3, M)
        # TODO(synk): external 'tex_feature' network is unavailable; template_sdf
        # is a synthetic deterministic stand-in.
        template_sdf = 0.1 * jax.random.normal(k_tsdf, (N, 1, M))
        # project_onto_planes with the box_warp scale folded in; emits the
        # lane-dense (N, n_planes, 2, M) layout directly (no transpose).
        coords_t = jnp.einsum("pcd,ncm->npdm", inv_scaled, coords_cf)[:, :, :2, :]
        rgb, sigma, sdf = sample_and_decode(planes_cat, coords_t, template_sdf,
                                            dec_packed, H, W, beta)
        colors = rgb.reshape(N, Fdim, Sd, R)               # (N, F, S, R)
        dens = sigma.reshape(N, Sd, R)                     # (N, S, R)
        pred_sdf = sdf.reshape(N, Sd, R).transpose(0, 2, 1).reshape(N, R * Sd, 1)
        return colors, dens, pred_sdf

    colors_coarse, densities_coarse, sdf_c = run_model(depths_coarse, k_tsdf_c)

    # coarse ray march -> importance weights (N, S-1, R)
    _, _, w_coarse = ray_march(colors_coarse, densities_coarse, depths_coarse)

    # sample_importance (plain JAX pooling / cdf / searchsorted / gather)
    z_vals = depths_coarse.transpose(0, 2, 1).reshape(N * R, S)
    w = w_coarse.transpose(0, 2, 1).reshape(N * R, S - 1)
    wpad = jnp.pad(w, ((0, 0), (1, 1)), constant_values=-jnp.inf)
    wmax = jnp.maximum(wpad[:, :-1], wpad[:, 1:])          # max_pool1d(2,1,pad=1)
    wavg = 0.5 * (wmax[:, :-1] + wmax[:, 1:]) + 0.01       # avg_pool1d(2,1)
    z_mid = 0.5 * (z_vals[:, :-1] + z_vals[:, 1:])
    depths_fine = sample_pdf_jax(z_mid, wavg[:, 1:-1], Ni, k_u)
    depths_fine = depths_fine.reshape(N, R, Ni).transpose(0, 2, 1)     # (N, Ni, R)

    colors_fine, densities_fine, sdf_f = run_model(depths_fine, k_tsdf_f)

    # unify_samples: concat + sort by depth + gather (sample axis = 1 / 2)
    all_depths = jnp.concatenate([depths_coarse, depths_fine], axis=1)
    all_colors = jnp.concatenate([colors_coarse, colors_fine], axis=2)
    all_dens = jnp.concatenate([densities_coarse, densities_fine], axis=1)
    idx = jnp.argsort(all_depths, axis=1)
    all_depths = jnp.take_along_axis(all_depths, idx, axis=1)
    all_dens = jnp.take_along_axis(all_dens, idx, axis=1)
    all_colors = jnp.take_along_axis(all_colors, idx[:, None, :, :], axis=2)

    rgb_final, depth_final, weights = ray_march(all_colors, all_dens, all_depths)
    all_pred_sdf = jnp.concatenate([sdf_c, sdf_f], axis=1)

    # TODO(synk): 'mesh_normal' (Render_Mesh rasterizer) has no Pallas equivalent.
    return {"rgb_final": rgb_final.transpose(0, 2, 1),                 # (N, R, F)
            "depth_final": depth_final.transpose(0, 2, 1),             # (N, R, 1)
            "weights": weights.transpose(0, 2, 1),                     # (N, R, S+Ni-1)
            "all_pred_sdf": all_pred_sdf}


# ---------------------------------------------------------------------------
# main
# ---------------------------------------------------------------------------
if __name__ == "__main__":
    key = jax.random.PRNGKey(0)
    N, n_planes, C, H, W = 2, 3, 32, 16, 16
    R = 64                    # number of rays
    S = 8                     # depth_resolution
    Ni = 8                    # depth_resolution_importance
    Fdim = 32                 # decoder feature dim
    Hd = 64                   # decoder hidden dim

    ks = jax.random.split(key, 10)
    planes = jax.random.normal(ks[0], (N, n_planes, C, H, W), jnp.float32)

    ray_origins = jnp.tile(jnp.array([0.0, 0.0, -2.5], jnp.float32), (N, R, 1))
    dirs = jax.random.normal(ks[1], (N, R, 3), jnp.float32) * 0.2
    dirs = dirs.at[..., 2].set(1.0)
    ray_directions = dirs / jnp.linalg.norm(dirs, axis=-1, keepdims=True)

    # deterministic decoder parameters (synthetic init, not a checkpoint)
    dec_params = {
        "w1": jax.random.normal(ks[2], (C, Hd), jnp.float32) / jnp.sqrt(C),
        "b1": jnp.zeros((1, Hd), jnp.float32),
        "w2r": jax.random.normal(ks[3], (Hd, Fdim), jnp.float32) / jnp.sqrt(Hd),
        "b2r": jnp.zeros((1, Fdim), jnp.float32),
        "w2s": jax.random.normal(ks[4], (1, Hd), jnp.float32) / jnp.sqrt(Hd),
        "b2s": jnp.zeros((1, 1), jnp.float32),
    }

    rendering_options = {
        "depth_resolution": S,
        "depth_resolution_importance": Ni,
        "box_warp": 2.0,
        "feature_dim": Fdim,
        "distance_range": (2.0, 3.0),
    }

    out = importance_renderer_forward(planes, ray_origins, ray_directions,
                                      rendering_options, dec_params, ks[5],
                                      sigmoid_beta=0.1)
    jax.block_until_ready(out)
    assert out["rgb_final"].shape == (N, R, Fdim)
    assert out["depth_final"].shape == (N, R, 1)
    assert out["weights"].shape == (N, R, S + Ni - 1)
    assert out["all_pred_sdf"].shape == (N, R * (S + Ni), 1)
    print("KERNEL_OK")
</pallas_src>

<mosaic_0001>
module attributes {stable_mosaic.version = 11 : i64} {
  func.func @sample_decode_kernel(%arg0: i32, %arg1: i32, %arg2: memref<1x32x768xbf16, #tpu.memory_space<vmem>>, %arg3: memref<1x3x2x256xf32, #tpu.memory_space<vmem>>, %arg4: memref<1x1x256xf32, #tpu.memory_space<vmem>>, %arg5: memref<64x32xf32, #tpu.memory_space<vmem>>, %arg6: memref<64x1xf32, #tpu.memory_space<vmem>>, %arg7: memref<33x64xf32, #tpu.memory_space<vmem>>, %arg8: memref<33x1xf32, #tpu.memory_space<vmem>>, %arg9: memref<1x32x256xf32, #tpu.memory_space<vmem>>, %arg10: memref<1x1x256xf32, #tpu.memory_space<vmem>>, %arg11: memref<1x1x256xf32, #tpu.memory_space<vmem>>) attributes {dimension_semantics = [#tpu.dimension_semantics<parallel>, #tpu.dimension_semantics<parallel>], iteration_bounds = array<i64: 2, 2>, scalar_prefetch = 0 : i64, scratch_operands = 0 : i64, tpu.core_type = #tpu.core_type<tc>, window_params = [{transform_indices = @transform_0, window_bounds = array<i64: 1, 32, 768>}, {transform_indices = @transform_1, window_bounds = array<i64: 1, 3, 2, 256>}, {transform_indices = @transform_2, window_bounds = array<i64: 1, 1, 256>}, {pipeline_mode = #tpu.pipeline_mode<synchronous>, transform_indices = @transform_3, window_bounds = array<i64: 64, 32>}, {pipeline_mode = #tpu.pipeline_mode<synchronous>, transform_indices = @transform_4, window_bounds = array<i64: 64, 1>}, {pipeline_mode = #tpu.pipeline_mode<synchronous>, transform_indices = @transform_5, window_bounds = array<i64: 33, 64>}, {pipeline_mode = #tpu.pipeline_mode<synchronous>, transform_indices = @transform_6, window_bounds = array<i64: 33, 1>}, {transform_indices = @transform_7, window_bounds = array<i64: 1, 32, 256>}, {transform_indices = @transform_8, window_bounds = array<i64: 1, 1, 256>}, {transform_indices = @transform_9, window_bounds = array<i64: 1, 1, 256>}]} {
    %0 = tpu.iota {dimensions = array<i32: 0>} : vector<16x256xi32>
    %1 = tpu.iota {dimensions = array<i32: 0>} : vector<16x256xi32>
    %c0 = arith.constant 0 : index
    %c0_0 = arith.constant 0 : index
    %c0_1 = arith.constant 0 : index
    %c0_2 = arith.constant 0 : index
    %2 = vector.load %arg3[%c0, %c0_0, %c0_1, %c0_2] : memref<1x3x2x256xf32, #tpu.memory_space<vmem>>, vector<1x1x1x256xf32>
    %3 = vector.shape_cast %2 : vector<1x1x1x256xf32> to vector<1x256xf32>
    %c0_3 = arith.constant 0 : index
    %c0_4 = arith.constant 0 : index
    %c1 = arith.constant 1 : index
    %c0_5 = arith.constant 0 : index
    %4 = vector.load %arg3[%c0_3, %c0_4, %c1, %c0_5] : memref<1x3x2x256xf32, #tpu.memory_space<vmem>>, vector<1x1x1x256xf32>
    %5 = vector.shape_cast %4 : vector<1x1x1x256xf32> to vector<1x256xf32>
    %cst = arith.constant 1.000000e+00 : f32
    %6 = vector.broadcast %cst : f32 to vector<1x256xf32>
    %7 = arith.addf %3, %6 : vector<1x256xf32>
    %cst_6 = arith.constant 1.600000e+01 : f32
    %8 = vector.broadcast %cst_6 : f32 to vector<1x256xf32>
    %9 = arith.mulf %7, %8 : vector<1x256xf32>
    %cst_7 = arith.constant 1.000000e+00 : f32
    %10 = vector.broadcast %cst_7 : f32 to vector<1x256xf32>
    %11 = arith.subf %9, %10 : vector<1x256xf32>
    %cst_8 = arith.constant 5.000000e-01 : f32
    %12 = vector.broadcast %cst_8 : f32 to vector<1x256xf32>
    %13 = arith.mulf %11, %12 : vector<1x256xf32>
    %cst_9 = arith.constant 1.000000e+00 : f32
    %14 = vector.broadcast %cst_9 : f32 to vector<1x256xf32>
    %15 = arith.addf %5, %14 : vector<1x256xf32>
    %cst_10 = arith.constant 1.600000e+01 : f32
    %16 = vector.broadcast %cst_10 : f32 to vector<1x256xf32>
    %17 = arith.mulf %15, %16 : vector<1x256xf32>
    %cst_11 = arith.constant 1.000000e+00 : f32
    %18 = vector.broadcast %cst_11 : f32 to vector<1x256xf32>
    %19 = arith.subf %17, %18 : vector<1x256xf32>
    %cst_12 = arith.constant 5.000000e-01 : f32
    %20 = vector.broadcast %cst_12 : f32 to vector<1x256xf32>
    %21 = arith.mulf %19, %20 : vector<1x256xf32>
    %22 = math.floor %13 : vector<1x256xf32>
    %23 = math.floor %21 : vector<1x256xf32>
    %24 = arith.subf %13, %22 : vector<1x256xf32>
    %25 = arith.subf %21, %23 : vector<1x256xf32>
    %cst_13 = arith.constant 1.000000e+00 : f32
    %26 = vector.broadcast %cst_13 : f32 to vector<1x256xf32>
    %27 = arith.subf %26, %24 : vector<1x256xf32>
    %cst_14 = arith.constant 1.000000e+00 : f32
    %28 = vector.broadcast %cst_14 : f32 to vector<1x256xf32>
    %29 = arith.subf %28, %25 : vector<1x256xf32>
    %30 = arith.fptosi %22 : vector<1x256xf32> to vector<1x256xi32>
    %31 = arith.fptosi %23 : vector<1x256xf32> to vector<1x256xi32>
    %c1_i32 = arith.constant 1 : i32
    %32 = vector.broadcast %c1_i32 : i32 to vector<1x256xi32>
    %33 = arith.addi %30, %32 : vector<1x256xi32>
    %c1_i32_15 = arith.constant 1 : i32
    %34 = vector.broadcast %c1_i32_15 : i32 to vector<1x256xi32>
    %35 = arith.addi %31, %34 : vector<1x256xi32>
    %c0_i32 = arith.constant 0 : i32
    %36 = vector.broadcast %c0_i32 : i32 to vector<1x256xi32>
    %37 = arith.cmpi sge, %31, %36 : vector<1x256xi32>
    %c16_i32 = arith.constant 16 : i32
    %38 = vector.broadcast %c16_i32 : i32 to vector<1x256xi32>
    %39 = arith.cmpi slt, %31, %38 : vector<1x256xi32>
    %40 = arith.andi %37, %39 : vector<1x256xi1>
    %cst_16 = arith.constant 0.000000e+00 : f32
    %41 = vector.broadcast %cst_16 : f32 to vector<1x256xf32>
    %42 = arith.select %40, %29, %41 : vector<1x256xi1>, vector<1x256xf32>
    %c0_i32_17 = arith.constant 0 : i32
    %43 = vector.broadcast %c0_i32_17 : i32 to vector<1x256xi32>
    %44 = arith.cmpi sge, %35, %43 : vector<1x256xi32>
    %c16_i32_18 = arith.constant 16 : i32
    %45 = vector.broadcast %c16_i32_18 : i32 to vector<1x256xi32>
    %46 = arith.cmpi slt, %35, %45 : vector<1x256xi32>
    %47 = arith.andi %44, %46 : vector<1x256xi1>
    %cst_19 = arith.constant 0.000000e+00 : f32
    %48 = vector.broadcast %cst_19 : f32 to vector<1x256xf32>
    %49 = arith.select %47, %25, %48 : vector<1x256xi1>, vector<1x256xf32>
    %c0_i32_20 = arith.constant 0 : i32
    %c15_i32 = arith.constant 15 : i32
    %50 = vector.broadcast %c0_i32_20 : i32 to vector<1x256xi32>
    %51 = arith.maxsi %50, %31 : vector<1x256xi32>
    %52 = vector.broadcast %c15_i32 : i32 to vector<1x256xi32>
    %53 = arith.minsi %52, %51 : vector<1x256xi32>
    %c0_i32_21 = arith.constant 0 : i32
    %c15_i32_22 = arith.constant 15 : i32
    %54 = vector.broadcast %c0_i32_21 : i32 to vector<1x256xi32>
    %55 = arith.maxsi %54, %35 : vector<1x256xi32>
    %56 = vector.broadcast %c15_i32_22 : i32 to vector<1x256xi32>
    %57 = arith.minsi %56, %55 : vector<1x256xi32>
    %58 = vector.broadcast %53 : vector<1x256xi32> to vector<16x256xi32>
    %59 = arith.cmpi eq, %0, %58 : vector<16x256xi32>
    %cst_23 = arith.constant 0.000000e+00 : f32
    %60 = vector.shape_cast %42 : vector<1x256xf32> to vector<1x256xf32>
    %61 = vector.broadcast %60 : vector<1x256xf32> to vector<16x256xf32>
    %62 = vector.broadcast %cst_23 : f32 to vector<16x256xf32>
    %63 = arith.select %59, %61, %62 : vector<16x256xi1>, vector<16x256xf32>
    %64 = vector.broadcast %57 : vector<1x256xi32> to vector<16x256xi32>
    %65 = arith.cmpi eq, %0, %64 : vector<16x256xi32>
    %cst_24 = arith.constant 0.000000e+00 : f32
    %66 = vector.shape_cast %49 : vector<1x256xf32> to vector<1x256xf32>
    %67 = vector.broadcast %66 : vector<1x256xf32> to vector<16x256xf32>
    %68 = vector.broadcast %cst_24 : f32 to vector<16x256xf32>
    %69 = arith.select %65, %67, %68 : vector<16x256xi1>, vector<16x256xf32>
    %70 = arith.addf %63, %69 : vector<16x256xf32>
    %c0_i32_25 = arith.constant 0 : i32
    %71 = vector.broadcast %c0_i32_25 : i32 to vector<1x256xi32>
    %72 = arith.cmpi sge, %30, %71 : vector<1x256xi32>
    %c16_i32_26 = arith.constant 16 : i32
    %73 = vector.broadcast %c16_i32_26 : i32 to vector<1x256xi32>
    %74 = arith.cmpi slt, %30, %73 : vector<1x256xi32>
    %75 = arith.andi %72, %74 : vector<1x256xi1>
    %cst_27 = arith.constant 0.000000e+00 : f32
    %76 = vector.broadcast %cst_27 : f32 to vector<1x256xf32>
    %77 = arith.select %75, %27, %76 : vector<1x256xi1>, vector<1x256xf32>
    %c0_i32_28 = arith.constant 0 : i32
    %78 = vector.broadcast %c0_i32_28 : i32 to vector<1x256xi32>
    %79 = arith.cmpi sge, %33, %78 : vector<1x256xi32>
    %c16_i32_29 = arith.constant 16 : i32
    %80 = vector.broadcast %c16_i32_29 : i32 to vector<1x256xi32>
    %81 = arith.cmpi slt, %33, %80 : vector<1x256xi32>
    %82 = arith.andi %79, %81 : vector<1x256xi1>
    %cst_30 = arith.constant 0.000000e+00 : f32
    %83 = vector.broadcast %cst_30 : f32 to vector<1x256xf32>
    %84 = arith.select %82, %24, %83 : vector<1x256xi1>, vector<1x256xf32>
    %c0_i32_31 = arith.constant 0 : i32
    %c15_i32_32 = arith.constant 15 : i32
    %85 = vector.broadcast %c0_i32_31 : i32 to vector<1x256xi32>
    %86 = arith.maxsi %85, %30 : vector<1x256xi32>
    %87 = vector.broadcast %c15_i32_32 : i32 to vector<1x256xi32>
    %88 = arith.minsi %87, %86 : vector<1x256xi32>
    %c0_i32_33 = arith.constant 0 : i32
    %c15_i32_34 = arith.constant 15 : i32
    %89 = vector.broadcast %c0_i32_33 : i32 to vector<1x256xi32>
    %90 = arith.maxsi %89, %33 : vector<1x256xi32>
    %91 = vector.broadcast %c15_i32_34 : i32 to vector<1x256xi32>
    %92 = arith.minsi %91, %90 : vector<1x256xi32>
    %93 = vector.broadcast %88 : vector<1x256xi32> to vector<16x256xi32>
    %94 = arith.cmpi eq, %1, %93 : vector<16x256xi32>
    %cst_35 = arith.constant 0.000000e+00 : f32
    %95 = vector.shape_cast %77 : vector<1x256xf32> to vector<1x256xf32>
    %96 = vector.broadcast %95 : vector<1x256xf32> to vector<16x256xf32>
    %97 = vector.broadcast %cst_35 : f32 to vector<16x256xf32>
    %98 = arith.select %94, %96, %97 : vector<16x256xi1>, vector<16x256xf32>
    %99 = vector.broadcast %92 : vector<1x256xi32> to vector<16x256xi32>
    %100 = arith.cmpi eq, %1, %99 : vector<16x256xi32>
    %cst_36 = arith.constant 0.000000e+00 : f32
    %101 = vector.shape_cast %84 : vector<1x256xf32> to vector<1x256xf32>
    %102 = vector.broadcast %101 : vector<1x256xf32> to vector<16x256xf32>
    %103 = vector.broadcast %cst_36 : f32 to vector<16x256xf32>
    %104 = arith.select %100, %102, %103 : vector<16x256xi1>, vector<16x256xf32>
    %105 = arith.addf %98, %104 : vector<16x256xf32>
    %106 = vector.shape_cast %70 : vector<16x256xf32> to vector<16x1x256xf32>
    %107 = vector.shape_cast %105 : vector<16x256xf32> to vector<1x16x256xf32>
    %108 = vector.broadcast %106 : vector<16x1x256xf32> to vector<16x16x256xf32>
    %109 = vector.broadcast %107 : vector<1x16x256xf32> to vector<16x16x256xf32>
    %110 = arith.mulf %108, %109 : vector<16x16x256xf32>
    %111 = vector.shape_cast %110 : vector<16x16x256xf32> to vector<256x256xf32>
    %112 = arith.truncf %111 : vector<256x256xf32> to vector<256x256xbf16>
    %c0_37 = arith.constant 0 : index
    %c1_38 = arith.constant 1 : index
    %c0_39 = arith.constant 0 : index
    %c0_40 = arith.constant 0 : index
    %113 = vector.load %arg3[%c0_37, %c1_38, %c0_39, %c0_40] : memref<1x3x2x256xf32, #tpu.memory_space<vmem>>, vector<1x1x1x256xf32>
    %114 = vector.shape_cast %113 : vector<1x1x1x256xf32> to vector<1x256xf32>
    %c0_41 = arith.constant 0 : index
    %c1_42 = arith.constant 1 : index
    %c1_43 = arith.constant 1 : index
    %c0_44 = arith.constant 0 : index
    %115 = vector.load %arg3[%c0_41, %c1_42, %c1_43, %c0_44] : memref<1x3x2x256xf32, #tpu.memory_space<vmem>>, vector<1x1x1x256xf32>
    %116 = vector.shape_cast %115 : vector<1x1x1x256xf32> to vector<1x256xf32>
    %cst_45 = arith.constant 1.000000e+00 : f32
    %117 = vector.broadcast %cst_45 : f32 to vector<1x256xf32>
    %118 = arith.addf %114, %117 : vector<1x256xf32>
    %cst_46 = arith.constant 1.600000e+01 : f32
    %119 = vector.broadcast %cst_46 : f32 to vector<1x256xf32>
    %120 = arith.mulf %118, %119 : vector<1x256xf32>
    %cst_47 = arith.constant 1.000000e+00 : f32
    %121 = vector.broadcast %cst_47 : f32 to vector<1x256xf32>
    %122 = arith.subf %120, %121 : vector<1x256xf32>
    %cst_48 = arith.constant 5.000000e-01 : f32
    %123 = vector.broadcast %cst_48 : f32 to vector<1x256xf32>
    %124 = arith.mulf %122, %123 : vector<1x256xf32>
    %cst_49 = arith.constant 1.000000e+00 : f32
    %125 = vector.broadcast %cst_49 : f32 to vector<1x256xf32>
    %126 = arith.addf %116, %125 : vector<1x256xf32>
    %cst_50 = arith.constant 1.600000e+01 : f32
    %127 = vector.broadcast %cst_50 : f32 to vector<1x256xf32>
    %128 = arith.mulf %126, %127 : vector<1x256xf32>
    %cst_51 = arith.constant 1.000000e+00 : f32
    %129 = vector.broadcast %cst_51 : f32 to vector<1x256xf32>
    %130 = arith.subf %128, %129 : vector<1x256xf32>
    %cst_52 = arith.constant 5.000000e-01 : f32
    %131 = vector.broadcast %cst_52 : f32 to vector<1x256xf32>
    %132 = arith.mulf %130, %131 : vector<1x256xf32>
    %133 = math.floor %124 : vector<1x256xf32>
    %134 = math.floor %132 : vector<1x256xf32>
    %135 = arith.subf %124, %133 : vector<1x256xf32>
    %136 = arith.subf %132, %134 : vector<1x256xf32>
    %cst_53 = arith.constant 1.000000e+00 : f32
    %137 = vector.broadcast %cst_53 : f32 to vector<1x256xf32>
    %138 = arith.subf %137, %135 : vector<1x256xf32>
    %cst_54 = arith.constant 1.000000e+00 : f32
    %139 = vector.broadcast %cst_54 : f32 to vector<1x256xf32>
    %140 = arith.subf %139, %136 : vector<1x256xf32>
    %141 = arith.fptosi %133 : vector<1x256xf32> to vector<1x256xi32>
    %142 = arith.fptosi %134 : vector<1x256xf32> to vector<1x256xi32>
    %c1_i32_55 = arith.constant 1 : i32
    %143 = vector.broadcast %c1_i32_55 : i32 to vector<1x256xi32>
    %144 = arith.addi %141, %143 : vector<1x256xi32>
    %c1_i32_56 = arith.constant 1 : i32
    %145 = vector.broadcast %c1_i32_56 : i32 to vector<1x256xi32>
    %146 = arith.addi %142, %145 : vector<1x256xi32>
    %c0_i32_57 = arith.constant 0 : i32
    %147 = vector.broadcast %c0_i32_57 : i32 to vector<1x256xi32>
    %148 = arith.cmpi sge, %142, %147 : vector<1x256xi32>
    %c16_i32_58 = arith.constant 16 : i32
    %149 = vector.broadcast %c16_i32_58 : i32 to vector<1x256xi32>
    %150 = arith.cmpi slt, %142, %149 : vector<1x256xi32>
    %151 = arith.andi %148, %150 : vector<1x256xi1>
    %cst_59 = arith.constant 0.000000e+00 : f32
    %152 = vector.broadcast %cst_59 : f32 to vector<1x256xf32>
    %153 = arith.select %151, %140, %152 : vector<1x256xi1>, vector<1x256xf32>
    %c0_i32_60 = arith.constant 0 : i32
    %154 = vector.broadcast %c0_i32_60 : i32 to vector<1x256xi32>
    %155 = arith.cmpi sge, %146, %154 : vector<1x256xi32>
    %c16_i32_61 = arith.constant 16 : i32
    %156 = vector.broadcast %c16_i32_61 : i32 to vector<1x256xi32>
    %157 = arith.cmpi slt, %146, %156 : vector<1x256xi32>
    %158 = arith.andi %155, %157 : vector<1x256xi1>
    %cst_62 = arith.constant 0.000000e+00 : f32
    %159 = vector.broadcast %cst_62 : f32 to vector<1x256xf32>
    %160 = arith.select %158, %136, %159 : vector<1x256xi1>, vector<1x256xf32>
    %c0_i32_63 = arith.constant 0 : i32
    %c15_i32_64 = arith.constant 15 : i32
    %161 = vector.broadcast %c0_i32_63 : i32 to vector<1x256xi32>
    %162 = arith.maxsi %161, %142 : vector<1x256xi32>
    %163 = vector.broadcast %c15_i32_64 : i32 to vector<1x256xi32>
    %164 = arith.minsi %163, %162 : vector<1x256xi32>
    %c0_i32_65 = arith.constant 0 : i32
    %c15_i32_66 = arith.constant 15 : i32
    %165 = vector.broadcast %c0_i32_65 : i32 to vector<1x256xi32>
    %166 = arith.maxsi %165, %146 : vector<1x256xi32>
    %167 = vector.broadcast %c15_i32_66 : i32 to vector<1x256xi32>
    %168 = arith.minsi %167, %166 : vector<1x256xi32>
    %169 = vector.broadcast %164 : vector<1x256xi32> to vector<16x256xi32>
    %170 = arith.cmpi eq, %0, %169 : vector<16x256xi32>
    %cst_67 = arith.constant 0.000000e+00 : f32
    %171 = vector.shape_cast %153 : vector<1x256xf32> to vector<1x256xf32>
    %172 = vector.broadcast %171 : vector<1x256xf32> to vector<16x256xf32>
    %173 = vector.broadcast %cst_67 : f32 to vector<16x256xf32>
    %174 = arith.select %170, %172, %173 : vector<16x256xi1>, vector<16x256xf32>
    %175 = vector.broadcast %168 : vector<1x256xi32> to vector<16x256xi32>
    %176 = arith.cmpi eq, %0, %175 : vector<16x256xi32>
    %cst_68 = arith.constant 0.000000e+00 : f32
    %177 = vector.shape_cast %160 : vector<1x256xf32> to vector<1x256xf32>
    %178 = vector.broadcast %177 : vector<1x256xf32> to vector<16x256xf32>
    %179 = vector.broadcast %cst_68 : f32 to vector<16x256xf32>
    %180 = arith.select %176, %178, %179 : vector<16x256xi1>, vector<16x256xf32>
    %181 = arith.addf %174, %180 : vector<16x256xf32>
    %c0_i32_69 = arith.constant 0 : i32
    %182 = vector.broadcast %c0_i32_69 : i32 to vector<1x256xi32>
    %183 = arith.cmpi sge, %141, %182 : vector<1x256xi32>
    %c16_i32_70 = arith.constant 16 : i32
    %184 = vector.broadcast %c16_i32_70 : i32 to vector<1x256xi32>
    %185 = arith.cmpi slt, %141, %184 : vector<1x256xi32>
    %186 = arith.andi %183, %185 : vector<1x256xi1>
    %cst_71 = arith.constant 0.000000e+00 : f32
    %187 = vector.broadcast %cst_71 : f32 to vector<1x256xf32>
    %188 = arith.select %186, %138, %187 : vector<1x256xi1>, vector<1x256xf32>
    %c0_i32_72 = arith.constant 0 : i32
    %189 = vector.broadcast %c0_i32_72 : i32 to vector<1x256xi32>
    %190 = arith.cmpi sge, %144, %189 : vector<1x256xi32>
    %c16_i32_73 = arith.constant 16 : i32
    %191 = vector.broadcast %c16_i32_73 : i32 to vector<1x256xi32>
    %192 = arith.cmpi slt, %144, %191 : vector<1x256xi32>
    %193 = arith.andi %190, %192 : vector<1x256xi1>
    %cst_74 = arith.constant 0.000000e+00 : f32
    %194 = vector.broadcast %cst_74 : f32 to vector<1x256xf32>
    %195 = arith.select %193, %135, %194 : vector<1x256xi1>, vector<1x256xf32>
    %c0_i32_75 = arith.constant 0 : i32
    %c15_i32_76 = arith.constant 15 : i32
    %196 = vector.broadcast %c0_i32_75 : i32 to vector<1x256xi32>
    %197 = arith.maxsi %196, %141 : vector<1x256xi32>
    %198 = vector.broadcast %c15_i32_76 : i32 to vector<1x256xi32>
    %199 = arith.minsi %198, %197 : vector<1x256xi32>
    %c0_i32_77 = arith.constant 0 : i32
    %c15_i32_78 = arith.constant 15 : i32
    %200 = vector.broadcast %c0_i32_77 : i32 to vector<1x256xi32>
    %201 = arith.maxsi %200, %144 : vector<1x256xi32>
    %202 = vector.broadcast %c15_i32_78 : i32 to vector<1x256xi32>
    %203 = arith.minsi %202, %201 : vector<1x256xi32>
    %204 = vector.broadcast %199 : vector<1x256xi32> to vector<16x256xi32>
    %205 = arith.cmpi eq, %1, %204 : vector<16x256xi32>
    %cst_79 = arith.constant 0.000000e+00 : f32
    %206 = vector.shape_cast %188 : vector<1x256xf32> to vector<1x256xf32>
    %207 = vector.broadcast %206 : vector<1x256xf32> to vector<16x256xf32>
    %208 = vector.broadcast %cst_79 : f32 to vector<16x256xf32>
    %209 = arith.select %205, %207, %208 : vector<16x256xi1>, vector<16x256xf32>
    %210 = vector.broadcast %203 : vector<1x256xi32> to vector<16x256xi32>
    %211 = arith.cmpi eq, %1, %210 : vector<16x256xi32>
    %cst_80 = arith.constant 0.000000e+00 : f32
    %212 = vector.shape_cast %195 : vector<1x256xf32> to vector<1x256xf32>
    %213 = vector.broadcast %212 : vector<1x256xf32> to vector<16x256xf32>
    %214 = vector.broadcast %cst_80 : f32 to vector<16x256xf32>
    %215 = arith.select %211, %213, %214 : vector<16x256xi1>, vector<16x256xf32>
    %216 = arith.addf %209, %215 : vector<16x256xf32>
    %217 = vector.shape_cast %181 : vector<16x256xf32> to vector<16x1x256xf32>
    %218 = vector.shape_cast %216 : vector<16x256xf32> to vector<1x16x256xf32>
    %219 = vector.broadcast %217 : vector<16x1x256xf32> to vector<16x16x256xf32>
    %220 = vector.broadcast %218 : vector<1x16x256xf32> to vector<16x16x256xf32>
    %221 = arith.mulf %219, %220 : vector<16x16x256xf32>
    %222 = vector.shape_cast %221 : vector<16x16x256xf32> to vector<256x256xf32>
    %223 = arith.truncf %222 : vector<256x256xf32> to vector<256x256xbf16>
    %c0_81 = arith.constant 0 : index
    %c2 = arith.constant 2 : index
    %c0_82 = arith.constant 0 : index
    %c0_83 = arith.constant 0 : index
    %224 = vector.load %arg3[%c0_81, %c2, %c0_82, %c0_83] : memref<1x3x2x256xf32, #tpu.memory_space<vmem>>, vector<1x1x1x256xf32>
    %225 = vector.shape_cast %224 : vector<1x1x1x256xf32> to vector<1x256xf32>
    %c0_84 = arith.constant 0 : index
    %c2_85 = arith.constant 2 : index
    %c1_86 = arith.constant 1 : index
    %c0_87 = arith.constant 0 : index
    %226 = vector.load %arg3[%c0_84, %c2_85, %c1_86, %c0_87] : memref<1x3x2x256xf32, #tpu.memory_space<vmem>>, vector<1x1x1x256xf32>
    %227 = vector.shape_cast %226 : vector<1x1x1x256xf32> to vector<1x256xf32>
    %cst_88 = arith.constant 1.000000e+00 : f32
    %228 = vector.broadcast %cst_88 : f32 to vector<1x256xf32>
    %229 = arith.addf %225, %228 : vector<1x256xf32>
    %cst_89 = arith.constant 1.600000e+01 : f32
    %230 = vector.broadcast %cst_89 : f32 to vector<1x256xf32>
    %231 = arith.mulf %229, %230 : vector<1x256xf32>
    %cst_90 = arith.constant 1.000000e+00 : f32
    %232 = vector.broadcast %cst_90 : f32 to vector<1x256xf32>
    %233 = arith.subf %231, %232 : vector<1x256xf32>
    %cst_91 = arith.constant 5.000000e-01 : f32
    %234 = vector.broadcast %cst_91 : f32 to vector<1x256xf32>
    %235 = arith.mulf %233, %234 : vector<1x256xf32>
    %cst_92 = arith.constant 1.000000e+00 : f32
    %236 = vector.broadcast %cst_92 : f32 to vector<1x256xf32>
    %237 = arith.addf %227, %236 : vector<1x256xf32>
    %cst_93 = arith.constant 1.600000e+01 : f32
    %238 = vector.broadcast %cst_93 : f32 to vector<1x256xf32>
    %239 = arith.mulf %237, %238 : vector<1x256xf32>
    %cst_94 = arith.constant 1.000000e+00 : f32
    %240 = vector.broadcast %cst_94 : f32 to vector<1x256xf32>
    %241 = arith.subf %239, %240 : vector<1x256xf32>
    %cst_95 = arith.constant 5.000000e-01 : f32
    %242 = vector.broadcast %cst_95 : f32 to vector<1x256xf32>
    %243 = arith.mulf %241, %242 : vector<1x256xf32>
    %244 = math.floor %235 : vector<1x256xf32>
    %245 = math.floor %243 : vector<1x256xf32>
    %246 = arith.subf %235, %244 : vector<1x256xf32>
    %247 = arith.subf %243, %245 : vector<1x256xf32>
    %cst_96 = arith.constant 1.000000e+00 : f32
    %248 = vector.broadcast %cst_96 : f32 to vector<1x256xf32>
    %249 = arith.subf %248, %246 : vector<1x256xf32>
    %cst_97 = arith.constant 1.000000e+00 : f32
    %250 = vector.broadcast %cst_97 : f32 to vector<1x256xf32>
    %251 = arith.subf %250, %247 : vector<1x256xf32>
    %252 = arith.fptosi %244 : vector<1x256xf32> to vector<1x256xi32>
    %253 = arith.fptosi %245 : vector<1x256xf32> to vector<1x256xi32>
    %c1_i32_98 = arith.constant 1 : i32
    %254 = vector.broadcast %c1_i32_98 : i32 to vector<1x256xi32>
    %255 = arith.addi %252, %254 : vector<1x256xi32>
    %c1_i32_99 = arith.constant 1 : i32
    %256 = vector.broadcast %c1_i32_99 : i32 to vector<1x256xi32>
    %257 = arith.addi %253, %256 : vector<1x256xi32>
    %c0_i32_100 = arith.constant 0 : i32
    %258 = vector.broadcast %c0_i32_100 : i32 to vector<1x256xi32>
    %259 = arith.cmpi sge, %253, %258 : vector<1x256xi32>
    %c16_i32_101 = arith.constant 16 : i32
    %260 = vector.broadcast %c16_i32_101 : i32 to vector<1x256xi32>
    %261 = arith.cmpi slt, %253, %260 : vector<1x256xi32>
    %262 = arith.andi %259, %261 : vector<1x256xi1>
    %cst_102 = arith.constant 0.000000e+00 : f32
    %263 = vector.broadcast %cst_102 : f32 to vector<1x256xf32>
    %264 = arith.select %262, %251, %263 : vector<1x256xi1>, vector<1x256xf32>
    %c0_i32_103 = arith.constant 0 : i32
    %265 = vector.broadcast %c0_i32_103 : i32 to vector<1x256xi32>
    %266 = arith.cmpi sge, %257, %265 : vector<1x256xi32>
    %c16_i32_104 = arith.constant 16 : i32
    %267 = vector.broadcast %c16_i32_104 : i32 to vector<1x256xi32>
    %268 = arith.cmpi slt, %257, %267 : vector<1x256xi32>
    %269 = arith.andi %266, %268 : vector<1x256xi1>
    %cst_105 = arith.constant 0.000000e+00 : f32
    %270 = vector.broadcast %cst_105 : f32 to vector<1x256xf32>
    %271 = arith.select %269, %247, %270 : vector<1x256xi1>, vector<1x256xf32>
    %c0_i32_106 = arith.constant 0 : i32
    %c15_i32_107 = arith.constant 15 : i32
    %272 = vector.broadcast %c0_i32_106 : i32 to vector<1x256xi32>
    %273 = arith.maxsi %272, %253 : vector<1x256xi32>
    %274 = vector.broadcast %c15_i32_107 : i32 to vector<1x256xi32>
    %275 = arith.minsi %274, %273 : vector<1x256xi32>
    %c0_i32_108 = arith.constant 0 : i32
    %c15_i32_109 = arith.constant 15 : i32
    %276 = vector.broadcast %c0_i32_108 : i32 to vector<1x256xi32>
    %277 = arith.maxsi %276, %257 : vector<1x256xi32>
    %278 = vector.broadcast %c15_i32_109 : i32 to vector<1x256xi32>
    %279 = arith.minsi %278, %277 : vector<1x256xi32>
    %280 = vector.broadcast %275 : vector<1x256xi32> to vector<16x256xi32>
    %281 = arith.cmpi eq, %0, %280 : vector<16x256xi32>
    %cst_110 = arith.constant 0.000000e+00 : f32
    %282 = vector.shape_cast %264 : vector<1x256xf32> to vector<1x256xf32>
    %283 = vector.broadcast %282 : vector<1x256xf32> to vector<16x256xf32>
    %284 = vector.broadcast %cst_110 : f32 to vector<16x256xf32>
    %285 = arith.select %281, %283, %284 : vector<16x256xi1>, vector<16x256xf32>
    %286 = vector.broadcast %279 : vector<1x256xi32> to vector<16x256xi32>
    %287 = arith.cmpi eq, %0, %286 : vector<16x256xi32>
    %cst_111 = arith.constant 0.000000e+00 : f32
    %288 = vector.shape_cast %271 : vector<1x256xf32> to vector<1x256xf32>
    %289 = vector.broadcast %288 : vector<1x256xf32> to vector<16x256xf32>
    %290 = vector.broadcast %cst_111 : f32 to vector<16x256xf32>
    %291 = arith.select %287, %289, %290 : vector<16x256xi1>, vector<16x256xf32>
    %292 = arith.addf %285, %291 : vector<16x256xf32>
    %c0_i32_112 = arith.constant 0 : i32
    %293 = vector.broadcast %c0_i32_112 : i32 to vector<1x256xi32>
    %294 = arith.cmpi sge, %252, %293 : vector<1x256xi32>
    %c16_i32_113 = arith.constant 16 : i32
    %295 = vector.broadcast %c16_i32_113 : i32 to vector<1x256xi32>
    %296 = arith.cmpi slt, %252, %295 : vector<1x256xi32>
    %297 = arith.andi %294, %296 : vector<1x256xi1>
    %cst_114 = arith.constant 0.000000e+00 : f32
    %298 = vector.broadcast %cst_114 : f32 to vector<1x256xf32>
    %299 = arith.select %297, %249, %298 : vector<1x256xi1>, vector<1x256xf32>
    %c0_i32_115 = arith.constant 0 : i32
    %300 = vector.broadcast %c0_i32_115 : i32 to vector<1x256xi32>
    %301 = arith.cmpi sge, %255, %300 : vector<1x256xi32>
    %c16_i32_116 = arith.constant 16 : i32
    %302 = vector.broadcast %c16_i32_116 : i32 to vector<1x256xi32>
    %303 = arith.cmpi slt, %255, %302 : vector<1x256xi32>
    %304 = arith.andi %301, %303 : vector<1x256xi1>
    %cst_117 = arith.constant 0.000000e+00 : f32
    %305 = vector.broadcast %cst_117 : f32 to vector<1x256xf32>
    %306 = arith.select %304, %246, %305 : vector<1x256xi1>, vector<1x256xf32>
    %c0_i32_118 = arith.constant 0 : i32
    %c15_i32_119 = arith.constant 15 : i32
    %307 = vector.broadcast %c0_i32_118 : i32 to vector<1x256xi32>
    %308 = arith.maxsi %307, %252 : vector<1x256xi32>
    %309 = vector.broadcast %c15_i32_119 : i32 to vector<1x256xi32>
    %310 = arith.minsi %309, %308 : vector<1x256xi32>
    %c0_i32_120 = arith.constant 0 : i32
    %c15_i32_121 = arith.constant 15 : i32
    %311 = vector.broadcast %c0_i32_120 : i32 to vector<1x256xi32>
    %312 = arith.maxsi %311, %255 : vector<1x256xi32>
    %313 = vector.broadcast %c15_i32_121 : i32 to vector<1x256xi32>
    %314 = arith.minsi %313, %312 : vector<1x256xi32>
    %315 = vector.broadcast %310 : vector<1x256xi32> to vector<16x256xi32>
    %316 = arith.cmpi eq, %1, %315 : vector<16x256xi32>
    %cst_122 = arith.constant 0.000000e+00 : f32
    %317 = vector.shape_cast %299 : vector<1x256xf32> to vector<1x256xf32>
    %318 = vector.broadcast %317 : vector<1x256xf32> to vector<16x256xf32>
    %319 = vector.broadcast %cst_122 : f32 to vector<16x256xf32>
    %320 = arith.select %316, %318, %319 : vector<16x256xi1>, vector<16x256xf32>
    %321 = vector.broadcast %314 : vector<1x256xi32> to vector<16x256xi32>
    %322 = arith.cmpi eq, %1, %321 : vector<16x256xi32>
    %cst_123 = arith.constant 0.000000e+00 : f32
    %323 = vector.shape_cast %306 : vector<1x256xf32> to vector<1x256xf32>
    %324 = vector.broadcast %323 : vector<1x256xf32> to vector<16x256xf32>
    %325 = vector.broadcast %cst_123 : f32 to vector<16x256xf32>
    %326 = arith.select %322, %324, %325 : vector<16x256xi1>, vector<16x256xf32>
    %327 = arith.addf %320, %326 : vector<16x256xf32>
    %328 = vector.shape_cast %292 : vector<16x256xf32> to vector<16x1x256xf32>
    %329 = vector.shape_cast %327 : vector<16x256xf32> to vector<1x16x256xf32>
    %330 = vector.broadcast %328 : vector<16x1x256xf32> to vector<16x16x256xf32>
    %331 = vector.broadcast %329 : vector<1x16x256xf32> to vector<16x16x256xf32>
    %332 = arith.mulf %330, %331 : vector<16x16x256xf32>
    %333 = vector.shape_cast %332 : vector<16x16x256xf32> to vector<256x256xf32>
    %334 = arith.truncf %333 : vector<256x256xf32> to vector<256x256xbf16>
    %335 = tpu.concatenate %112, %223, %334 in 0 : vector<256x256xbf16>, vector<256x256xbf16>, vector<256x256xbf16> -> vector<768x256xbf16>
    %c0_124 = arith.constant 0 : index
    %c0_125 = arith.constant 0 : index
    %c0_126 = arith.constant 0 : index
    %336 = vector.load %arg2[%c0_124, %c0_125, %c0_126] : memref<1x32x768xbf16, #tpu.memory_space<vmem>>, vector<1x32x768xbf16>
    %337 = vector.shape_cast %336 : vector<1x32x768xbf16> to vector<32x768xbf16>
    %cst_127 = arith.constant dense<0.000000e+00> : vector<32x256xf32>
    %338 = tpu.matmul %337, %335, %cst_127 {dimension_numbers = #tpu.dot_dimension_numbers<[1], [0], [0], [1], [0, 0, 1, 1], [], []>} : vector<32x768xbf16>, vector<768x256xbf16>, vector<32x256xf32> -> vector<32x256xf32>
    %cst_128 = arith.constant 0.333333343 : f32
    %339 = vector.broadcast %cst_128 : f32 to vector<32x256xf32>
    %340 = arith.mulf %338, %339 : vector<32x256xf32>
    %c0_129 = arith.constant 0 : index
    %c0_130 = arith.constant 0 : index
    %341 = vector.load %arg5[%c0_129, %c0_130] : memref<64x32xf32, #tpu.memory_space<vmem>>, vector<64x32xf32>
    %cst_131 = arith.constant dense<0.000000e+00> : vector<64x256xf32>
    %342 = tpu.matmul %341, %340, %cst_131 {dimension_numbers = #tpu.dot_dimension_numbers<[1], [0], [0], [1], [0, 0, 1, 1], [], []>} : vector<64x32xf32>, vector<32x256xf32>, vector<64x256xf32> -> vector<64x256xf32>
    %c0_132 = arith.constant 0 : index
    %c0_133 = arith.constant 0 : index
    %343 = vector.load %arg6[%c0_132, %c0_133] : memref<64x1xf32, #tpu.memory_space<vmem>>, vector<64x1xf32>
    %344 = vector.broadcast %343 : vector<64x1xf32> to vector<64x256xf32>
    %345 = arith.addf %342, %344 : vector<64x256xf32>
    %cst_134 = arith.constant 0.000000e+00 : f32
    %346 = vector.broadcast %cst_134 : f32 to vector<64x256xf32>
    %347 = arith.maximumf %345, %346 : vector<64x256xf32>
    %348 = vector.broadcast %cst_134 : f32 to vector<64x256xf32>
    %349 = arith.subf %345, %348 : vector<64x256xf32>
    %350 = arith.cmpf one, %349, %349 : vector<64x256xf32>
    %351 = vector.broadcast %cst_134 : f32 to vector<64x256xf32>
    %352 = arith.addf %345, %351 : vector<64x256xf32>
    %353 = math.absf %349 : vector<64x256xf32>
    %cst_135 = arith.constant 0.000000e+00 : f32
    %354 = vector.broadcast %cst_135 : f32 to vector<64x256xf32>
    %355 = arith.subf %354, %353 : vector<64x256xf32>
    %356 = math.exp %355 : vector<64x256xf32>
    %357 = math.log1p %356 : vector<64x256xf32>
    %358 = arith.addf %347, %357 : vector<64x256xf32>
    %359 = arith.select %350, %352, %358 : vector<64x256xi1>, vector<64x256xf32>
    %c0_136 = arith.constant 0 : index
    %c0_137 = arith.constant 0 : index
    %360 = vector.load %arg7[%c0_136, %c0_137] : memref<33x64xf32, #tpu.memory_space<vmem>>, vector<33x64xf32>
    %cst_138 = arith.constant dense<0.000000e+00> : vector<33x256xf32>
    %361 = tpu.matmul %360, %359, %cst_138 {dimension_numbers = #tpu.dot_dimension_numbers<[1], [0], [0], [1], [0, 0, 1, 1], [], []>} : vector<33x64xf32>, vector<64x256xf32>, vector<33x256xf32> -> vector<33x256xf32>
    %c0_139 = arith.constant 0 : index
    %c0_140 = arith.constant 0 : index
    %362 = vector.load %arg8[%c0_139, %c0_140] : memref<33x1xf32, #tpu.memory_space<vmem>>, vector<33x1xf32>
    %363 = vector.broadcast %362 : vector<33x1xf32> to vector<33x256xf32>
    %364 = arith.addf %361, %363 : vector<33x256xf32>
    %365 = vector.extract_strided_slice %364 {offsets = [0, 0], sizes = [32, 256], strides = [1, 1]} : vector<33x256xf32> to vector<32x256xf32>
    %366 = vector.extract_strided_slice %364 {offsets = [32, 0], sizes = [1, 256], strides = [1, 1]} : vector<33x256xf32> to vector<1x256xf32>
    %367 = arith.negf %365 : vector<32x256xf32>
    %368 = math.exp %367 : vector<32x256xf32>
    %cst_141 = arith.constant 1.000000e+00 : f32
    %369 = vector.broadcast %cst_141 : f32 to vector<32x256xf32>
    %370 = arith.addf %369, %368 : vector<32x256xf32>
    %371 = arith.divf %369, %370 : vector<32x256xf32>
    %cst_142 = arith.constant 1.002000e+00 : f32
    %372 = vector.broadcast %cst_142 : f32 to vector<32x256xf32>
    %373 = arith.mulf %371, %372 : vector<32x256xf32>
    %cst_143 = arith.constant 1.000000e-03 : f32
    %374 = vector.broadcast %cst_143 : f32 to vector<32x256xf32>
    %375 = arith.subf %373, %374 : vector<32x256xf32>
    %c0_144 = arith.constant 0 : index
    %c0_145 = arith.constant 0 : index
    %c0_146 = arith.constant 0 : index
    %376 = vector.load %arg4[%c0_144, %c0_145, %c0_146] : memref<1x1x256xf32, #tpu.memory_space<vmem>>, vector<1x1x256xf32>
    %377 = vector.shape_cast %376 : vector<1x1x256xf32> to vector<1x256xf32>
    %378 = arith.addf %366, %377 : vector<1x256xf32>
    %cst_147 = arith.constant 0.000000e+00 : f32
    %379 = vector.broadcast %cst_147 : f32 to vector<1x256xf32>
    %380 = arith.subf %379, %378 : vector<1x256xf32>
    %cst_148 = arith.constant 1.000000e-01 : f32
    %381 = vector.broadcast %cst_148 : f32 to vector<1x256xf32>
    %382 = arith.divf %380, %381 : vector<1x256xf32>
    %383 = arith.negf %382 : vector<1x256xf32>
    %384 = math.exp %383 : vector<1x256xf32>
    %cst_149 = arith.constant 1.000000e+00 : f32
    %385 = vector.broadcast %cst_149 : f32 to vector<1x256xf32>
    %386 = arith.addf %385, %384 : vector<1x256xf32>
    %387 = arith.divf %385, %386 : vector<1x256xf32>
    %cst_150 = arith.constant 1.000000e-01 : f32
    %388 = vector.broadcast %cst_150 : f32 to vector<1x256xf32>
    %389 = arith.divf %387, %388 : vector<1x256xf32>
    %c0_151 = arith.constant 0 : index
    %c0_152 = arith.constant 0 : index
    %c0_153 = arith.constant 0 : index
    %390 = vector.load %arg9[%c0_151, %c0_152, %c0_153] : memref<1x32x256xf32, #tpu.memory_space<vmem>>, vector<1x32x256xf32>
    %391 = vector.shape_cast %390 : vector<1x32x256xf32> to vector<32x256xf32>
    %392 = vector.shape_cast %375 : vector<32x256xf32> to vector<1x32x256xf32>
    tpu.vector_store %arg9[%c0_151, %c0_152, %c0_153], %392 {strides = array<i32>} : memref<1x32x256xf32, #tpu.memory_space<vmem>>, vector<1x32x256xf32>,
    %c0_154 = arith.constant 0 : index
    %c0_155 = arith.constant 0 : index
    %c0_156 = arith.constant 0 : index
    %393 = vector.load %arg10[%c0_154, %c0_155, %c0_156] : memref<1x1x256xf32, #tpu.memory_space<vmem>>, vector<1x1x256xf32>
    %394 = vector.shape_cast %393 : vector<1x1x256xf32> to vector<1x256xf32>
    %395 = vector.shape_cast %389 : vector<1x256xf32> to vector<1x1x256xf32>
    tpu.vector_store %arg10[%c0_154, %c0_155, %c0_156], %395 {strides = array<i32>} : memref<1x1x256xf32, #tpu.memory_space<vmem>>, vector<1x1x256xf32>,
    %c0_157 = arith.constant 0 : index
    %c0_158 = arith.constant 0 : index
    %c0_159 = arith.constant 0 : index
    %396 = vector.load %arg11[%c0_157, %c0_158, %c0_159] : memref<1x1x256xf32, #tpu.memory_space<vmem>>, vector<1x1x256xf32>
    %397 = vector.shape_cast %396 : vector<1x1x256xf32> to vector<1x256xf32>
    %398 = vector.shape_cast %378 : vector<1x256xf32> to vector<1x1x256xf32>
    tpu.vector_store %arg11[%c0_157, %c0_158, %c0_159], %398 {strides = array<i32>} : memref<1x1x256xf32, #tpu.memory_space<vmem>>, vector<1x1x256xf32>,
    return
  }
  func.func @transform_0(%arg0: i32, %arg1: i32) -> (i32, i32, i32) {
    %c0_i32 = arith.constant 0 : i32
    %c0_i32_0 = arith.constant 0 : i32
    %c0_i32_1 = arith.constant 0 : i32
    return %arg0, %c0_i32, %c0_i32_0 : i32, i32, i32
  }
  func.func @transform_1(%arg0: i32, %arg1: i32) -> (i32, i32, i32, i32) {
    %c0_i32 = arith.constant 0 : i32
    %c0_i32_0 = arith.constant 0 : i32
    %c0_i32_1 = arith.constant 0 : i32
    return %arg0, %c0_i32, %c0_i32_0, %arg1 : i32, i32, i32, i32
  }
  func.func @transform_2(%arg0: i32, %arg1: i32) -> (i32, i32, i32) {
    %c0_i32 = arith.constant 0 : i32
    %c0_i32_0 = arith.constant 0 : i32
    return %arg0, %c0_i32, %arg1 : i32, i32, i32
  }
  func.func @transform_3(%arg0: i32, %arg1: i32) -> (i32, i32) {
    %c0_i32 = arith.constant 0 : i32
    %c0_i32_0 = arith.constant 0 : i32
    %c0_i32_1 = arith.constant 0 : i32
    return %c0_i32, %c0_i32_0 : i32, i32
  }
  func.func @transform_4(%arg0: i32, %arg1: i32) -> (i32, i32) {
    %c0_i32 = arith.constant 0 : i32
    %c0_i32_0 = arith.constant 0 : i32
    %c0_i32_1 = arith.constant 0 : i32
    return %c0_i32, %c0_i32_0 : i32, i32
  }
  func.func @transform_5(%arg0: i32, %arg1: i32) -> (i32, i32) {
    %c0_i32 = arith.constant 0 : i32
    %c0_i32_0 = arith.constant 0 : i32
    %c0_i32_1 = arith.constant 0 : i32
    return %c0_i32, %c0_i32_0 : i32, i32
  }
  func.func @transform_6(%arg0: i32, %arg1: i32) -> (i32, i32) {
    %c0_i32 = arith.constant 0 : i32
    %c0_i32_0 = arith.constant 0 : i32
    %c0_i32_1 = arith.constant 0 : i32
    return %c0_i32, %c0_i32_0 : i32, i32
  }
  func.func @transform_7(%arg0: i32, %arg1: i32) -> (i32, i32, i32) {
    %c0_i32 = arith.constant 0 : i32
    %c0_i32_0 = arith.constant 0 : i32
    return %arg0, %c0_i32, %arg1 : i32, i32, i32
  }
  func.func @transform_8(%arg0: i32, %arg1: i32) -> (i32, i32, i32) {
    %c0_i32 = arith.constant 0 : i32
    %c0_i32_0 = arith.constant 0 : i32
    return %arg0, %c0_i32, %arg1 : i32, i32, i32
  }
  func.func @transform_9(%arg0: i32, %arg1: i32) -> (i32, i32, i32) {
    %c0_i32 = arith.constant 0 : i32
    %c0_i32_0 = arith.constant 0 : i32
    return %arg0, %c0_i32, %arg1 : i32, i32, i32
  }
}

</mosaic_0001>

<llo_original>
// kernel: tpu_custom_call.1
$region0: #{tpu_custom_call.1}
  #allocation0 [shape = 'u32[]', space=smem, size = 0x4, offset = 0x4, fixed_abs, tag = 'smem constant byte address 0x4 - core index']
  #allocation1 [shape = 'u32[144,128]{1,0:T(1,128)}', space=vmem, size = 0x12000, scoped, tag = 'internal scratch']
  %s0 = inlined_call_operand.vmem [shape: bf16[2,32,768], index: 0, kind: input, shape index: {}]
  %s1 = inlined_call_operand.hbm [shape: f32[2,3,2,512], index: 1, kind: input, shape index: {}]
  %s2 = inlined_call_operand.vmem [shape: f32[2,1,512], index: 2, kind: input, shape index: {}]
  %s3 = inlined_call_operand.vmem [shape: f32[64,32], index: 3, kind: input, shape index: {}]
  %s4 = inlined_call_operand.vmem [shape: f32[64,1], index: 4, kind: input, shape index: {}]
  %s5 = inlined_call_operand.hbm [shape: f32[33,64], index: 5, kind: input, shape index: {}]
  %s6 = inlined_call_operand.vmem [shape: f32[33,1], index: 6, kind: input, shape index: {}]
  %s7 = inlined_call_operand.hbm [shape: f32[2,32,512], index: 7, kind: output, shape index: {0}]
  %s8 = inlined_call_operand.hbm [shape: f32[2,1,512], index: 8, kind: output, shape index: {1}]
  %s9 = inlined_call_operand.hbm [shape: f32[2,1,512], index: 9, kind: output, shape index: {2}]
  %10 = xla_tuple %s7, %s8, %s9
  %s11 = sld [smem:[#allocation0]]
  $region85: #{tpu_custom_call.1} parent=0
    _
  %s13 = ssub.s32 1, %s11
  %s14 = scalar_select 0, %s13, %s11
  $region1: #{tpu_custom_call.1} parent=0
    #allocation2 [shape = 'u8[12288]{0}', space=vmem, size = 0x3000, scoped, tag = 'input window, operand 1']
    #allocation3 [shape = 's32[2]{0}', space=sflag, size = 0x8, scoped, tag = 'scoped memory for tpu_custom_call.1']
    #allocation4 [shape = 's32[2]{0}', space=sflag, size = 0x8, scoped, tag = 'scoped memory for tpu_custom_call.1']
    #allocation5 [shape = 'u8[20480]{0}', space=vmem, size = 0x5000, scoped, tag = 'input window, operand 5, single buffered']
    #allocation6 [shape = 's32[1]{0}', space=sflag, size = 0x4, scoped, tag = 'scoped memory for tpu_custom_call.1']
    #allocation7 [shape = 'u8[65536]{0}', space=vmem, size = 0x10000, scoped, tag = 'output window, operand 0']
    #allocation8 [shape = 'u8[2048]{0}', space=vmem, size = 0x800, scoped, tag = 'output window, operand 1']
    #allocation9 [shape = 's32[2]{0}', space=sflag, size = 0x8, scoped, tag = 'scoped memory for tpu_custom_call.1']
    #allocation10 [shape = 'u8[2048]{0}', space=vmem, size = 0x800, scoped, tag = 'output window, operand 2']
    %15 = vsyncpa [#allocation3], 0
    %s16 = scalar_lea.sflag [#allocation3], 1
    %17 = vsyncpa %s16, 0
    %18 = vsyncpa [#allocation6], 0
    %19 = vsyncpa [#allocation4], 0
    %s20 = scalar_lea.sflag [#allocation4], 1
    %21 = vsyncpa %s20, 0
    %22 = vsyncpa [#allocation9], 0
    %s23 = scalar_lea.sflag [#allocation9], 1
    %24 = vsyncpa %s23, 0
    loop: start=0, step=1, limit=6
    $region2: #{tpu_custom_call.1} parent=1 // loop_pre_header
      _
    $region3: #{tpu_custom_call.1} parent=1 // loop_header
      %s26 = sphi 0, %s30
      %p27 = scmp.ge.s32.totalorder %s26, 6
      %s33 = sphi 0, %s45
      %s34 = sphi 0, %s41
      %s35 = sphi 0, %s33
      %s36 = sphi 0, %s34
      %s37 = sphi 0, %s35
      %s38 = sphi 0, %s36
      %s48 = sphi 0, %s50
      %s51 = sphi 0, %s48
      %s52 = sphi 0, %s51
      %s68 = sphi 0, %s52
      %s76 = sphi 0, %s78
      %s79 = sphi 0, %s76
      %s80 = sphi 0, %s79
      %s96 = sphi 0, %s80
      %s104 = sphi 0, %s106
      %s107 = sphi 0, %s104
      %s108 = sphi 0, %s107
      %s124 = sphi 0, %s108
      %s128 = sphi 0, %s128
      %s130 = sphi 0, %s128
      %s131 = sphi 0, %s130
      %s145 = sphi 0, %s131
      %s149 = sphi 0, %s149
      %s151 = sphi 0, %s149
      %s152 = sphi 0, %s151
      %s166 = sphi 0, %s152
      %s170 = sphi 0, %s170
      %s172 = sphi 0, %s170
      %s173 = sphi 0, %s172
      %s187 = sphi 0, %s173
      %s191 = sphi 0, %s191
      %s193 = sphi 0, %s191
      %s194 = sphi 0, %s193
      %s208 = sphi 0, %s194
      %s216 = sphi 0, %s218
      %s219 = sphi 0, %s216
      %s220 = sphi 0, %s219
      %s236 = sphi 0, %s220
      %s244 = sphi 0, %s246
      %s247 = sphi 0, %s244
      %s248 = sphi 0, %s247
      %s264 = sphi 0, %s248
      %s272 = sphi 0, %s274
      %s275 = sphi 0, %s272
      %s276 = sphi 0, %s275
      %s292 = sphi 0, %s276
    $region4: #{tpu_custom_call.1} parent=1 // loop_header_branch
      %29 = sbr.rel (%p27) target = $region8
    $region5: #{tpu_custom_call.1} parent=1 // loop_body
      %s31 = ssub.s32 %s26, 1
      %s32 = ssub.s32 %s26, 2
      %s39 = sadd.s32 1, %s34
      %p40 = scmp.ge.s32.totalorder %s39, 2
      %s41 = scalar_select %p40, 0, %s39
      %s42 = sadd.s32 1, %s33
      %s43 = scalar_select %p40, %s42, %s33
      %p44 = scmp.ge.s32.totalorder %s43, 2
      %s45 = scalar_select %p44, 0, %s43
      %s46 = ssub.s32 %s33, %s45
      %p47 = scmp.eq.s32.totalorder %s46, 0
      %s49 = sadd.s32 %s48, 1
      %s50 = scalar_select %p47, %s48, %s49
      %p53 = pneg %p47
      %p54 = scmp.eq.s32.totalorder %s26, 3
      %p55 = por %p53, %p54
      %p56 = scmp.ne.s32.totalorder %s48, %s51
      %p57 = scmp.eq.s32.totalorder %s26, 0
      %p58 = por %p56, %p57
      %p59 = scmp.ne.s32.totalorder %s48, %s51
      %p60 = scmp.eq.s32.totalorder %s31, 3
      %p61 = por %p59, %p60
      %p62 = scmp.ne.s32.totalorder %s51, %s52
      %p63 = scmp.eq.s32.totalorder %s31, 0
      %p64 = por %p62, %p63
      %p65 = scmp.ne.s32.totalorder %s51, %s52
      %p66 = scmp.eq.s32.totalorder %s32, 3
      %p67 = por %p65, %p66
      %p69 = scmp.ne.s32.totalorder %s52, %s68
      %p70 = scmp.eq.s32.totalorder %s32, 0
      %p71 = por %p69, %p70
      %s72 = ssub.s32 %s33, %s45
      %s73 = ssub.s32 %s34, %s41
      %s74 = sor.u32 %s72, %s73
      %p75 = scmp.eq.s32.totalorder %s74, 0
      %s77 = sadd.s32 %s76, 1
      %s78 = scalar_select %p75, %s76, %s77
      %p81 = pneg %p75
      %p82 = scmp.eq.s32.totalorder %s26, 3
      %p83 = por %p81, %p82
      %p84 = scmp.ne.s32.totalorder %s76, %s79
      %p85 = scmp.eq.s32.totalorder %s26, 0
      %p86 = por %p84, %p85
      %p87 = scmp.ne.s32.totalorder %s76, %s79
      %p88 = scmp.eq.s32.totalorder %s31, 3
      %p89 = por %p87, %p88
      %p90 = scmp.ne.s32.totalorder %s79, %s80
      %p91 = scmp.eq.s32.totalorder %s31, 0
      %p92 = por %p90, %p91
      %p93 = scmp.ne.s32.totalorder %s79, %s80
      %p94 = scmp.eq.s32.totalorder %s32, 3
      %p95 = por %p93, %p94
      %p97 = scmp.ne.s32.totalorder %s80, %s96
      %p98 = scmp.eq.s32.totalorder %s32, 0
      %p99 = por %p97, %p98
      %s100 = ssub.s32 %s33, %s45
      %s101 = ssub.s32 %s34, %s41
      %s102 = sor.u32 %s100, %s101
      %p103 = scmp.eq.s32.totalorder %s102, 0
      %s105 = sadd.s32 %s104, 1
      %s106 = scalar_select %p103, %s104, %s105
      %p109 = pneg %p103
      %p110 = scmp.eq.s32.totalorder %s26, 3
      %p111 = por %p109, %p110
      %p112 = scmp.ne.s32.totalorder %s104, %s107
      %p113 = scmp.eq.s32.totalorder %s26, 0
      %p114 = por %p112, %p113
      %p115 = scmp.ne.s32.totalorder %s104, %s107
      %p116 = scmp.eq.s32.totalorder %s31, 3
      %p117 = por %p115, %p116
      %p118 = scmp.ne.s32.totalorder %s107, %s108
      %p119 = scmp.eq.s32.totalorder %s31, 0
      %p120 = por %p118, %p119
      %p121 = scmp.ne.s32.totalorder %s107, %s108
      %p122 = scmp.eq.s32.totalorder %s32, 3
      %p123 = por %p121, %p122
      %p125 = scmp.ne.s32.totalorder %s108, %s124
      %p126 = scmp.eq.s32.totalorder %s32, 0
      %p127 = por %p125, %p126
      %s129 = sadd.s32 %s128, 1
      %p132 = scmp.eq.s32.totalorder %s26, 3
      %p133 = scmp.ne.s32.totalorder %s128, %s130
      %p134 = scmp.eq.s32.totalorder %s26, 0
      %p135 = por %p133, %p134
      %p136 = scmp.ne.s32.totalorder %s128, %s130
      %p137 = scmp.eq.s32.totalorder %s31, 3
      %p138 = por %p136, %p137
      %p139 = scmp.ne.s32.totalorder %s130, %s131
      %p140 = scmp.eq.s32.totalorder %s31, 0
      %p141 = por %p139, %p140
      %p142 = scmp.ne.s32.totalorder %s130, %s131
      %p143 = scmp.eq.s32.totalorder %s32, 3
      %p144 = por %p142, %p143
      %p146 = scmp.ne.s32.totalorder %s131, %s145
      %p147 = scmp.eq.s32.totalorder %s32, 0
      %p148 = por %p146, %p147
      %s150 = sadd.s32 %s149, 1
      %p153 = scmp.eq.s32.totalorder %s26, 3
      %p154 = scmp.ne.s32.totalorder %s149, %s151
      %p155 = scmp.eq.s32.totalorder %s26, 0
      %p156 = por %p154, %p155
      %p157 = scmp.ne.s32.totalorder %s149, %s151
      %p158 = scmp.eq.s32.totalorder %s31, 3
      %p159 = por %p157, %p158
      %p160 = scmp.ne.s32.totalorder %s151, %s152
      %p161 = scmp.eq.s32.totalorder %s31, 0
      %p162 = por %p160, %p161
      %p163 = scmp.ne.s32.totalorder %s151, %s152
      %p164 = scmp.eq.s32.totalorder %s32, 3
      %p165 = por %p163, %p164
      %p167 = scmp.ne.s32.totalorder %s152, %s166
      %p168 = scmp.eq.s32.totalorder %s32, 0
      %p169 = por %p167, %p168
      %s171 = sadd.s32 %s170, 1
      %p174 = scmp.eq.s32.totalorder %s26, 3
      %p175 = scmp.ne.s32.totalorder %s170, %s172
      %p176 = scmp.eq.s32.totalorder %s26, 0
      %p177 = por %p175, %p176
      %p178 = scmp.ne.s32.totalorder %s170, %s172
      %p179 = scmp.eq.s32.totalorder %s31, 3
      %p180 = por %p178, %p179
      %p181 = scmp.ne.s32.totalorder %s172, %s173
      %p182 = scmp.eq.s32.totalorder %s31, 0
      %p183 = por %p181, %p182
      %p184 = scmp.ne.s32.totalorder %s172, %s173
      %p185 = scmp.eq.s32.totalorder %s32, 3
      %p186 = por %p184, %p185
      %p188 = scmp.ne.s32.totalorder %s173, %s187
      %p189 = scmp.eq.s32.totalorder %s32, 0
      %p190 = por %p188, %p189
      %s192 = sadd.s32 %s191, 1
      %p195 = scmp.eq.s32.totalorder %s26, 3
      %p196 = scmp.ne.s32.totalorder %s191, %s193
      %p197 = scmp.eq.s32.totalorder %s26, 0
      %p198 = por %p196, %p197
      %p199 = scmp.ne.s32.totalorder %s191, %s193
      %p200 = scmp.eq.s32.totalorder %s31, 3
      %p201 = por %p199, %p200
      %p202 = scmp.ne.s32.totalorder %s193, %s194
      %p203 = scmp.eq.s32.totalorder %s31, 0
      %p204 = por %p202, %p203
      %p205 = scmp.ne.s32.totalorder %s193, %s194
      %p206 = scmp.eq.s32.totalorder %s32, 3
      %p207 = por %p205, %p206
      %p209 = scmp.ne.s32.totalorder %s194, %s208
      %p210 = scmp.eq.s32.totalorder %s32, 0
      %p211 = por %p209, %p210
      %s212 = ssub.s32 %s33, %s45
      %s213 = ssub.s32 %s34, %s41
      %s214 = sor.u32 %s212, %s213
      %p215 = scmp.eq.s32.totalorder %s214, 0
      %s217 = sadd.s32 %s216, 1
      %s218 = scalar_select %p215, %s216, %s217
      %p221 = pneg %p215
      %p222 = scmp.eq.s32.totalorder %s26, 3
      %p223 = por %p221, %p222
      %p224 = scmp.ne.s32.totalorder %s216, %s219
      %p225 = scmp.eq.s32.totalorder %s26, 0
      %p226 = por %p224, %p225
      %p227 = scmp.ne.s32.totalorder %s216, %s219
      %p228 = scmp.eq.s32.totalorder %s31, 3
      %p229 = por %p227, %p228
      %p230 = scmp.ne.s32.totalorder %s219, %s220
      %p231 = scmp.eq.s32.totalorder %s31, 0
      %p232 = por %p230, %p231
      %p233 = scmp.ne.s32.totalorder %s219, %s220
      %p234 = scmp.eq.s32.totalorder %s32, 3
      %p235 = por %p233, %p234
      %p237 = scmp.ne.s32.totalorder %s220, %s236
      %p238 = scmp.eq.s32.totalorder %s32, 0
      %p239 = por %p237, %p238
      %s240 = ssub.s32 %s33, %s45
      %s241 = ssub.s32 %s34, %s41
      %s242 = sor.u32 %s240, %s241
      %p243 = scmp.eq.s32.totalorder %s242, 0
      %s245 = sadd.s32 %s244, 1
      %s246 = scalar_select %p243, %s244, %s245
      %p249 = pneg %p243
      %p250 = scmp.eq.s32.totalorder %s26, 3
      %p251 = por %p249, %p250
      %p252 = scmp.ne.s32.totalorder %s244, %s247
      %p253 = scmp.eq.s32.totalorder %s26, 0
      %p254 = por %p252, %p253
      %p255 = scmp.ne.s32.totalorder %s244, %s247
      %p256 = scmp.eq.s32.totalorder %s31, 3
      %p257 = por %p255, %p256
      %p258 = scmp.ne.s32.totalorder %s247, %s248
      %p259 = scmp.eq.s32.totalorder %s31, 0
      %p260 = por %p258, %p259
      %p261 = scmp.ne.s32.totalorder %s247, %s248
      %p262 = scmp.eq.s32.totalorder %s32, 3
      %p263 = por %p261, %p262
      %p265 = scmp.ne.s32.totalorder %s248, %s264
      %p266 = scmp.eq.s32.totalorder %s32, 0
      %p267 = por %p265, %p266
      %s268 = ssub.s32 %s33, %s45
      %s269 = ssub.s32 %s34, %s41
      %s270 = sor.u32 %s268, %s269
      %p271 = scmp.eq.s32.totalorder %s270, 0
      %s273 = sadd.s32 %s272, 1
      %s274 = scalar_select %p271, %s272, %s273
      %p277 = pneg %p271
      %p278 = scmp.eq.s32.totalorder %s26, 3
      %p279 = por %p277, %p278
      %p280 = scmp.ne.s32.totalorder %s272, %s275
      %p281 = scmp.eq.s32.totalorder %s26, 0
      %p282 = por %p280, %p281
      %p283 = scmp.ne.s32.totalorder %s272, %s275
      %p284 = scmp.eq.s32.totalorder %s31, 3
      %p285 = por %p283, %p284
      %p286 = scmp.ne.s32.totalorder %s275, %s276
      %p287 = scmp.eq.s32.totalorder %s31, 0
      %p288 = por %p286, %p287
      %p289 = scmp.ne.s32.totalorder %s275, %s276
      %p290 = scmp.eq.s32.totalorder %s32, 3
      %p291 = por %p289, %p290
      %p293 = scmp.ne.s32.totalorder %s276, %s292
      %p294 = scmp.eq.s32.totalorder %s32, 0
      %p295 = por %p293, %p294
      %p296 = scmp.le.s32.totalorder 1, %s26
      %p297 = scmp.lt.s32.totalorder %s26, 5
      %p298 = pnand %p296, %p297
      %p299 = pneg %p298
      // Predicated region
      $region9: #{tpu_custom_call.1} parent=5 // pred_check
        _
      $region10: #{tpu_custom_call.1} parent=5 // pred_check_branch
        %301 = sbr.rel (%p298) target = $region12
      $region11: #{tpu_custom_call.1} parent=5 // pred_region
        %s302 = ssub.s32 %s26, 1
        // Predicated region
        $region13: #{tpu_custom_call.1} parent=11 // pred_check
          %p303 = pneg %p141
        $region14: #{tpu_custom_call.1} parent=11 // pred_check_branch
          %305 = sbr.rel (%p303) target = $region16
        $region15: #{tpu_custom_call.1} parent=11 // pred_region
          _
        $region16: #{tpu_custom_call.1} parent=11 // pred_fallthru
          _
        // Predicated region
        $region17: #{tpu_custom_call.1} parent=11 // pred_check
          %p306 = pneg %p162
        $region18: #{tpu_custom_call.1} parent=11 // pred_check_branch
          %308 = sbr.rel (%p306) target = $region20
        $region19: #{tpu_custom_call.1} parent=11 // pred_region
          _
        $region20: #{tpu_custom_call.1} parent=11 // pred_fallthru
          _
        // Predicated region
        $region21: #{tpu_custom_call.1} parent=11 // pred_check
          %p309 = pneg %p183
        $region22: #{tpu_custom_call.1} parent=11 // pred_check_branch
          %311 = sbr.rel (%p309) target = $region24
        $region23: #{tpu_custom_call.1} parent=11 // pred_region
          %s313 = ssub.s32 640, 640
          %314 = vsyncadd [#allocation6], %s313
          %s315 = sshll.u32 [#allocation5], 4
          %s316 = int_to_ptr.vmem [resolvable:$true] %s315
          %321 = dma.hbm_to_vmem [thread:$0]  %s5, 640, %s316, [#allocation6], 128, 128, 8
        $region24: #{tpu_custom_call.1} parent=11 // pred_fallthru
          _
        // Predicated region
        $region25: #{tpu_custom_call.1} parent=11 // pred_check
          %p322 = pneg %p204
        $region26: #{tpu_custom_call.1} parent=11 // pred_check_branch
          %324 = sbr.rel (%p322) target = $region28
        $region27: #{tpu_custom_call.1} parent=11 // pred_region
          _
        $region28: #{tpu_custom_call.1} parent=11 // pred_fallthru
          _
      $region12: #{tpu_custom_call.1} parent=5 // pred_fallthru
        _
      %p325 = scmp.lt.s32.totalorder %s26, 4
      // Predicated region
      $region29: #{tpu_custom_call.1} parent=5 // pred_check
        %p326 = pneg %p325
      $region30: #{tpu_custom_call.1} parent=5 // pred_check_branch
        %328 = sbr.rel (%p326) target = $region32
      $region31: #{tpu_custom_call.1} parent=5 // pred_region
        // Predicated region
        $region33: #{tpu_custom_call.1} parent=31 // pred_check
          %p329 = pneg %p58
        $region34: #{tpu_custom_call.1} parent=31 // pred_check_branch
          %331 = sbr.rel (%p329) target = $region36
        $region35: #{tpu_custom_call.1} parent=31 // pred_region
          %p332 = scmp.lt.s32.totalorder %s33, 1
          %s333 = scalar_select %p332, %s33, 1
          %s334 = smul.addr %s333, 24
          %s335 = smul.addr %s334, 4
          %s336 = scalar_lea.vmem %s0, %s335
        $region36: #{tpu_custom_call.1} parent=31 // pred_fallthru
          _
        // Predicated region
        $region37: #{tpu_custom_call.1} parent=31 // pred_check
          %p337 = pneg %p86
        $region38: #{tpu_custom_call.1} parent=31 // pred_check_branch
          %339 = sbr.rel (%p337) target = $region40
        $region39: #{tpu_custom_call.1} parent=31 // pred_region
          %s340 = sand.u32 %s76, 1
          %s341 = scalar_lea.sflag [#allocation3], %s340
          %s342 = sand.u32 %s76, 1
          %s343 = smul.addr %s342, 12
          %s344 = scalar_lea.vmem [#allocation2], %s343
          %s345 = smul.u32 2, %s34
          %s347 = ssub.s32 192, 192
          %348 = vsyncadd %s341, %s347
          %s349 = smul.addr %s33, 12
          %s350 = sadd.s32 %s345, %s349
          %s351 = smul.addr %s350, 32
          %s352 = scalar_lea.hbm %s1, %s351
          %s353 = sshll.u32 %s344, 4
          %s354 = int_to_ptr.vmem [resolvable:$true] %s353
          %359 = dma.hbm_to_vmem [thread:$0]  %s352, 192, %s354, %s341, 128, 64, 4
        $region40: #{tpu_custom_call.1} parent=31 // pred_fallthru
          _
        // Predicated region
        $region41: #{tpu_custom_call.1} parent=31 // pred_check
          %p360 = pneg %p114
        $region42: #{tpu_custom_call.1} parent=31 // pred_check_branch
          %362 = sbr.rel (%p360) target = $region44
        $region43: #{tpu_custom_call.1} parent=31 // pred_region
          %s363 = smul.u32 2, %s34
          %p364 = scmp.lt.s32.totalorder %s33, 1
          %s365 = scalar_select %p364, %s33, 1
          %p366 = scmp.lt.s32.totalorder %s363, 3
          %s367 = scalar_select %p366, %s363, 3
          %s368 = smul.addr %s365, 4
          %s369 = sadd.s32 %s367, %s368
          %s370 = scalar_lea.vmem %s2, %s369
          %s371 = smul.u32 2, %s34
        $region44: #{tpu_custom_call.1} parent=31 // pred_fallthru
          _
      $region32: #{tpu_custom_call.1} parent=5 // pred_fallthru
        _
      %p372 = scmp.le.s32.totalorder 1, %s26
      %p373 = scmp.lt.s32.totalorder %s26, 5
      %p374 = pnand %p372, %p373
      %p375 = pneg %p374
      // Predicated region
      $region45: #{tpu_custom_call.1} parent=5 // pred_check
        _
      $region46: #{tpu_custom_call.1} parent=5 // pred_check_branch
        %377 = sbr.rel (%p374) target = $region48
      $region47: #{tpu_custom_call.1} parent=5 // pred_region
        %s378 = ssub.s32 %s26, 1
        %s379 = sand.u32 %s79, 1
        %s380 = scalar_lea.sflag [#allocation3], %s379
        %s381 = sand.u32 %s79, 1
        %s382 = smul.addr %s381, 12
        %s383 = scalar_lea.vmem [#allocation2], %s382
        // Predicated region
        $region49: #{tpu_custom_call.1} parent=47 // pred_check
          %p384 = pneg %p92
        $region50: #{tpu_custom_call.1} parent=47 // pred_check_branch
          %386 = sbr.rel (%p384) target = $region52
        $region51: #{tpu_custom_call.1} parent=47 // pred_region
          %387 = dma.done %s380, 192
        $region52: #{tpu_custom_call.1} parent=47 // pred_fallthru
          _
        // Predicated region
        $region53: #{tpu_custom_call.1} parent=47 // pred_check
          %p388 = pneg %p183
        $region54: #{tpu_custom_call.1} parent=47 // pred_check_branch
          %390 = sbr.rel (%p388) target = $region56
        $region55: #{tpu_custom_call.1} parent=47 // pred_region
          %391 = dma.done [#allocation6], 640
        $region56: #{tpu_custom_call.1} parent=47 // pred_fallthru
          _
        %p392 = scmp.lt.s32.totalorder %s35, 1
        %s393 = scalar_select %p392, %s35, 1
        %s394 = smul.addr %s393, 24
        %s395 = smul.addr %s394, 4
        %s396 = scalar_lea.vmem %s0, %s395
        %p397 = pneg %p64
        %p398 = pneg %p61
        %s399 = sand.u32 %s79, 1
        %s400 = scalar_lea.sflag [#allocation3], %s399
        %s401 = sand.u32 %s79, 1
        %s402 = smul.addr %s401, 12
        %s403 = scalar_lea.vmem [#allocation2], %s402
        %p404 = pneg %p92
        %p405 = pneg %p89
        %s406 = smul.u32 2, %s36
        %p407 = scmp.lt.s32.totalorder %s35, 1
        %s408 = scalar_select %p407, %s35, 1
        %p409 = scmp.lt.s32.totalorder %s406, 3
        %s410 = scalar_select %p409, %s406, 3
        %s411 = smul.addr %s408, 4
        %s412 = sadd.s32 %s410, %s411
        %s413 = scalar_lea.vmem %s2, %s412
        %p414 = pneg %p120
        %p415 = pneg %p117
        %p416 = pneg %p141
        %p417 = pneg %p138
        %p418 = pneg %p162
        %p419 = pneg %p159
        %p420 = pneg %p183
        %p421 = pneg %p180
        %p422 = pneg %p204
        %p423 = pneg %p201
        %p424 = pneg %p232
        %p425 = pneg %p229
        %s426 = sand.u32 %s219, 1
        %s427 = scalar_lea.sflag [#allocation4], %s426
        %s428 = sand.u32 %s219, 1
        %s429 = smul.addr %s428, 64
        %s430 = scalar_lea.vmem [#allocation7], %s429
        %p431 = pneg %p260
        %p432 = pneg %p257
        %s433 = sand.u32 %s31, 1
        %s434 = scalar_lea.sflag [#allocation9], %s433
        %s435 = sand.u32 %s247, 1
        %s436 = smul.addr %s435, 2
        %s437 = scalar_lea.vmem [#allocation8], %s436
        %p438 = pneg %p288
        %p439 = pneg %p285
        %s440 = sand.u32 %s31, 1
        %s441 = scalar_lea.sflag [#allocation9], %s440
        %s442 = sand.u32 %s275, 1
        %s443 = smul.addr %s442, 2
        %s444 = scalar_lea.vmem [#allocation10], %s443
        %p445 = scmp.lt.s32.totalorder %s35, 1
        %s446 = scalar_select %p445, %s35, 1
        %s447 = smul.addr %s446, 24
        %s448 = smul.addr %s447, 4
        %s449 = scalar_lea.vmem %s0, %s448
        %s450 = smul.u32 2, %s36
        %s451 = smul.u32 2, %s36
        %p452 = scmp.lt.s32.totalorder %s35, 1
        %s453 = scalar_select %p452, %s35, 1
        %p454 = scmp.lt.s32.totalorder %s451, 3
        %s455 = scalar_select %p454, %s451, 3
        %s456 = smul.addr %s453, 4
        %s457 = sadd.s32 %s455, %s456
        %s458 = scalar_lea.vmem %s2, %s457
        %s459 = smul.u32 2, %s36
        %s460 = smul.u32 2, %s36
        %s461 = smul.u32 2, %s36
        %s462 = smul.u32 2, %s36
        %v463 = vlaneseq
        %v464 = vshrl.u32 %v463, 7
        %v465 = vadd.s32 %v464, 8
        %v466 = vld [vmem:[%s383] ss:$2 sm:$0x3]
        %s467 = scalar_lea.vmem %s383, 1 [#allocation2]
        %v468 = vld [vmem:[%s467] ss:$2 sm:$0x3]
        %v469 = vadd.f32 %v466, 1.0
        %v470 = vmul.f32 %v469, 16.0
        %v471 = vsub.f32 %v470, 1.0
        %v472 = vmul.f32 %v471, 0.5
        %v473 = vadd.f32 %v468, 1.0
        %v474 = vmul.f32 %v473, 16.0
        %v475 = vsub.f32 %v474, 1.0
        %v476 = vmul.f32 %v475, 0.5
        %v477 = vfloor.f32 %v472
        %v478 = vfloor.f32 %v476
        %v479 = vsub.f32 %v472, %v477
        %v480 = vsub.f32 %v476, %v478
        %v481 = vsub.f32 1.0, %v479
        %v482 = vsub.f32 1.0, %v480
        %v483 = vcvt.f32.s32.to.zero.pseudo %v477
        %v484 = vcvt.f32.s32.to.zero.pseudo %v478
        %v485 = vadd.s32 %v483, 1
        %v486 = vadd.s32 %v484, 1
        %vm487 = vcmp.ge.s32.totalorder %v484, 0
        %vm488 = vcmp.lt.s32.totalorder %v484, 16
        %vm489 = vmand %vm487, %vm488
        %v490 = vsel %vm489, %v482, 0.0
        %vm491 = vcmp.ge.s32.totalorder %v486, 0
        %vm492 = vcmp.lt.s32.totalorder %v486, 16
        %vm493 = vmand %vm491, %vm492
        %v494 = vsel %vm493, %v480, 0.0
        %vm495 = vcmp.gt.s32.totalorder %v484, 0
        %v496 = vsel %vm495, %v484, 0
        %vm497 = vcmp.lt.s32.totalorder %v496, 15
        %v498 = vsel %vm497, %v496, 15
        %vm499 = vcmp.gt.s32.totalorder %v486, 0
        %v500 = vsel %vm499, %v486, 0
        %vm501 = vcmp.lt.s32.totalorder %v500, 15
        %v502 = vsel %vm501, %v500, 15
        %v503 = vlaneseq
        %v504 = vshrl.u32 %v503, 7
        %v505 = vsub.s32 0, %v504
        %v506 = vrot.slane %v498, %v505
        %v507 = vlaneseq
        %v508 = vshrl.u32 %v507, 7
        %v509 = vsub.s32 1, %v508
        %v510 = vrot.slane %v498, %v509
        %vm511 = vcmp.eq.s32.totalorder %v464, %v506
        %vm512 = vcmp.eq.s32.totalorder %v464, %v510
        %vm513 = vcmp.eq.s32.totalorder %v465, %v506
        %vm514 = vcmp.eq.s32.totalorder %v465, %v510
        %v516 = vlaneseq
        %v517 = vshrl.u32 %v516, 7
        %v518 = vsub.s32 0, %v517
        %v519 = vrot.slane %v490, %v518
        %v520 = vlaneseq
        %v521 = vshrl.u32 %v520, 7
        %v522 = vsub.s32 1, %v521
        %v523 = vrot.slane %v490, %v522
        %v526 = vsel %vm511, %v519, 0.0
        %v527 = vsel %vm512, %v523, 0.0
        %v528 = vsel %vm513, %v519, 0.0
        %v529 = vsel %vm514, %v523, 0.0
        %v530 = vlaneseq
        %v531 = vshrl.u32 %v530, 7
        %v532 = vsub.s32 0, %v531
        %v533 = vrot.slane %v502, %v532
        %v534 = vlaneseq
        %v535 = vshrl.u32 %v534, 7
        %v536 = vsub.s32 1, %v535
        %v537 = vrot.slane %v502, %v536
        %vm538 = vcmp.eq.s32.totalorder %v464, %v533
        %vm539 = vcmp.eq.s32.totalorder %v464, %v537
        %vm540 = vcmp.eq.s32.totalorder %v465, %v533
        %vm541 = vcmp.eq.s32.totalorder %v465, %v537
        %v543 = vlaneseq
        %v544 = vshrl.u32 %v543, 7
        %v545 = vsub.s32 0, %v544
        %v546 = vrot.slane %v494, %v545
        %v547 = vlaneseq
        %v548 = vshrl.u32 %v547, 7
        %v549 = vsub.s32 1, %v548
        %v550 = vrot.slane %v494, %v549
        %v553 = vsel %vm538, %v546, 0.0
        %v554 = vsel %vm539, %v550, 0.0
        %v555 = vsel %vm540, %v546, 0.0
        %v556 = vsel %vm541, %v550, 0.0
        %v557 = vadd.f32 %v526, %v553
        %v558 = vadd.f32 %v527, %v554
        %v559 = vadd.f32 %v528, %v555
        %v560 = vadd.f32 %v529, %v556
        %vm561 = vcmp.ge.s32.totalorder %v483, 0
        %vm562 = vcmp.lt.s32.totalorder %v483, 16
        %vm563 = vmand %vm561, %vm562
        %v564 = vsel %vm563, %v481, 0.0
        %vm565 = vcmp.ge.s32.totalorder %v485, 0
        %vm566 = vcmp.lt.s32.totalorder %v485, 16
        %vm567 = vmand %vm565, %vm566
        %v568 = vsel %vm567, %v479, 0.0
        %vm569 = vcmp.gt.s32.totalorder %v483, 0
        %v570 = vsel %vm569, %v483, 0
        %vm571 = vcmp.lt.s32.totalorder %v570, 15
        %v572 = vsel %vm571, %v570, 15
        %vm573 = vcmp.gt.s32.totalorder %v485, 0
        %v574 = vsel %vm573, %v485, 0
        %vm575 = vcmp.lt.s32.totalorder %v574, 15
        %v576 = vsel %vm575, %v574, 15
        %v577 = vlaneseq
        %v578 = vshrl.u32 %v577, 7
        %v579 = vsub.s32 0, %v578
        %v580 = vrot.slane %v572, %v579
        %v581 = vlaneseq
        %v582 = vshrl.u32 %v581, 7
        %v583 = vsub.s32 1, %v582
        %v584 = vrot.slane %v572, %v583
        %vm585 = vcmp.eq.s32.totalorder %v464, %v580
        %vm586 = vcmp.eq.s32.totalorder %v464, %v584
        %vm587 = vcmp.eq.s32.totalorder %v465, %v580
        %vm588 = vcmp.eq.s32.totalorder %v465, %v584
        %v590 = vlaneseq
        %v591 = vshrl.u32 %v590, 7
        %v592 = vsub.s32 0, %v591
        %v593 = vrot.slane %v564, %v592
        %v594 = vlaneseq
        %v595 = vshrl.u32 %v594, 7
        %v596 = vsub.s32 1, %v595
        %v597 = vrot.slane %v564, %v596
        %v600 = vsel %vm585, %v593, 0.0
        %v601 = vsel %vm586, %v597, 0.0
        %v602 = vsel %vm587, %v593, 0.0
        %v603 = vsel %vm588, %v597, 0.0
        %v604 = vlaneseq
        %v605 = vshrl.u32 %v604, 7
        %v606 = vsub.s32 0, %v605
        %v607 = vrot.slane %v576, %v606
        %v608 = vlaneseq
        %v609 = vshrl.u32 %v608, 7
        %v610 = vsub.s32 1, %v609
        %v611 = vrot.slane %v576, %v610
        %vm612 = vcmp.eq.s32.totalorder %v464, %v607
        %vm613 = vcmp.eq.s32.totalorder %v464, %v611
        %vm614 = vcmp.eq.s32.totalorder %v465, %v607
        %vm615 = vcmp.eq.s32.totalorder %v465, %v611
        %v617 = vlaneseq
        %v618 = vshrl.u32 %v617, 7
        %v619 = vsub.s32 0, %v618
        %v620 = vrot.slane %v568, %v619
        %v621 = vlaneseq
        %v622 = vshrl.u32 %v621, 7
        %v623 = vsub.s32 1, %v622
        %v624 = vrot.slane %v568, %v623
        %v627 = vsel %vm612, %v620, 0.0
        %v628 = vsel %vm613, %v624, 0.0
        %v629 = vsel %vm614, %v620, 0.0
        %v630 = vsel %vm615, %v624, 0.0
        %v631 = vadd.f32 %v600, %v627
        %v632 = vadd.f32 %v601, %v628
        %v633 = vadd.f32 %v602, %v629
        %v634 = vadd.f32 %v603, %v630
        %v639 = vcombine.low %v557, %v558
        %v640 = vcombine.high %v557, %v558
        %v642 = vunpack.c.l.s4 1966171168
        %v643 = vunpack.c.0.s8 %v642
        %v644 = vlaneseq
        %v645 = vshrl.u32 %v644, 7
        %v646 = vsub.s32 %v643, %v645
        %v647 = vrot.slane %v639, %v646
        %v649 = vunpack.c.l.s4 1966171168
        %v650 = vunpack.c.0.s8 %v649
        %v651 = vlaneseq
        %v652 = vshrl.u32 %v651, 7
        %v653 = vsub.s32 %v650, %v652
        %v654 = vrot.slane %v640, %v653
        %v655 = vcombine.high %v647, %v647
        %v656 = vcombine.high %v654, %v654
        %v658 = vunpack.c.l.s4 1966171168
        %v659 = vunpack.c.0.s8 %v658
        %v660 = vlaneseq
        %v661 = vshrl.u32 %v660, 7
        %v662 = vsub.s32 %v659, %v661
        %v663 = vrot.slane %v647, %v662
        %v665 = vunpack.c.l.s4 1966171168
        %v666 = vunpack.c.0.s8 %v665
        %v667 = vlaneseq
        %v668 = vshrl.u32 %v667, 7
        %v669 = vsub.s32 %v666, %v668
        %v670 = vrot.slane %v654, %v669
        %v672 = vunpack.c.l.s4 1966171168
        %v673 = vunpack.c.0.s8 %v672
        %v674 = vlaneseq
        %v675 = vshrl.u32 %v674, 7
        %v676 = vsub.s32 %v673, %v675
        %v677 = vrot.slane %v655, %v676
        %v679 = vunpack.c.l.s4 1966171168
        %v680 = vunpack.c.0.s8 %v679
        %v681 = vlaneseq
        %v682 = vshrl.u32 %v681, 7
        %v683 = vsub.s32 %v680, %v682
        %v684 = vrot.slane %v656, %v683
        %v685 = vcombine.high %v663, %v663
        %v686 = vcombine.high %v670, %v670
        %v687 = vcombine.high %v677, %v677
        %v688 = vcombine.high %v684, %v684
        %v689 = vcombine.low %v559, %v560
        %v690 = vcombine.high %v559, %v560
        %v692 = vunpack.c.l.s4 1966171168
        %v693 = vunpack.c.0.s8 %v692
        %v694 = vlaneseq
        %v695 = vshrl.u32 %v694, 7
        %v696 = vsub.s32 %v693, %v695
        %v697 = vrot.slane %v689, %v696
        %v699 = vunpack.c.l.s4 1966171168
        %v700 = vunpack.c.0.s8 %v699
        %v701 = vlaneseq
        %v702 = vshrl.u32 %v701, 7
        %v703 = vsub.s32 %v700, %v702
        %v704 = vrot.slane %v690, %v703
        %v705 = vcombine.high %v697, %v697
        %v706 = vcombine.high %v704, %v704
        %v708 = vunpack.c.l.s4 1966171168
        %v709 = vunpack.c.0.s8 %v708
        %v710 = vlaneseq
        %v711 = vshrl.u32 %v710, 7
        %v712 = vsub.s32 %v709, %v711
        %v713 = vrot.slane %v697, %v712
        %v715 = vunpack.c.l.s4 1966171168
        %v716 = vunpack.c.0.s8 %v715
        %v717 = vlaneseq
        %v718 = vshrl.u32 %v717, 7
        %v719 = vsub.s32 %v716, %v718
        %v720 = vrot.slane %v704, %v719
        %v722 = vunpack.c.l.s4 1966171168
        %v723 = vunpack.c.0.s8 %v722
        %v724 = vlaneseq
        %v725 = vshrl.u32 %v724, 7
        %v726 = vsub.s32 %v723, %v725
        %v727 = vrot.slane %v705, %v726
        %v729 = vunpack.c.l.s4 1966171168
        %v730 = vunpack.c.0.s8 %v729
        %v731 = vlaneseq
        %v732 = vshrl.u32 %v731, 7
        %v733 = vsub.s32 %v730, %v732
        %v734 = vrot.slane %v706, %v733
        %v735 = vcombine.high %v713, %v713
        %v736 = vcombine.high %v720, %v720
        %v737 = vcombine.high %v727, %v727
        %v738 = vcombine.high %v734, %v734
        %v739 = vlaneseq
        %v740 = vshrl.u32 %v739, 7
        %v741 = vsub.s32 0, %v740
        %v742 = vrot.slane %v663, %v741
        %v743 = vlaneseq
        %v744 = vshrl.u32 %v743, 7
        %v745 = vsub.s32 1, %v744
        %v746 = vrot.slane %v663, %v745
        %v747 = vlaneseq
        %v748 = vshrl.u32 %v747, 7
        %v749 = vsub.s32 0, %v748
        %v750 = vrot.slane %v677, %v749
        %v751 = vlaneseq
        %v752 = vshrl.u32 %v751, 7
        %v753 = vsub.s32 1, %v752
        %v754 = vrot.slane %v677, %v753
        %v755 = vlaneseq
        %v756 = vshrl.u32 %v755, 7
        %v757 = vsub.s32 0, %v756
        %v758 = vrot.slane %v685, %v757
        %v759 = vlaneseq
        %v760 = vshrl.u32 %v759, 7
        %v761 = vsub.s32 1, %v760
        %v762 = vrot.slane %v685, %v761
        %v763 = vlaneseq
        %v764 = vshrl.u32 %v763, 7
        %v765 = vsub.s32 0, %v764
        %v766 = vrot.slane %v687, %v765
        %v767 = vlaneseq
        %v768 = vshrl.u32 %v767, 7
        %v769 = vsub.s32 1, %v768
        %v770 = vrot.slane %v687, %v769
        %v771 = vlaneseq
        %v772 = vshrl.u32 %v771, 7
        %v773 = vsub.s32 0, %v772
        %v774 = vrot.slane %v670, %v773
        %v775 = vlaneseq
        %v776 = vshrl.u32 %v775, 7
        %v777 = vsub.s32 1, %v776
        %v778 = vrot.slane %v670, %v777
        %v779 = vlaneseq
        %v780 = vshrl.u32 %v779, 7
        %v781 = vsub.s32 0, %v780
        %v782 = vrot.slane %v684, %v781
        %v783 = vlaneseq
        %v784 = vshrl.u32 %v783, 7
        %v785 = vsub.s32 1, %v784
        %v786 = vrot.slane %v684, %v785
        %v787 = vlaneseq
        %v788 = vshrl.u32 %v787, 7
        %v789 = vsub.s32 0, %v788
        %v790 = vrot.slane %v686, %v789
        %v791 = vlaneseq
        %v792 = vshrl.u32 %v791, 7
        %v793 = vsub.s32 1, %v792
        %v794 = vrot.slane %v686, %v793
        %v795 = vlaneseq
        %v796 = vshrl.u32 %v795, 7
        %v797 = vsub.s32 0, %v796
        %v798 = vrot.slane %v688, %v797
        %v799 = vlaneseq
        %v800 = vshrl.u32 %v799, 7
        %v801 = vsub.s32 1, %v800
        %v802 = vrot.slane %v688, %v801
        %v803 = vlaneseq
        %v804 = vshrl.u32 %v803, 7
        %v805 = vsub.s32 0, %v804
        %v806 = vrot.slane %v713, %v805
        %v807 = vlaneseq
        %v808 = vshrl.u32 %v807, 7
        %v809 = vsub.s32 1, %v808
        %v810 = vrot.slane %v713, %v809
        %v811 = vlaneseq
        %v812 = vshrl.u32 %v811, 7
        %v813 = vsub.s32 0, %v812
        %v814 = vrot.slane %v727, %v813
        %v815 = vlaneseq
        %v816 = vshrl.u32 %v815, 7
        %v817 = vsub.s32 1, %v816
        %v818 = vrot.slane %v727, %v817
        %v819 = vlaneseq
        %v820 = vshrl.u32 %v819, 7
        %v821 = vsub.s32 0, %v820
        %v822 = vrot.slane %v735, %v821
        %v823 = vlaneseq
        %v824 = vshrl.u32 %v823, 7
        %v825 = vsub.s32 1, %v824
        %v826 = vrot.slane %v735, %v825
        %v827 = vlaneseq
        %v828 = vshrl.u32 %v827, 7
        %v829 = vsub.s32 0, %v828
        %v830 = vrot.slane %v737, %v829
        %v831 = vlaneseq
        %v832 = vshrl.u32 %v831, 7
        %v833 = vsub.s32 1, %v832
        %v834 = vrot.slane %v737, %v833
        %v835 = vlaneseq
        %v836 = vshrl.u32 %v835, 7
        %v837 = vsub.s32 0, %v836
        %v838 = vrot.slane %v720, %v837
        %v839 = vlaneseq
        %v840 = vshrl.u32 %v839, 7
        %v841 = vsub.s32 1, %v840
        %v842 = vrot.slane %v720, %v841
        %v843 = vlaneseq
        %v844 = vshrl.u32 %v843, 7
        %v845 = vsub.s32 0, %v844
        %v846 = vrot.slane %v734, %v845
        %v847 = vlaneseq
        %v848 = vshrl.u32 %v847, 7
        %v849 = vsub.s32 1, %v848
        %v850 = vrot.slane %v734, %v849
        %v851 = vlaneseq
        %v852 = vshrl.u32 %v851, 7
        %v853 = vsub.s32 0, %v852
        %v854 = vrot.slane %v736, %v853
        %v855 = vlaneseq
        %v856 = vshrl.u32 %v855, 7
        %v857 = vsub.s32 1, %v856
        %v858 = vrot.slane %v736, %v857
        %v859 = vlaneseq
        %v860 = vshrl.u32 %v859, 7
        %v861 = vsub.s32 0, %v860
        %v862 = vrot.slane %v738, %v861
        %v863 = vlaneseq
        %v864 = vshrl.u32 %v863, 7
        %v865 = vsub.s32 1, %v864
        %v866 = vrot.slane %v738, %v865
        %v899 = vmul.f32 %v742, %v631
        %v900 = vmul.f32 %v746, %v632
        %v901 = vmul.f32 %v742, %v633
        %v902 = vmul.f32 %v746, %v634
        %v903 = vmul.f32 %v750, %v631
        %v904 = vmul.f32 %v754, %v632
        %v905 = vmul.f32 %v750, %v633
        %v906 = vmul.f32 %v754, %v634
        %v907 = vmul.f32 %v758, %v631
        %v908 = vmul.f32 %v762, %v632
        %v909 = vmul.f32 %v758, %v633
        %v910 = vmul.f32 %v762, %v634
        %v911 = vmul.f32 %v766, %v631
        %v912 = vmul.f32 %v770, %v632
        %v913 = vmul.f32 %v766, %v633
        %v914 = vmul.f32 %v770, %v634
        %v915 = vmul.f32 %v774, %v631
        %v916 = vmul.f32 %v778, %v632
        %v917 = vmul.f32 %v774, %v633
        %v918 = vmul.f32 %v778, %v634
        %v919 = vmul.f32 %v782, %v631
        %v920 = vmul.f32 %v786, %v632
        %v921 = vmul.f32 %v782, %v633
        %v922 = vmul.f32 %v786, %v634
        %v923 = vmul.f32 %v790, %v631
        %v924 = vmul.f32 %v794, %v632
        %v925 = vmul.f32 %v790, %v633
        %v926 = vmul.f32 %v794, %v634
        %v927 = vmul.f32 %v798, %v631
        %v928 = vmul.f32 %v802, %v632
        %v929 = vmul.f32 %v798, %v633
        %v930 = vmul.f32 %v802, %v634
        %v931 = vmul.f32 %v806, %v631
        %v932 = vmul.f32 %v810, %v632
        %v933 = vmul.f32 %v806, %v633
        %v934 = vmul.f32 %v810, %v634
        %v935 = vmul.f32 %v814, %v631
        %v936 = vmul.f32 %v818, %v632
        %v937 = vmul.f32 %v814, %v633
        %v938 = vmul.f32 %v818, %v634
        %v939 = vmul.f32 %v822, %v631
        %v940 = vmul.f32 %v826, %v632
        %v941 = vmul.f32 %v822, %v633
        %v942 = vmul.f32 %v826, %v634
        %v943 = vmul.f32 %v830, %v631
        %v944 = vmul.f32 %v834, %v632
        %v945 = vmul.f32 %v830, %v633
        %v946 = vmul.f32 %v834, %v634
        %v947 = vmul.f32 %v838, %v631
        %v948 = vmul.f32 %v842, %v632
        %v949 = vmul.f32 %v838, %v633
        %v950 = vmul.f32 %v842, %v634
        %v951 = vmul.f32 %v846, %v631
        %v952 = vmul.f32 %v850, %v632
        %v953 = vmul.f32 %v846, %v633
        %v954 = vmul.f32 %v850, %v634
        %v955 = vmul.f32 %v854, %v631
        %v956 = vmul.f32 %v858, %v632
        %v957 = vmul.f32 %v854, %v633
        %v958 = vmul.f32 %v858, %v634
        %v959 = vmul.f32 %v862, %v631
        %v960 = vmul.f32 %v866, %v632
        %v961 = vmul.f32 %v862, %v633
        %v962 = vmul.f32 %v866, %v634
        %v963 = vpack.c.bf16 %v901, %v899
        %v964 = vpack.c.bf16 %v902, %v900
        %v965 = vpack.c.bf16 %v905, %v903
        %v966 = vpack.c.bf16 %v906, %v904
        %v967 = vpack.c.bf16 %v909, %v907
        %v968 = vpack.c.bf16 %v910, %v908
        %v969 = vpack.c.bf16 %v913, %v911
        %v970 = vpack.c.bf16 %v914, %v912
        %v971 = vpack.c.bf16 %v917, %v915
        %v972 = vpack.c.bf16 %v918, %v916
        %v973 = vpack.c.bf16 %v921, %v919
        %v974 = vpack.c.bf16 %v922, %v920
        %v975 = vpack.c.bf16 %v925, %v923
        %v976 = vpack.c.bf16 %v926, %v924
        %v977 = vpack.c.bf16 %v929, %v927
        %v978 = vpack.c.bf16 %v930, %v928
        %v979 = vpack.c.bf16 %v933, %v931
        %v980 = vpack.c.bf16 %v934, %v932
        %v981 = vpack.c.bf16 %v937, %v935
        %v982 = vpack.c.bf16 %v938, %v936
        %v983 = vpack.c.bf16 %v941, %v939
        %v984 = vpack.c.bf16 %v942, %v940
        %v985 = vpack.c.bf16 %v945, %v943
        %v986 = vpack.c.bf16 %v946, %v944
        %v987 = vpack.c.bf16 %v949, %v947
        %v988 = vpack.c.bf16 %v950, %v948
        %v989 = vpack.c.bf16 %v953, %v951
        %v990 = vpack.c.bf16 %v954, %v952
        %v991 = vpack.c.bf16 %v957, %v955
        %v992 = vpack.c.bf16 %v958, %v956
        %v993 = vpack.c.bf16 %v961, %v959
        %v994 = vpack.c.bf16 %v962, %v960
        %s995 = scalar_lea.vmem %s383, 4 [#allocation2]
        %v996 = vld [vmem:[%s995] ss:$2 sm:$0x3]
        %s997 = scalar_lea.vmem %s995, 1 [#allocation2]
        %v998 = vld [vmem:[%s997] ss:$2 sm:$0x3]
        %v999 = vadd.f32 %v996, 1.0
        %v1000 = vmul.f32 %v999, 16.0
        %v1001 = vsub.f32 %v1000, 1.0
        %v1002 = vmul.f32 %v1001, 0.5
        %v1003 = vadd.f32 %v998, 1.0
        %v1004 = vmul.f32 %v1003, 16.0
        %v1005 = vsub.f32 %v1004, 1.0
        %v1006 = vmul.f32 %v1005, 0.5
        %v1007 = vfloor.f32 %v1002
        %v1008 = vfloor.f32 %v1006
        %v1009 = vsub.f32 %v1002, %v1007
        %v1010 = vsub.f32 %v1006, %v1008
        %v1011 = vsub.f32 1.0, %v1009
        %v1012 = vsub.f32 1.0, %v1010
        %v1013 = vcvt.f32.s32.to.zero.pseudo %v1007
        %v1014 = vcvt.f32.s32.to.zero.pseudo %v1008
        %v1015 = vadd.s32 %v1013, 1
        %v1016 = vadd.s32 %v1014, 1
        %vm1017 = vcmp.ge.s32.totalorder %v1014, 0
        %vm1018 = vcmp.lt.s32.totalorder %v1014, 16
        %vm1019 = vmand %vm1017, %vm1018
        %v1020 = vsel %vm1019, %v1012, 0.0
        %vm1021 = vcmp.ge.s32.totalorder %v1016, 0
        %vm1022 = vcmp.lt.s32.totalorder %v1016, 16
        %vm1023 = vmand %vm1021, %vm1022
        %v1024 = vsel %vm1023, %v1010, 0.0
        %vm1025 = vcmp.gt.s32.totalorder %v1014, 0
        %v1026 = vsel %vm1025, %v1014, 0
        %vm1027 = vcmp.lt.s32.totalorder %v1026, 15
        %v1028 = vsel %vm1027, %v1026, 15
        %vm1029 = vcmp.gt.s32.totalorder %v1016, 0
        %v1030 = vsel %vm1029, %v1016, 0
        %vm1031 = vcmp.lt.s32.totalorder %v1030, 15
        %v1032 = vsel %vm1031, %v1030, 15
        %v1033 = vlaneseq
        %v1034 = vshrl.u32 %v1033, 7
        %v1035 = vsub.s32 0, %v1034
        %v1036 = vrot.slane %v1028, %v1035
        %v1037 = vlaneseq
        %v1038 = vshrl.u32 %v1037, 7
        %v1039 = vsub.s32 1, %v1038
        %v1040 = vrot.slane %v1028, %v1039
        %vm1041 = vcmp.eq.s32.totalorder %v464, %v1036
        %vm1042 = vcmp.eq.s32.totalorder %v464, %v1040
        %vm1043 = vcmp.eq.s32.totalorder %v465, %v1036
        %vm1044 = vcmp.eq.s32.totalorder %v465, %v1040
        %v1046 = vlaneseq
        %v1047 = vshrl.u32 %v1046, 7
        %v1048 = vsub.s32 0, %v1047
        %v1049 = vrot.slane %v1020, %v1048
        %v1050 = vlaneseq
        %v1051 = vshrl.u32 %v1050, 7
        %v1052 = vsub.s32 1, %v1051
        %v1053 = vrot.slane %v1020, %v1052
        %v1056 = vsel %vm1041, %v1049, 0.0
        %v1057 = vsel %vm1042, %v1053, 0.0
        %v1058 = vsel %vm1043, %v1049, 0.0
        %v1059 = vsel %vm1044, %v1053, 0.0
        %v1060 = vlaneseq
        %v1061 = vshrl.u32 %v1060, 7
        %v1062 = vsub.s32 0, %v1061
        %v1063 = vrot.slane %v1032, %v1062
        %v1064 = vlaneseq
        %v1065 = vshrl.u32 %v1064, 7
        %v1066 = vsub.s32 1, %v1065
        %v1067 = vrot.slane %v1032, %v1066
        %vm1068 = vcmp.eq.s32.totalorder %v464, %v1063
        %vm1069 = vcmp.eq.s32.totalorder %v464, %v1067
        %vm1070 = vcmp.eq.s32.totalorder %v465, %v1063
        %vm1071 = vcmp.eq.s32.totalorder %v465, %v1067
        %v1073 = vlaneseq
        %v1074 = vshrl.u32 %v1073, 7
        %v1075 = vsub.s32 0, %v1074
        %v1076 = vrot.slane %v1024, %v1075
        %v1077 = vlaneseq
        %v1078 = vshrl.u32 %v1077, 7
        %v1079 = vsub.s32 1, %v1078
        %v1080 = vrot.slane %v1024, %v1079
        %v1083 = vsel %vm1068, %v1076, 0.0
        %v1084 = vsel %vm1069, %v1080, 0.0
        %v1085 = vsel %vm1070, %v1076, 0.0
        %v1086 = vsel %vm1071, %v1080, 0.0
        %v1087 = vadd.f32 %v1056, %v1083
        %v1088 = vadd.f32 %v1057, %v1084
        %v1089 = vadd.f32 %v1058, %v1085
        %v1090 = vadd.f32 %v1059, %v1086
        %vm1091 = vcmp.ge.s32.totalorder %v1013, 0
        %vm1092 = vcmp.lt.s32.totalorder %v1013, 16
        %vm1093 = vmand %vm1091, %vm1092
        %v1094 = vsel %vm1093, %v1011, 0.0
        %vm1095 = vcmp.ge.s32.totalorder %v1015, 0
        %vm1096 = vcmp.lt.s32.totalorder %v1015, 16
        %vm1097 = vmand %vm1095, %vm1096
        %v1098 = vsel %vm1097, %v1009, 0.0
        %vm1099 = vcmp.gt.s32.totalorder %v1013, 0
        %v1100 = vsel %vm1099, %v1013, 0
        %vm1101 = vcmp.lt.s32.totalorder %v1100, 15
        %v1102 = vsel %vm1101, %v1100, 15
        %vm1103 = vcmp.gt.s32.totalorder %v1015, 0
        %v1104 = vsel %vm1103, %v1015, 0
        %vm1105 = vcmp.lt.s32.totalorder %v1104, 15
        %v1106 = vsel %vm1105, %v1104, 15
        %v1107 = vlaneseq
        %v1108 = vshrl.u32 %v1107, 7
        %v1109 = vsub.s32 0, %v1108
        %v1110 = vrot.slane %v1102, %v1109
        %v1111 = vlaneseq
        %v1112 = vshrl.u32 %v1111, 7
        %v1113 = vsub.s32 1, %v1112
        %v1114 = vrot.slane %v1102, %v1113
        %vm1115 = vcmp.eq.s32.totalorder %v464, %v1110
        %vm1116 = vcmp.eq.s32.totalorder %v464, %v1114
        %vm1117 = vcmp.eq.s32.totalorder %v465, %v1110
        %vm1118 = vcmp.eq.s32.totalorder %v465, %v1114
        %v1120 = vlaneseq
        %v1121 = vshrl.u32 %v1120, 7
        %v1122 = vsub.s32 0, %v1121
        %v1123 = vrot.slane %v1094, %v1122
        %v1124 = vlaneseq
        %v1125 = vshrl.u32 %v1124, 7
        %v1126 = vsub.s32 1, %v1125
        %v1127 = vrot.slane %v1094, %v1126
        %v1130 = vsel %vm1115, %v1123, 0.0
        %v1131 = vsel %vm1116, %v1127, 0.0
        %v1132 = vsel %vm1117, %v1123, 0.0
        %v1133 = vsel %vm1118, %v1127, 0.0
        %v1134 = vlaneseq
        %v1135 = vshrl.u32 %v1134, 7
        %v1136 = vsub.s32 0, %v1135
        %v1137 = vrot.slane %v1106, %v1136
        %v1138 = vlaneseq
        %v1139 = vshrl.u32 %v1138, 7
        %v1140 = vsub.s32 1, %v1139
        %v1141 = vrot.slane %v1106, %v1140
        %vm1142 = vcmp.eq.s32.totalorder %v464, %v1137
        %vm1143 = vcmp.eq.s32.totalorder %v464, %v1141
        %vm1144 = vcmp.eq.s32.totalorder %v465, %v1137
        %vm1145 = vcmp.eq.s32.totalorder %v465, %v1141
        %v1147 = vlaneseq
        %v1148 = vshrl.u32 %v1147, 7
        %v1149 = vsub.s32 0, %v1148
        %v1150 = vrot.slane %v1098, %v1149
        %v1151 = vlaneseq
        %v1152 = vshrl.u32 %v1151, 7
        %v1153 = vsub.s32 1, %v1152
        %v1154 = vrot.slane %v1098, %v1153
        %v1157 = vsel %vm1142, %v1150, 0.0
        %v1158 = vsel %vm1143, %v1154, 0.0
        %v1159 = vsel %vm1144, %v1150, 0.0
        %v1160 = vsel %vm1145, %v1154, 0.0
        %v1161 = vadd.f32 %v1130, %v1157
        %v1162 = vadd.f32 %v1131, %v1158
        %v1163 = vadd.f32 %v1132, %v1159
        %v1164 = vadd.f32 %v1133, %v1160
        %v1169 = vcombine.low %v1087, %v1088
        %v1170 = vcombine.high %v1087, %v1088
        %v1172 = vunpack.c.l.s4 1966171168
        %v1173 = vunpack.c.0.s8 %v1172
        %v1174 = vlaneseq
        %v1175 = vshrl.u32 %v1174, 7
        %v1176 = vsub.s32 %v1173, %v1175
        %v1177 = vrot.slane %v1169, %v1176
        %v1179 = vunpack.c.l.s4 1966171168
        %v1180 = vunpack.c.0.s8 %v1179
        %v1181 = vlaneseq
        %v1182 = vshrl.u32 %v1181, 7
        %v1183 = vsub.s32 %v1180, %v1182
        %v1184 = vrot.slane %v1170, %v1183
        %v1185 = vcombine.high %v1177, %v1177
        %v1186 = vcombine.high %v1184, %v1184
        %v1188 = vunpack.c.l.s4 1966171168
        %v1189 = vunpack.c.0.s8 %v1188
        %v1190 = vlaneseq
        %v1191 = vshrl.u32 %v1190, 7
        %v1192 = vsub.s32 %v1189, %v1191
        %v1193 = vrot.slane %v1177, %v1192
        %v1195 = vunpack.c.l.s4 1966171168
        %v1196 = vunpack.c.0.s8 %v1195
        %v1197 = vlaneseq
        %v1198 = vshrl.u32 %v1197, 7
        %v1199 = vsub.s32 %v1196, %v1198
        %v1200 = vrot.slane %v1184, %v1199
        %v1202 = vunpack.c.l.s4 1966171168
        %v1203 = vunpack.c.0.s8 %v1202
        %v1204 = vlaneseq
        %v1205 = vshrl.u32 %v1204, 7
        %v1206 = vsub.s32 %v1203, %v1205
        %v1207 = vrot.slane %v1185, %v1206
        %v1209 = vunpack.c.l.s4 1966171168
        %v1210 = vunpack.c.0.s8 %v1209
        %v1211 = vlaneseq
        %v1212 = vshrl.u32 %v1211, 7
        %v1213 = vsub.s32 %v1210, %v1212
        %v1214 = vrot.slane %v1186, %v1213
        %v1215 = vcombine.high %v1193, %v1193
        %v1216 = vcombine.high %v1200, %v1200
        %v1217 = vcombine.high %v1207, %v1207
        %v1218 = vcombine.high %v1214, %v1214
        %v1219 = vcombine.low %v1089, %v1090
        %v1220 = vcombine.high %v1089, %v1090
        %v1222 = vunpack.c.l.s4 1966171168
        %v1223 = vunpack.c.0.s8 %v1222
        %v1224 = vlaneseq
        %v1225 = vshrl.u32 %v1224, 7
        %v1226 = vsub.s32 %v1223, %v1225
        %v1227 = vrot.slane %v1219, %v1226
        %v1229 = vunpack.c.l.s4 1966171168
        %v1230 = vunpack.c.0.s8 %v1229
        %v1231 = vlaneseq
        %v1232 = vshrl.u32 %v1231, 7
        %v1233 = vsub.s32 %v1230, %v1232
        %v1234 = vrot.slane %v1220, %v1233
        %v1235 = vcombine.high %v1227, %v1227
        %v1236 = vcombine.high %v1234, %v1234
        %v1238 = vunpack.c.l.s4 1966171168
        %v1239 = vunpack.c.0.s8 %v1238
        %v1240 = vlaneseq
        %v1241 = vshrl.u32 %v1240, 7
        %v1242 = vsub.s32 %v1239, %v1241
        %v1243 = vrot.slane %v1227, %v1242
        %v1245 = vunpack.c.l.s4 1966171168
        %v1246 = vunpack.c.0.s8 %v1245
        %v1247 = vlaneseq
        %v1248 = vshrl.u32 %v1247, 7
        %v1249 = vsub.s32 %v1246, %v1248
        %v1250 = vrot.slane %v1234, %v1249
        %v1252 = vunpack.c.l.s4 1966171168
        %v1253 = vunpack.c.0.s8 %v1252
        %v1254 = vlaneseq
        %v1255 = vshrl.u32 %v1254, 7
        %v1256 = vsub.s32 %v1253, %v1255
        %v1257 = vrot.slane %v1235, %v1256
        %v1259 = vunpack.c.l.s4 1966171168
        %v1260 = vunpack.c.0.s8 %v1259
        %v1261 = vlaneseq
        %v1262 = vshrl.u32 %v1261, 7
        %v1263 = vsub.s32 %v1260, %v1262
        %v1264 = vrot.slane %v1236, %v1263
        %v1265 = vcombine.high %v1243, %v1243
        %v1266 = vcombine.high %v1250, %v1250
        %v1267 = vcombine.high %v1257, %v1257
        %v1268 = vcombine.high %v1264, %v1264
        %v1269 = vlaneseq
        %v1270 = vshrl.u32 %v1269, 7
        %v1271 = vsub.s32 0, %v1270
        %v1272 = vrot.slane %v1193, %v1271
        %v1273 = vlaneseq
        %v1274 = vshrl.u32 %v1273, 7
        %v1275 = vsub.s32 1, %v1274
        %v1276 = vrot.slane %v1193, %v1275
        %v1277 = vlaneseq
        %v1278 = vshrl.u32 %v1277, 7
        %v1279 = vsub.s32 0, %v1278
        %v1280 = vrot.slane %v1207, %v1279
        %v1281 = vlaneseq
        %v1282 = vshrl.u32 %v1281, 7
        %v1283 = vsub.s32 1, %v1282
        %v1284 = vrot.slane %v1207, %v1283
        %v1285 = vlaneseq
        %v1286 = vshrl.u32 %v1285, 7
        %v1287 = vsub.s32 0, %v1286
        %v1288 = vrot.slane %v1215, %v1287
        %v1289 = vlaneseq
        %v1290 = vshrl.u32 %v1289, 7
        %v1291 = vsub.s32 1, %v1290
        %v1292 = vrot.slane %v1215, %v1291
        %v1293 = vlaneseq
        %v1294 = vshrl.u32 %v1293, 7
        %v1295 = vsub.s32 0, %v1294
        %v1296 = vrot.slane %v1217, %v1295
        %v1297 = vlaneseq
        %v1298 = vshrl.u32 %v1297, 7
        %v1299 = vsub.s32 1, %v1298
        %v1300 = vrot.slane %v1217, %v1299
        %v1301 = vlaneseq
        %v1302 = vshrl.u32 %v1301, 7
        %v1303 = vsub.s32 0, %v1302
        %v1304 = vrot.slane %v1200, %v1303
        %v1305 = vlaneseq
        %v1306 = vshrl.u32 %v1305, 7
        %v1307 = vsub.s32 1, %v1306
        %v1308 = vrot.slane %v1200, %v1307
        %v1309 = vlaneseq
        %v1310 = vshrl.u32 %v1309, 7
        %v1311 = vsub.s32 0, %v1310
        %v1312 = vrot.slane %v1214, %v1311
        %v1313 = vlaneseq
        %v1314 = vshrl.u32 %v1313, 7
        %v1315 = vsub.s32 1, %v1314
        %v1316 = vrot.slane %v1214, %v1315
        %v1317 = vlaneseq
        %v1318 = vshrl.u32 %v1317, 7
        %v1319 = vsub.s32 0, %v1318
        %v1320 = vrot.slane %v1216, %v1319
        %v1321 = vlaneseq
        %v1322 = vshrl.u32 %v1321, 7
        %v1323 = vsub.s32 1, %v1322
        %v1324 = vrot.slane %v1216, %v1323
        %v1325 = vlaneseq
        %v1326 = vshrl.u32 %v1325, 7
        %v1327 = vsub.s32 0, %v1326
        %v1328 = vrot.slane %v1218, %v1327
        %v1329 = vlaneseq
        %v1330 = vshrl.u32 %v1329, 7
        %v1331 = vsub.s32 1, %v1330
        %v1332 = vrot.slane %v1218, %v1331
        %v1333 = vlaneseq
        %v1334 = vshrl.u32 %v1333, 7
        %v1335 = vsub.s32 0, %v1334
        %v1336 = vrot.slane %v1243, %v1335
        %v1337 = vlaneseq
        %v1338 = vshrl.u32 %v1337, 7
        %v1339 = vsub.s32 1, %v1338
        %v1340 = vrot.slane %v1243, %v1339
        %v1341 = vlaneseq
        %v1342 = vshrl.u32 %v1341, 7
        %v1343 = vsub.s32 0, %v1342
        %v1344 = vrot.slane %v1257, %v1343
        %v1345 = vlaneseq
        %v1346 = vshrl.u32 %v1345, 7
        %v1347 = vsub.s32 1, %v1346
        %v1348 = vrot.slane %v1257, %v1347
        %v1349 = vlaneseq
        %v1350 = vshrl.u32 %v1349, 7
        %v1351 = vsub.s32 0, %v1350
        %v1352 = vrot.slane %v1265, %v1351
        %v1353 = vlaneseq
        %v1354 = vshrl.u32 %v1353, 7
        %v1355 = vsub.s32 1, %v1354
        %v1356 = vrot.slane %v1265, %v1355
        %v1357 = vlaneseq
        %v1358 = vshrl.u32 %v1357, 7
        %v1359 = vsub.s32 0, %v1358
        %v1360 = vrot.slane %v1267, %v1359
        %v1361 = vlaneseq
        %v1362 = vshrl.u32 %v1361, 7
        %v1363 = vsub.s32 1, %v1362
        %v1364 = vrot.slane %v1267, %v1363
        %v1365 = vlaneseq
        %v1366 = vshrl.u32 %v1365, 7
        %v1367 = vsub.s32 0, %v1366
        %v1368 = vrot.slane %v1250, %v1367
        %v1369 = vlaneseq
        %v1370 = vshrl.u32 %v1369, 7
        %v1371 = vsub.s32 1, %v1370
        %v1372 = vrot.slane %v1250, %v1371
        %v1373 = vlaneseq
        %v1374 = vshrl.u32 %v1373, 7
        %v1375 = vsub.s32 0, %v1374
        %v1376 = vrot.slane %v1264, %v1375
        %v1377 = vlaneseq
        %v1378 = vshrl.u32 %v1377, 7
        %v1379 = vsub.s32 1, %v1378
        %v1380 = vrot.slane %v1264, %v1379
        %v1381 = vlaneseq
        %v1382 = vshrl.u32 %v1381, 7
        %v1383 = vsub.s32 0, %v1382
        %v1384 = vrot.slane %v1266, %v1383
        %v1385 = vlaneseq
        %v1386 = vshrl.u32 %v1385, 7
        %v1387 = vsub.s32 1, %v1386
        %v1388 = vrot.slane %v1266, %v1387
        %v1389 = vlaneseq
        %v1390 = vshrl.u32 %v1389, 7
        %v1391 = vsub.s32 0, %v1390
        %v1392 = vrot.slane %v1268, %v1391
        %v1393 = vlaneseq
        %v1394 = vshrl.u32 %v1393, 7
        %v1395 = vsub.s32 1, %v1394
        %v1396 = vrot.slane %v1268, %v1395
        %v1429 = vmul.f32 %v1272, %v1161
        %v1430 = vmul.f32 %v1276, %v1162
        %v1431 = vmul.f32 %v1272, %v1163
        %v1432 = vmul.f32 %v1276, %v1164
        %v1433 = vmul.f32 %v1280, %v1161
        %v1434 = vmul.f32 %v1284, %v1162
        %v1435 = vmul.f32 %v1280, %v1163
        %v1436 = vmul.f32 %v1284, %v1164
        %v1437 = vmul.f32 %v1288, %v1161
        %v1438 = vmul.f32 %v1292, %v1162
        %v1439 = vmul.f32 %v1288, %v1163
        %v1440 = vmul.f32 %v1292, %v1164
        %v1441 = vmul.f32 %v1296, %v1161
        %v1442 = vmul.f32 %v1300, %v1162
        %v1443 = vmul.f32 %v1296, %v1163
        %v1444 = vmul.f32 %v1300, %v1164
        %v1445 = vmul.f32 %v1304, %v1161
        %v1446 = vmul.f32 %v1308, %v1162
        %v1447 = vmul.f32 %v1304, %v1163
        %v1448 = vmul.f32 %v1308, %v1164
        %v1449 = vmul.f32 %v1312, %v1161
        %v1450 = vmul.f32 %v1316, %v1162
        %v1451 = vmul.f32 %v1312, %v1163
        %v1452 = vmul.f32 %v1316, %v1164
        %v1453 = vmul.f32 %v1320, %v1161
        %v1454 = vmul.f32 %v1324, %v1162
        %v1455 = vmul.f32 %v1320, %v1163
        %v1456 = vmul.f32 %v1324, %v1164
        %v1457 = vmul.f32 %v1328, %v1161
        %v1458 = vmul.f32 %v1332, %v1162
        %v1459 = vmul.f32 %v1328, %v1163
        %v1460 = vmul.f32 %v1332, %v1164
        %v1461 = vmul.f32 %v1336, %v1161
        %v1462 = vmul.f32 %v1340, %v1162
        %v1463 = vmul.f32 %v1336, %v1163
        %v1464 = vmul.f32 %v1340, %v1164
        %v1465 = vmul.f32 %v1344, %v1161
        %v1466 = vmul.f32 %v1348, %v1162
        %v1467 = vmul.f32 %v1344, %v1163
        %v1468 = vmul.f32 %v1348, %v1164
        %v1469 = vmul.f32 %v1352, %v1161
        %v1470 = vmul.f32 %v1356, %v1162
        %v1471 = vmul.f32 %v1352, %v1163
        %v1472 = vmul.f32 %v1356, %v1164
        %v1473 = vmul.f32 %v1360, %v1161
        %v1474 = vmul.f32 %v1364, %v1162
        %v1475 = vmul.f32 %v1360, %v1163
        %v1476 = vmul.f32 %v1364, %v1164
        %v1477 = vmul.f32 %v1368, %v1161
        %v1478 = vmul.f32 %v1372, %v1162
        %v1479 = vmul.f32 %v1368, %v1163
        %v1480 = vmul.f32 %v1372, %v1164
        %v1481 = vmul.f32 %v1376, %v1161
        %v1482 = vmul.f32 %v1380, %v1162
        %v1483 = vmul.f32 %v1376, %v1163
        %v1484 = vmul.f32 %v1380, %v1164
        %v1485 = vmul.f32 %v1384, %v1161
        %v1486 = vmul.f32 %v1388, %v1162
        %v1487 = vmul.f32 %v1384, %v1163
        %v1488 = vmul.f32 %v1388, %v1164
        %v1489 = vmul.f32 %v1392, %v1161
        %v1490 = vmul.f32 %v1396, %v1162
        %v1491 = vmul.f32 %v1392, %v1163
        %v1492 = vmul.f32 %v1396, %v1164
        %v1493 = vpack.c.bf16 %v1431, %v1429
        %v1494 = vpack.c.bf16 %v1432, %v1430
        %v1495 = vpack.c.bf16 %v1435, %v1433
        %v1496 = vpack.c.bf16 %v1436, %v1434
        %v1497 = vpack.c.bf16 %v1439, %v1437
        %v1498 = vpack.c.bf16 %v1440, %v1438
        %v1499 = vpack.c.bf16 %v1443, %v1441
        %v1500 = vpack.c.bf16 %v1444, %v1442
        %v1501 = vpack.c.bf16 %v1447, %v1445
        %v1502 = vpack.c.bf16 %v1448, %v1446
        %v1503 = vpack.c.bf16 %v1451, %v1449
        %v1504 = vpack.c.bf16 %v1452, %v1450
        %v1505 = vpack.c.bf16 %v1455, %v1453
        %v1506 = vpack.c.bf16 %v1456, %v1454
        %v1507 = vpack.c.bf16 %v1459, %v1457
        %v1508 = vpack.c.bf16 %v1460, %v1458
        %v1509 = vpack.c.bf16 %v1463, %v1461
        %v1510 = vpack.c.bf16 %v1464, %v1462
        %v1511 = vpack.c.bf16 %v1467, %v1465
        %v1512 = vpack.c.bf16 %v1468, %v1466
        %v1513 = vpack.c.bf16 %v1471, %v1469
        %v1514 = vpack.c.bf16 %v1472, %v1470
        %v1515 = vpack.c.bf16 %v1475, %v1473
        %v1516 = vpack.c.bf16 %v1476, %v1474
        %v1517 = vpack.c.bf16 %v1479, %v1477
        %v1518 = vpack.c.bf16 %v1480, %v1478
        %v1519 = vpack.c.bf16 %v1483, %v1481
        %v1520 = vpack.c.bf16 %v1484, %v1482
        %v1521 = vpack.c.bf16 %v1487, %v1485
        %v1522 = vpack.c.bf16 %v1488, %v1486
        %v1523 = vpack.c.bf16 %v1491, %v1489
        %v1524 = vpack.c.bf16 %v1492, %v1490
        %s1525 = scalar_lea.vmem %s383, 8 [#allocation2]
        %v1526 = vld [vmem:[%s1525] ss:$2 sm:$0x3]
        %s1527 = scalar_lea.vmem %s1525, 1 [#allocation2]
        %v1528 = vld [vmem:[%s1527] ss:$2 sm:$0x3]
        %v1529 = vadd.f32 %v1526, 1.0
        %v1530 = vmul.f32 %v1529, 16.0
        %v1531 = vsub.f32 %v1530, 1.0
        %v1532 = vmul.f32 %v1531, 0.5
        %v1533 = vadd.f32 %v1528, 1.0
        %v1534 = vmul.f32 %v1533, 16.0
        %v1535 = vsub.f32 %v1534, 1.0
        %v1536 = vmul.f32 %v1535, 0.5
        %v1537 = vfloor.f32 %v1532
        %v1538 = vfloor.f32 %v1536
        %v1539 = vsub.f32 %v1532, %v1537
        %v1540 = vsub.f32 %v1536, %v1538
        %v1541 = vsub.f32 1.0, %v1539
        %v1542 = vsub.f32 1.0, %v1540
        %v1543 = vcvt.f32.s32.to.zero.pseudo %v1537
        %v1544 = vcvt.f32.s32.to.zero.pseudo %v1538
        %v1545 = vadd.s32 %v1543, 1
        %v1546 = vadd.s32 %v1544, 1
        %vm1547 = vcmp.ge.s32.totalorder %v1544, 0
        %vm1548 = vcmp.lt.s32.totalorder %v1544, 16
        %vm1549 = vmand %vm1547, %vm1548
        %v1550 = vsel %vm1549, %v1542, 0.0
        %vm1551 = vcmp.ge.s32.totalorder %v1546, 0
        %vm1552 = vcmp.lt.s32.totalorder %v1546, 16
        %vm1553 = vmand %vm1551, %vm1552
        %v1554 = vsel %vm1553, %v1540, 0.0
        %vm1555 = vcmp.gt.s32.totalorder %v1544, 0
        %v1556 = vsel %vm1555, %v1544, 0
        %vm1557 = vcmp.lt.s32.totalorder %v1556, 15
        %v1558 = vsel %vm1557, %v1556, 15
        %vm1559 = vcmp.gt.s32.totalorder %v1546, 0
        %v1560 = vsel %vm1559, %v1546, 0
        %vm1561 = vcmp.lt.s32.totalorder %v1560, 15
        %v1562 = vsel %vm1561, %v1560, 15
        %v1563 = vlaneseq
        %v1564 = vshrl.u32 %v1563, 7
        %v1565 = vsub.s32 0, %v1564
        %v1566 = vrot.slane %v1558, %v1565
        %v1567 = vlaneseq
        %v1568 = vshrl.u32 %v1567, 7
        %v1569 = vsub.s32 1, %v1568
        %v1570 = vrot.slane %v1558, %v1569
        %vm1571 = vcmp.eq.s32.totalorder %v464, %v1566
        %vm1572 = vcmp.eq.s32.totalorder %v464, %v1570
        %vm1573 = vcmp.eq.s32.totalorder %v465, %v1566
        %vm1574 = vcmp.eq.s32.totalorder %v465, %v1570
        %v1576 = vlaneseq
        %v1577 = vshrl.u32 %v1576, 7
        %v1578 = vsub.s32 0, %v1577
        %v1579 = vrot.slane %v1550, %v1578
        %v1580 = vlaneseq
        %v1581 = vshrl.u32 %v1580, 7
        %v1582 = vsub.s32 1, %v1581
        %v1583 = vrot.slane %v1550, %v1582
        %v1586 = vsel %vm1571, %v1579, 0.0
        %v1587 = vsel %vm1572, %v1583, 0.0
        %v1588 = vsel %vm1573, %v1579, 0.0
        %v1589 = vsel %vm1574, %v1583, 0.0
        %v1590 = vlaneseq
        %v1591 = vshrl.u32 %v1590, 7
        %v1592 = vsub.s32 0, %v1591
        %v1593 = vrot.slane %v1562, %v1592
        %v1594 = vlaneseq
        %v1595 = vshrl.u32 %v1594, 7
        %v1596 = vsub.s32 1, %v1595
        %v1597 = vrot.slane %v1562, %v1596
        %vm1598 = vcmp.eq.s32.totalorder %v464, %v1593
        %vm1599 = vcmp.eq.s32.totalorder %v464, %v1597
        %vm1600 = vcmp.eq.s32.totalorder %v465, %v1593
        %vm1601 = vcmp.eq.s32.totalorder %v465, %v1597
        %v1603 = vlaneseq
        %v1604 = vshrl.u32 %v1603, 7
        %v1605 = vsub.s32 0, %v1604
        %v1606 = vrot.slane %v1554, %v1605
        %v1607 = vlaneseq
        %v1608 = vshrl.u32 %v1607, 7
        %v1609 = vsub.s32 1, %v1608
        %v1610 = vrot.slane %v1554, %v1609
        %v1613 = vsel %vm1598, %v1606, 0.0
        %v1614 = vsel %vm1599, %v1610, 0.0
        %v1615 = vsel %vm1600, %v1606, 0.0
        %v1616 = vsel %vm1601, %v1610, 0.0
        %v1617 = vadd.f32 %v1586, %v1613
        %v1618 = vadd.f32 %v1587, %v1614
        %v1619 = vadd.f32 %v1588, %v1615
        %v1620 = vadd.f32 %v1589, %v1616
        %vm1621 = vcmp.ge.s32.totalorder %v1543, 0
        %vm1622 = vcmp.lt.s32.totalorder %v1543, 16
        %vm1623 = vmand %vm1621, %vm1622
        %v1624 = vsel %vm1623, %v1541, 0.0
        %vm1625 = vcmp.ge.s32.totalorder %v1545, 0
        %vm1626 = vcmp.lt.s32.totalorder %v1545, 16
        %vm1627 = vmand %vm1625, %vm1626
        %v1628 = vsel %vm1627, %v1539, 0.0
        %vm1629 = vcmp.gt.s32.totalorder %v1543, 0
        %v1630 = vsel %vm1629, %v1543, 0
        %vm1631 = vcmp.lt.s32.totalorder %v1630, 15
        %v1632 = vsel %vm1631, %v1630, 15
        %vm1633 = vcmp.gt.s32.totalorder %v1545, 0
        %v1634 = vsel %vm1633, %v1545, 0
        %vm1635 = vcmp.lt.s32.totalorder %v1634, 15
        %v1636 = vsel %vm1635, %v1634, 15
        %v1637 = vlaneseq
        %v1638 = vshrl.u32 %v1637, 7
        %v1639 = vsub.s32 0, %v1638
        %v1640 = vrot.slane %v1632, %v1639
        %v1641 = vlaneseq
        %v1642 = vshrl.u32 %v1641, 7
        %v1643 = vsub.s32 1, %v1642
        %v1644 = vrot.slane %v1632, %v1643
        %vm1645 = vcmp.eq.s32.totalorder %v464, %v1640
        %vm1646 = vcmp.eq.s32.totalorder %v464, %v1644
        %vm1647 = vcmp.eq.s32.totalorder %v465, %v1640
        %vm1648 = vcmp.eq.s32.totalorder %v465, %v1644
        %v1650 = vlaneseq
        %v1651 = vshrl.u32 %v1650, 7
        %v1652 = vsub.s32 0, %v1651
        %v1653 = vrot.slane %v1624, %v1652
        %v1654 = vlaneseq
        %v1655 = vshrl.u32 %v1654, 7
        %v1656 = vsub.s32 1, %v1655
        %v1657 = vrot.slane %v1624, %v1656
        %v1660 = vsel %vm1645, %v1653, 0.0
        %v1661 = vsel %vm1646, %v1657, 0.0
        %v1662 = vsel %vm1647, %v1653, 0.0
        %v1663 = vsel %vm1648, %v1657, 0.0
        %v1664 = vlaneseq
        %v1665 = vshrl.u32 %v1664, 7
        %v1666 = vsub.s32 0, %v1665
        %v1667 = vrot.slane %v1636, %v1666
        %v1668 = vlaneseq
        %v1669 = vshrl.u32 %v1668, 7
        %v1670 = vsub.s32 1, %v1669
        %v1671 = vrot.slane %v1636, %v1670
        %vm1672 = vcmp.eq.s32.totalorder %v464, %v1667
        %vm1673 = vcmp.eq.s32.totalorder %v464, %v1671
        %vm1674 = vcmp.eq.s32.totalorder %v465, %v1667
        %vm1675 = vcmp.eq.s32.totalorder %v465, %v1671
        %v1677 = vlaneseq
        %v1678 = vshrl.u32 %v1677, 7
        %v1679 = vsub.s32 0, %v1678
        %v1680 = vrot.slane %v1628, %v1679
        %v1681 = vlaneseq
        %v1682 = vshrl.u32 %v1681, 7
        %v1683 = vsub.s32 1, %v1682
        %v1684 = vrot.slane %v1628, %v1683
        %v1687 = vsel %vm1672, %v1680, 0.0
        %v1688 = vsel %vm1673, %v1684, 0.0
        %v1689 = vsel %vm1674, %v1680, 0.0
        %v1690 = vsel %vm1675, %v1684, 0.0
        %v1691 = vadd.f32 %v1660, %v1687
        %v1692 = vadd.f32 %v1661, %v1688
        %v1693 = vadd.f32 %v1662, %v1689
        %v1694 = vadd.f32 %v1663, %v1690
        %v1699 = vcombine.low %v1617, %v1618
        %v1700 = vcombine.high %v1617, %v1618
        %v1702 = vunpack.c.l.s4 1966171168
        %v1703 = vunpack.c.0.s8 %v1702
        %v1704 = vlaneseq
        %v1705 = vshrl.u32 %v1704, 7
        %v1706 = vsub.s32 %v1703, %v1705
        %v1707 = vrot.slane %v1699, %v1706
        %v1709 = vunpack.c.l.s4 1966171168
        %v1710 = vunpack.c.0.s8 %v1709
        %v1711 = vlaneseq
        %v1712 = vshrl.u32 %v1711, 7
        %v1713 = vsub.s32 %v1710, %v1712
        %v1714 = vrot.slane %v1700, %v1713
        %v1715 = vcombine.high %v1707, %v1707
        %v1716 = vcombine.high %v1714, %v1714
        %v1718 = vunpack.c.l.s4 1966171168
        %v1719 = vunpack.c.0.s8 %v1718
        %v1720 = vlaneseq
        %v1721 = vshrl.u32 %v1720, 7
        %v1722 = vsub.s32 %v1719, %v1721
        %v1723 = vrot.slane %v1707, %v1722
        %v1725 = vunpack.c.l.s4 1966171168
        %v1726 = vunpack.c.0.s8 %v1725
        %v1727 = vlaneseq
        %v1728 = vshrl.u32 %v1727, 7
        %v1729 = vsub.s32 %v1726, %v1728
        %v1730 = vrot.slane %v1714, %v1729
        %v1732 = vunpack.c.l.s4 1966171168
        %v1733 = vunpack.c.0.s8 %v1732
        %v1734 = vlaneseq
        %v1735 = vshrl.u32 %v1734, 7
        %v1736 = vsub.s32 %v1733, %v1735
        %v1737 = vrot.slane %v1715, %v1736
        %v1739 = vunpack.c.l.s4 1966171168
        %v1740 = vunpack.c.0.s8 %v1739
        %v1741 = vlaneseq
        %v1742 = vshrl.u32 %v1741, 7
        %v1743 = vsub.s32 %v1740, %v1742
        %v1744 = vrot.slane %v1716, %v1743
        %v1745 = vcombine.high %v1723, %v1723
        %v1746 = vcombine.high %v1730, %v1730
        %v1747 = vcombine.high %v1737, %v1737
        %v1748 = vcombine.high %v1744, %v1744
        %v1749 = vcombine.low %v1619, %v1620
        %v1750 = vcombine.high %v1619, %v1620
        %v1752 = vunpack.c.l.s4 1966171168
        %v1753 = vunpack.c.0.s8 %v1752
        %v1754 = vlaneseq
        %v1755 = vshrl.u32 %v1754, 7
        %v1756 = vsub.s32 %v1753, %v1755
        %v1757 = vrot.slane %v1749, %v1756
        %v1759 = vunpack.c.l.s4 1966171168
        %v1760 = vunpack.c.0.s8 %v1759
        %v1761 = vlaneseq
        %v1762 = vshrl.u32 %v1761, 7
        %v1763 = vsub.s32 %v1760, %v1762
        %v1764 = vrot.slane %v1750, %v1763
        %v1765 = vcombine.high %v1757, %v1757
        %v1766 = vcombine.high %v1764, %v1764
        %v1768 = vunpack.c.l.s4 1966171168
        %v1769 = vunpack.c.0.s8 %v1768
        %v1770 = vlaneseq
        %v1771 = vshrl.u32 %v1770, 7
        %v1772 = vsub.s32 %v1769, %v1771
        %v1773 = vrot.slane %v1757, %v1772
        %v1775 = vunpack.c.l.s4 1966171168
        %v1776 = vunpack.c.0.s8 %v1775
        %v1777 = vlaneseq
        %v1778 = vshrl.u32 %v1777, 7
        %v1779 = vsub.s32 %v1776, %v1778
        %v1780 = vrot.slane %v1764, %v1779
        %v1782 = vunpack.c.l.s4 1966171168
        %v1783 = vunpack.c.0.s8 %v1782
        %v1784 = vlaneseq
        %v1785 = vshrl.u32 %v1784, 7
        %v1786 = vsub.s32 %v1783, %v1785
        %v1787 = vrot.slane %v1765, %v1786
        %v1789 = vunpack.c.l.s4 1966171168
        %v1790 = vunpack.c.0.s8 %v1789
        %v1791 = vlaneseq
        %v1792 = vshrl.u32 %v1791, 7
        %v1793 = vsub.s32 %v1790, %v1792
        %v1794 = vrot.slane %v1766, %v1793
        %v1795 = vcombine.high %v1773, %v1773
        %v1796 = vcombine.high %v1780, %v1780
        %v1797 = vcombine.high %v1787, %v1787
        %v1798 = vcombine.high %v1794, %v1794
        %v1799 = vlaneseq
        %v1800 = vshrl.u32 %v1799, 7
        %v1801 = vsub.s32 0, %v1800
        %v1802 = vrot.slane %v1723, %v1801
        %v1803 = vlaneseq
        %v1804 = vshrl.u32 %v1803, 7
        %v1805 = vsub.s32 1, %v1804
        %v1806 = vrot.slane %v1723, %v1805
        %v1807 = vlaneseq
        %v1808 = vshrl.u32 %v1807, 7
        %v1809 = vsub.s32 0, %v1808
        %v1810 = vrot.slane %v1737, %v1809
        %v1811 = vlaneseq
        %v1812 = vshrl.u32 %v1811, 7
        %v1813 = vsub.s32 1, %v1812
        %v1814 = vrot.slane %v1737, %v1813
        %v1815 = vlaneseq
        %v1816 = vshrl.u32 %v1815, 7
        %v1817 = vsub.s32 0, %v1816
        %v1818 = vrot.slane %v1745, %v1817
        %v1819 = vlaneseq
        %v1820 = vshrl.u32 %v1819, 7
        %v1821 = vsub.s32 1, %v1820
        %v1822 = vrot.slane %v1745, %v1821
        %v1823 = vlaneseq
        %v1824 = vshrl.u32 %v1823, 7
        %v1825 = vsub.s32 0, %v1824
        %v1826 = vrot.slane %v1747, %v1825
        %v1827 = vlaneseq
        %v1828 = vshrl.u32 %v1827, 7
        %v1829 = vsub.s32 1, %v1828
        %v1830 = vrot.slane %v1747, %v1829
        %v1831 = vlaneseq
        %v1832 = vshrl.u32 %v1831, 7
        %v1833 = vsub.s32 0, %v1832
        %v1834 = vrot.slane %v1730, %v1833
        %v1835 = vlaneseq
        %v1836 = vshrl.u32 %v1835, 7
        %v1837 = vsub.s32 1, %v1836
        %v1838 = vrot.slane %v1730, %v1837
        %v1839 = vlaneseq
        %v1840 = vshrl.u32 %v1839, 7
        %v1841 = vsub.s32 0, %v1840
        %v1842 = vrot.slane %v1744, %v1841
        %v1843 = vlaneseq
        %v1844 = vshrl.u32 %v1843, 7
        %v1845 = vsub.s32 1, %v1844
        %v1846 = vrot.slane %v1744, %v1845
        %v1847 = vlaneseq
        %v1848 = vshrl.u32 %v1847, 7
        %v1849 = vsub.s32 0, %v1848
        %v1850 = vrot.slane %v1746, %v1849
        %v1851 = vlaneseq
        %v1852 = vshrl.u32 %v1851, 7
        %v1853 = vsub.s32 1, %v1852
        %v1854 = vrot.slane %v1746, %v1853
        %v1855 = vlaneseq
        %v1856 = vshrl.u32 %v1855, 7
        %v1857 = vsub.s32 0, %v1856
        %v1858 = vrot.slane %v1748, %v1857
        %v1859 = vlaneseq
        %v1860 = vshrl.u32 %v1859, 7
        %v1861 = vsub.s32 1, %v1860
        %v1862 = vrot.slane %v1748, %v1861
        %v1863 = vlaneseq
        %v1864 = vshrl.u32 %v1863, 7
        %v1865 = vsub.s32 0, %v1864
        %v1866 = vrot.slane %v1773, %v1865
        %v1867 = vlaneseq
        %v1868 = vshrl.u32 %v1867, 7
        %v1869 = vsub.s32 1, %v1868
        %v1870 = vrot.slane %v1773, %v1869
        %v1871 = vlaneseq
        %v1872 = vshrl.u32 %v1871, 7
        %v1873 = vsub.s32 0, %v1872
        %v1874 = vrot.slane %v1787, %v1873
        %v1875 = vlaneseq
        %v1876 = vshrl.u32 %v1875, 7
        %v1877 = vsub.s32 1, %v1876
        %v1878 = vrot.slane %v1787, %v1877
        %v1879 = vlaneseq
        %v1880 = vshrl.u32 %v1879, 7
        %v1881 = vsub.s32 0, %v1880
        %v1882 = vrot.slane %v1795, %v1881
        %v1883 = vlaneseq
        %v1884 = vshrl.u32 %v1883, 7
        %v1885 = vsub.s32 1, %v1884
        %v1886 = vrot.slane %v1795, %v1885
        %v1887 = vlaneseq
        %v1888 = vshrl.u32 %v1887, 7
        %v1889 = vsub.s32 0, %v1888
        %v1890 = vrot.slane %v1797, %v1889
        %v1891 = vlaneseq
        %v1892 = vshrl.u32 %v1891, 7
        %v1893 = vsub.s32 1, %v1892
        %v1894 = vrot.slane %v1797, %v1893
        %v1895 = vlaneseq
        %v1896 = vshrl.u32 %v1895, 7
        %v1897 = vsub.s32 0, %v1896
        %v1898 = vrot.slane %v1780, %v1897
        %v1899 = vlaneseq
        %v1900 = vshrl.u32 %v1899, 7
        %v1901 = vsub.s32 1, %v1900
        %v1902 = vrot.slane %v1780, %v1901
        %v1903 = vlaneseq
        %v1904 = vshrl.u32 %v1903, 7
        %v1905 = vsub.s32 0, %v1904
        %v1906 = vrot.slane %v1794, %v1905
        %v1907 = vlaneseq
        %v1908 = vshrl.u32 %v1907, 7
        %v1909 = vsub.s32 1, %v1908
        %v1910 = vrot.slane %v1794, %v1909
        %v1911 = vlaneseq
        %v1912 = vshrl.u32 %v1911, 7
        %v1913 = vsub.s32 0, %v1912
        %v1914 = vrot.slane %v1796, %v1913
        %v1915 = vlaneseq
        %v1916 = vshrl.u32 %v1915, 7
        %v1917 = vsub.s32 1, %v1916
        %v1918 = vrot.slane %v1796, %v1917
        %v1919 = vlaneseq
        %v1920 = vshrl.u32 %v1919, 7
        %v1921 = vsub.s32 0, %v1920
        %v1922 = vrot.slane %v1798, %v1921
        %v1923 = vlaneseq
        %v1924 = vshrl.u32 %v1923, 7
        %v1925 = vsub.s32 1, %v1924
        %v1926 = vrot.slane %v1798, %v1925
        %v1959 = vmul.f32 %v1802, %v1691
        %v1960 = vmul.f32 %v1806, %v1692
        %v1961 = vmul.f32 %v1802, %v1693
        %v1962 = vmul.f32 %v1806, %v1694
        %v1963 = vmul.f32 %v1810, %v1691
        %v1964 = vmul.f32 %v1814, %v1692
        %v1965 = vmul.f32 %v1810, %v1693
        %v1966 = vmul.f32 %v1814, %v1694
        %v1967 = vmul.f32 %v1818, %v1691
        %v1968 = vmul.f32 %v1822, %v1692
        %v1969 = vmul.f32 %v1818, %v1693
        %v1970 = vmul.f32 %v1822, %v1694
        %v1971 = vmul.f32 %v1826, %v1691
        %v1972 = vmul.f32 %v1830, %v1692
        %v1973 = vmul.f32 %v1826, %v1693
        %v1974 = vmul.f32 %v1830, %v1694
        %v1975 = vmul.f32 %v1834, %v1691
        %v1976 = vmul.f32 %v1838, %v1692
        %v1977 = vmul.f32 %v1834, %v1693
        %v1978 = vmul.f32 %v1838, %v1694
        %v1979 = vmul.f32 %v1842, %v1691
        %v1980 = vmul.f32 %v1846, %v1692
        %v1981 = vmul.f32 %v1842, %v1693
        %v1982 = vmul.f32 %v1846, %v1694
        %v1983 = vmul.f32 %v1850, %v1691
        %v1984 = vmul.f32 %v1854, %v1692
        %v1985 = vmul.f32 %v1850, %v1693
        %v1986 = vmul.f32 %v1854, %v1694
        %v1987 = vmul.f32 %v1858, %v1691
        %v1988 = vmul.f32 %v1862, %v1692
        %v1989 = vmul.f32 %v1858, %v1693
        %v1990 = vmul.f32 %v1862, %v1694
        %v1991 = vmul.f32 %v1866, %v1691
        %v1992 = vmul.f32 %v1870, %v1692
        %v1993 = vmul.f32 %v1866, %v1693
        %v1994 = vmul.f32 %v1870, %v1694
        %v1995 = vmul.f32 %v1874, %v1691
        %v1996 = vmul.f32 %v1878, %v1692
        %v1997 = vmul.f32 %v1874, %v1693
        %v1998 = vmul.f32 %v1878, %v1694
        %v1999 = vmul.f32 %v1882, %v1691
        %v2000 = vmul.f32 %v1886, %v1692
        %v2001 = vmul.f32 %v1882, %v1693
        %v2002 = vmul.f32 %v1886, %v1694
        %v2003 = vmul.f32 %v1890, %v1691
        %v2004 = vmul.f32 %v1894, %v1692
        %v2005 = vmul.f32 %v1890, %v1693
        %v2006 = vmul.f32 %v1894, %v1694
        %v2007 = vmul.f32 %v1898, %v1691
        %v2008 = vmul.f32 %v1902, %v1692
        %v2009 = vmul.f32 %v1898, %v1693
        %v2010 = vmul.f32 %v1902, %v1694
        %v2011 = vmul.f32 %v1906, %v1691
        %v2012 = vmul.f32 %v1910, %v1692
        %v2013 = vmul.f32 %v1906, %v1693
        %v2014 = vmul.f32 %v1910, %v1694
        %v2015 = vmul.f32 %v1914, %v1691
        %v2016 = vmul.f32 %v1918, %v1692
        %v2017 = vmul.f32 %v1914, %v1693
        %v2018 = vmul.f32 %v1918, %v1694
        %v2019 = vmul.f32 %v1922, %v1691
        %v2020 = vmul.f32 %v1926, %v1692
        %v2021 = vmul.f32 %v1922, %v1693
        %v2022 = vmul.f32 %v1926, %v1694
        %v2023 = vpack.c.bf16 %v1961, %v1959
        %v2024 = vpack.c.bf16 %v1962, %v1960
        %v2025 = vpack.c.bf16 %v1965, %v1963
        %v2026 = vpack.c.bf16 %v1966, %v1964
        %v2027 = vpack.c.bf16 %v1969, %v1967
        %v2028 = vpack.c.bf16 %v1970, %v1968
        %v2029 = vpack.c.bf16 %v1973, %v1971
        %v2030 = vpack.c.bf16 %v1974, %v1972
        %v2031 = vpack.c.bf16 %v1977, %v1975
        %v2032 = vpack.c.bf16 %v1978, %v1976
        %v2033 = vpack.c.bf16 %v1981, %v1979
        %v2034 = vpack.c.bf16 %v1982, %v1980
        %v2035 = vpack.c.bf16 %v1985, %v1983
        %v2036 = vpack.c.bf16 %v1986, %v1984
        %v2037 = vpack.c.bf16 %v1989, %v1987
        %v2038 = vpack.c.bf16 %v1990, %v1988
        %v2039 = vpack.c.bf16 %v1993, %v1991
        %v2040 = vpack.c.bf16 %v1994, %v1992
        %v2041 = vpack.c.bf16 %v1997, %v1995
        %v2042 = vpack.c.bf16 %v1998, %v1996
        %v2043 = vpack.c.bf16 %v2001, %v1999
        %v2044 = vpack.c.bf16 %v2002, %v2000
        %v2045 = vpack.c.bf16 %v2005, %v2003
        %v2046 = vpack.c.bf16 %v2006, %v2004
        %v2047 = vpack.c.bf16 %v2009, %v2007
        %v2048 = vpack.c.bf16 %v2010, %v2008
        %v2049 = vpack.c.bf16 %v2013, %v2011
        %v2050 = vpack.c.bf16 %v2014, %v2012
        %v2051 = vpack.c.bf16 %v2017, %v2015
        %v2052 = vpack.c.bf16 %v2018, %v2016
        %v2053 = vpack.c.bf16 %v2021, %v2019
        %v2054 = vpack.c.bf16 %v2022, %v2020
        %v2055 = vld [vmem:[%s449] sm:$0xff]
        %v2056 = vld [vmem:[%s449 + $0x8] sm:$0xff]
        %v2057 = vld [vmem:[%s449 + $0x10] sm:$0xff]
        %v2058 = vld [vmem:[%s449 + $0x18] sm:$0xff]
        %v2059 = vld [vmem:[%s449 + $0x20] sm:$0xff]
        %v2060 = vld [vmem:[%s449 + $0x28] sm:$0xff]
        %v2061 = vld [vmem:[%s449 + $0x30] sm:$0xff]
        %v2062 = vld [vmem:[%s449 + $0x38] sm:$0xff]
        %v2063 = vld [vmem:[%s449 + $0x40] sm:$0xff]
        %v2064 = vld [vmem:[%s449 + $0x48] sm:$0xff]
        %v2065 = vld [vmem:[%s449 + $0x50] sm:$0xff]
        %v2066 = vld [vmem:[%s449 + $0x58] sm:$0xff]
        %v2079 = vunpack.c.l.b16 %v2055
        %v2080 = vunpack.c.h.b16 %v2055
        %v2081 = vunpack.c.l.b16 %v2056
        %v2082 = vunpack.c.h.b16 %v2056
        %v2083 = vunpack.c.l.b16 %v2057
        %v2084 = vunpack.c.h.b16 %v2057
        %v2085 = vunpack.c.l.b16 %v2058
        %v2086 = vunpack.c.h.b16 %v2058
        %v2087 = vunpack.c.l.b16 %v2059
        %v2088 = vunpack.c.h.b16 %v2059
        %v2089 = vunpack.c.l.b16 %v2060
        %v2090 = vunpack.c.h.b16 %v2060
        %v2091 = vunpack.c.l.b16 %v2061
        %v2092 = vunpack.c.h.b16 %v2061
        %v2093 = vunpack.c.l.b16 %v2062
        %v2094 = vunpack.c.h.b16 %v2062
        %v2095 = vunpack.c.l.b16 %v2063
        %v2096 = vunpack.c.h.b16 %v2063
        %v2097 = vunpack.c.l.b16 %v2064
        %v2098 = vunpack.c.h.b16 %v2064
        %v2099 = vunpack.c.l.b16 %v2065
        %v2100 = vunpack.c.h.b16 %v2065
        %v2101 = vunpack.c.l.b16 %v2066
        %v2102 = vunpack.c.h.b16 %v2066
        %v2103 = vpack.c.b16 %v2085, %v2079
        %v2104 = vpack.c.b16 %v2086, %v2080
        %v2105 = vpack.c.b16 %v2087, %v2081
        %v2106 = vpack.c.b16 %v2088, %v2082
        %v2107 = vpack.c.b16 %v2089, %v2083
        %v2108 = vpack.c.b16 %v2090, %v2084
        %v2109 = vpack.c.b16 %v2097, %v2091
        %v2110 = vpack.c.b16 %v2098, %v2092
        %v2111 = vpack.c.b16 %v2099, %v2093
        %v2112 = vpack.c.b16 %v2100, %v2094
        %v2113 = vpack.c.b16 %v2101, %v2095
        %v2114 = vpack.c.b16 %v2102, %v2096
        %2127 = vmatprep.subr.bf16.mxu0 %v978
        %2128 = vmatpush1.bf16.msra.mxu0 %v977
        %2129 = vmatprep.subr.bf16.mxu0 %v976
        %2130 = vmatpush1.bf16.msra.mxu0 %v975
        %2131 = vmatprep.subr.bf16.mxu0 %v974
        %2132 = vmatpush1.bf16.msra.mxu0 %v973
        %2133 = vmatprep.subr.bf16.mxu0 %v972
        %2134 = vmatpush1.bf16.msra.mxu0 %v971
        %2135 = vmatprep.subr.bf16.mxu0 %v970
        %2136 = vmatpush1.bf16.msra.mxu0 %v969
        %2137 = vmatprep.subr.bf16.mxu0 %v968
        %2138 = vmatpush1.bf16.msra.mxu0 %v967
        %2139 = vmatprep.subr.bf16.mxu0 %v966
        %2140 = vmatpush1.bf16.msra.mxu0 %v965
        %2141 = vmatprep.subr.bf16.mxu0 %v964
        %2142 = vmatpush1.bf16.msra.mxu0 %v963
        %2143 = vmatprep.subr.bf16.mxu0 %v994
        %2144 = vmatpush2.bf16.msra.mxu0 %v993
        %2145 = vmatprep.subr.bf16.mxu0 %v992
        %2146 = vmatpush2.bf16.msra.mxu0 %v991
        %2147 = vmatprep.subr.bf16.mxu0 %v990
        %2148 = vmatpush2.bf16.msra.mxu0 %v989
        %2149 = vmatprep.subr.bf16.mxu0 %v988
        %2150 = vmatpush2.bf16.msra.mxu0 %v987
        %2151 = vmatprep.subr.bf16.mxu0 %v986
        %2152 = vmatpush2.bf16.msra.mxu0 %v985
        %2153 = vmatprep.subr.bf16.mxu0 %v984
        %2154 = vmatpush2.bf16.msra.mxu0 %v983
        %2155 = vmatprep.subr.bf16.mxu0 %v982
        %2156 = vmatpush2.bf16.msra.mxu0 %v981
        %2157 = vmatprep.subr.bf16.mxu0 %v980
        %2158 = vmatpush2.bf16.msra.mxu0 %v979
        %2159 = vmatprep.mubr.bf16.mxu0 %v2104
        %2160 = vmatmul.mubr.bf16.gmra.mxu0 %v2103
        %v2161 = vpop.f32.mrf.mxu0
        %v2162 = vadd.f32 0.0, %v2161
        %v2163 = vpop.f32.mrf.mxu0
        %v2164 = vadd.f32 0.0, %v2163
        %v2165 = vpop.f32.mrf.mxu0
        %v2166 = vadd.f32 0.0, %v2165
        %v2167 = vpop.f32.mrf.mxu0
        %v2168 = vadd.f32 0.0, %v2167
        %2169 = vmatprep.mubr.bf16.mxu0 %v2110
        %2170 = vmatmul.mubr.bf16.gmra.mxu0 %v2109
        %v2171 = vpop.f32.mrf.mxu0
        %v2172 = vadd.f32 0.0, %v2171
        %v2173 = vpop.f32.mrf.mxu0
        %v2174 = vadd.f32 0.0, %v2173
        %v2175 = vpop.f32.mrf.mxu0
        %v2176 = vadd.f32 0.0, %v2175
        %v2177 = vpop.f32.mrf.mxu0
        %v2178 = vadd.f32 0.0, %v2177
        %2179 = vdwg.mxu0
        %2180 = vmatprep.subr.bf16.mxu0 %v1508
        %2181 = vmatpush1.bf16.msra.mxu0 %v1507
        %2182 = vmatprep.subr.bf16.mxu0 %v1506
        %2183 = vmatpush1.bf16.msra.mxu0 %v1505
        %2184 = vmatprep.subr.bf16.mxu0 %v1504
        %2185 = vmatpush1.bf16.msra.mxu0 %v1503
        %2186 = vmatprep.subr.bf16.mxu0 %v1502
        %2187 = vmatpush1.bf16.msra.mxu0 %v1501
        %2188 = vmatprep.subr.bf16.mxu0 %v1500
        %2189 = vmatpush1.bf16.msra.mxu0 %v1499
        %2190 = vmatprep.subr.bf16.mxu0 %v1498
        %2191 = vmatpush1.bf16.msra.mxu0 %v1497
        %2192 = vmatprep.subr.bf16.mxu0 %v1496
        %2193 = vmatpush1.bf16.msra.mxu0 %v1495
        %2194 = vmatprep.subr.bf16.mxu0 %v1494
        %2195 = vmatpush1.bf16.msra.mxu0 %v1493
        %2196 = vmatprep.subr.bf16.mxu0 %v1524
        %2197 = vmatpush2.bf16.msra.mxu0 %v1523
        %2198 = vmatprep.subr.bf16.mxu0 %v1522
        %2199 = vmatpush2.bf16.msra.mxu0 %v1521
        %2200 = vmatprep.subr.bf16.mxu0 %v1520
        %2201 = vmatpush2.bf16.msra.mxu0 %v1519
        %2202 = vmatprep.subr.bf16.mxu0 %v1518
        %2203 = vmatpush2.bf16.msra.mxu0 %v1517
        %2204 = vmatprep.subr.bf16.mxu0 %v1516
        %2205 = vmatpush2.bf16.msra.mxu0 %v1515
        %2206 = vmatprep.subr.bf16.mxu0 %v1514
        %2207 = vmatpush2.bf16.msra.mxu0 %v1513
        %2208 = vmatprep.subr.bf16.mxu0 %v1512
        %2209 = vmatpush2.bf16.msra.mxu0 %v1511
        %2210 = vmatprep.subr.bf16.mxu0 %v1510
        %2211 = vmatpush2.bf16.msra.mxu0 %v1509
        %2212 = vmatprep.mubr.bf16.mxu0 %v2106
        %2213 = vmatmul.mubr.bf16.gmra.mxu0 %v2105
        %v2214 = vpop.f32.mrf.mxu0
        %v2215 = vadd.f32 %v2162, %v2214
        %v2216 = vpop.f32.mrf.mxu0
        %v2217 = vadd.f32 %v2164, %v2216
        %v2218 = vpop.f32.mrf.mxu0
        %v2219 = vadd.f32 %v2166, %v2218
        %v2220 = vpop.f32.mrf.mxu0
        %v2221 = vadd.f32 %v2168, %v2220
        %2222 = vmatprep.mubr.bf16.mxu0 %v2112
        %2223 = vmatmul.mubr.bf16.gmra.mxu0 %v2111
        %v2224 = vpop.f32.mrf.mxu0
        %v2225 = vadd.f32 %v2172, %v2224
        %v2226 = vpop.f32.mrf.mxu0
        %v2227 = vadd.f32 %v2174, %v2226
        %v2228 = vpop.f32.mrf.mxu0
        %v2229 = vadd.f32 %v2176, %v2228
        %v2230 = vpop.f32.mrf.mxu0
        %v2231 = vadd.f32 %v2178, %v2230
        %2232 = vdwg.mxu0
        %2233 = vmatprep.subr.bf16.mxu0 %v2038
        %2234 = vmatpush1.bf16.msra.mxu0 %v2037
        %2235 = vmatprep.subr.bf16.mxu0 %v2036
        %2236 = vmatpush1.bf16.msra.mxu0 %v2035
        %2237 = vmatprep.subr.bf16.mxu0 %v2034
        %2238 = vmatpush1.bf16.msra.mxu0 %v2033
        %2239 = vmatprep.subr.bf16.mxu0 %v2032
        %2240 = vmatpush1.bf16.msra.mxu0 %v2031
        %2241 = vmatprep.subr.bf16.mxu0 %v2030
        %2242 = vmatpush1.bf16.msra.mxu0 %v2029
        %2243 = vmatprep.subr.bf16.mxu0 %v2028
        %2244 = vmatpush1.bf16.msra.mxu0 %v2027
        %2245 = vmatprep.subr.bf16.mxu0 %v2026
        %2246 = vmatpush1.bf16.msra.mxu0 %v2025
        %2247 = vmatprep.subr.bf16.mxu0 %v2024
        %2248 = vmatpush1.bf16.msra.mxu0 %v2023
        %2249 = vmatprep.subr.bf16.mxu0 %v2054
        %2250 = vmatpush2.bf16.msra.mxu0 %v2053
        %2251 = vmatprep.subr.bf16.mxu0 %v2052
        %2252 = vmatpush2.bf16.msra.mxu0 %v2051
        %2253 = vmatprep.subr.bf16.mxu0 %v2050
        %2254 = vmatpush2.bf16.msra.mxu0 %v2049
        %2255 = vmatprep.subr.bf16.mxu0 %v2048
        %2256 = vmatpush2.bf16.msra.mxu0 %v2047
        %2257 = vmatprep.subr.bf16.mxu0 %v2046
        %2258 = vmatpush2.bf16.msra.mxu0 %v2045
        %2259 = vmatprep.subr.bf16.mxu0 %v2044
        %2260 = vmatpush2.bf16.msra.mxu0 %v2043
        %2261 = vmatprep.subr.bf16.mxu0 %v2042
        %2262 = vmatpush2.bf16.msra.mxu0 %v2041
        %2263 = vmatprep.subr.bf16.mxu0 %v2040
        %2264 = vmatpush2.bf16.msra.mxu0 %v2039
        %2265 = vmatprep.mubr.bf16.mxu0 %v2108
        %2266 = vmatmul.mubr.bf16.gmra.mxu0 %v2107
        %v2267 = vpop.f32.mrf.mxu0
        %v2268 = vadd.f32 %v2215, %v2267
        %v2269 = vpop.f32.mrf.mxu0
        %v2270 = vadd.f32 %v2217, %v2269
        %v2271 = vpop.f32.mrf.mxu0
        %v2272 = vadd.f32 %v2219, %v2271
        %v2273 = vpop.f32.mrf.mxu0
        %v2274 = vadd.f32 %v2221, %v2273
        %2275 = vmatprep.mubr.bf16.mxu0 %v2114
        %2276 = vmatmul.mubr.bf16.gmra.mxu0 %v2113
        %v2277 = vpop.f32.mrf.mxu0
        %v2278 = vadd.f32 %v2225, %v2277
        %v2279 = vpop.f32.mrf.mxu0
        %v2280 = vadd.f32 %v2227, %v2279
        %v2281 = vpop.f32.mrf.mxu0
        %v2282 = vadd.f32 %v2229, %v2281
        %v2283 = vpop.f32.mrf.mxu0
        %v2284 = vadd.f32 %v2231, %v2283
        %2285 = vdwg.mxu0
        %v2286 = vmul.f32 %v2268, 0.33333334
        %v2287 = vmul.f32 %v2270, 0.33333334
        %v2288 = vmul.f32 %v2272, 0.33333334
        %v2289 = vmul.f32 %v2274, 0.33333334
        %v2290 = vmul.f32 %v2278, 0.33333334
        %v2291 = vmul.f32 %v2280, 0.33333334
        %v2292 = vmul.f32 %v2282, 0.33333334
        %v2293 = vmul.f32 %v2284, 0.33333334
        %v2294 = vld [vmem:[%s3] sm:$0xff]
        %v2295 = vld [vmem:[%s3 + $0x8] sm:$0xff]
        %v2296 = vld [vmem:[%s3 + $0x10] sm:$0xff]
        %v2297 = vld [vmem:[%s3 + $0x18] sm:$0xff]
        %v2298 = vld [vmem:[%s3 + $0x20] sm:$0xff]
        %v2299 = vld [vmem:[%s3 + $0x28] sm:$0xff]
        %v2300 = vld [vmem:[%s3 + $0x30] sm:$0xff]
        %v2301 = vld [vmem:[%s3 + $0x38] sm:$0xff]
        %v2302 = vld [vmem:[%s4] sm:$0xff]
        %v2303 = vld [vmem:[%s4 + $0x8] sm:$0xff]
        %v2304 = vld [vmem:[%s4 + $0x10] sm:$0xff]
        %v2305 = vld [vmem:[%s4 + $0x18] sm:$0xff]
        %v2306 = vld [vmem:[%s4 + $0x20] sm:$0xff]
        %v2307 = vld [vmem:[%s4 + $0x28] sm:$0xff]
        %v2308 = vld [vmem:[%s4 + $0x30] sm:$0xff]
        %v2309 = vld [vmem:[%s4 + $0x38] sm:$0xff]
        %2311 = vset.pattern.permute.xlu0 0
        %2312 = vperm.xlu0 %2311, %v2302
        %v2313 = vpop.permute.xlu0 %2312
        %2316 = vset.pattern.permute.xlu0 0
        %2317 = vperm.xlu0 %2316, %v2303
        %v2318 = vpop.permute.xlu0 %2317
        %2321 = vset.pattern.permute.xlu0 0
        %2322 = vperm.xlu0 %2321, %v2304
        %v2323 = vpop.permute.xlu0 %2322
        %2326 = vset.pattern.permute.xlu0 0
        %2327 = vperm.xlu0 %2326, %v2305
        %v2328 = vpop.permute.xlu0 %2327
        %2331 = vset.pattern.permute.xlu0 0
        %2332 = vperm.xlu0 %2331, %v2306
        %v2333 = vpop.permute.xlu0 %2332
        %2336 = vset.pattern.permute.xlu0 0
        %2337 = vperm.xlu0 %2336, %v2307
        %v2338 = vpop.permute.xlu0 %2337
        %2341 = vset.pattern.permute.xlu0 0
        %2342 = vperm.xlu0 %2341, %v2308
        %v2343 = vpop.permute.xlu0 %2342
        %2346 = vset.pattern.permute.xlu0 0
        %2347 = vperm.xlu0 %2346, %v2309
        %v2348 = vpop.permute.xlu0 %2347
        %vm2350 = vcmask 261120
        %v2352 = vsel %vm2350, %v2294, 0
        %v2355 = vsel %vm2350, %v2295, 0
        %v2358 = vsel %vm2350, %v2296, 0
        %v2361 = vsel %vm2350, %v2297, 0
        %v2364 = vsel %vm2350, %v2298, 0
        %v2367 = vsel %vm2350, %v2299, 0
        %v2370 = vsel %vm2350, %v2300, 0
        %v2373 = vsel %vm2350, %v2301, 0
        %2375 = vmatprep.subr.mxu0 0.0
        %2376 = vmatpush1.msra.mxu0 0.0
        %2377 = vmatprep.subr.mxu0 0.0
        %2378 = vmatpush1.msra.mxu0 0.0
        %2379 = vmatprep.subr.mxu0 0.0
        %2380 = vmatpush1.msra.mxu0 0.0
        %2381 = vmatprep.subr.mxu0 0.0
        %2382 = vmatpush1.msra.mxu0 0.0
        %2383 = vmatprep.subr.mxu0 0.0
        %2384 = vmatpush1.msra.mxu0 0.0
        %2385 = vmatprep.subr.mxu0 0.0
        %2386 = vmatpush1.msra.mxu0 0.0
        %2387 = vmatprep.subr.mxu0 0.0
        %2388 = vmatpush1.msra.mxu0 0.0
        %2389 = vmatprep.subr.mxu0 0.0
        %2390 = vmatpush1.msra.mxu0 0.0
        %2391 = vmatprep.subr.mxu0 0.0
        %2392 = vmatpush1.msra.mxu0 0.0
        %2393 = vmatprep.subr.mxu0 0.0
        %2394 = vmatpush1.msra.mxu0 0.0
        %2395 = vmatprep.subr.mxu0 0.0
        %2396 = vmatpush1.msra.mxu0 0.0
        %2397 = vmatprep.subr.mxu0 0.0
        %2398 = vmatpush1.msra.mxu0 0.0
        %2399 = vmatprep.subr.mxu0 %v2293
        %2400 = vmatpush1.msra.mxu0 %v2292
        %2401 = vmatprep.subr.mxu0 %v2291
        %2402 = vmatpush1.msra.mxu0 %v2290
        %2403 = vmatprep.subr.mxu0 %v2289
        %2404 = vmatpush1.msra.mxu0 %v2288
        %2405 = vmatprep.subr.mxu0 %v2287
        %2406 = vmatpush1.msra.mxu0 %v2286
        %2407 = vmatprep.subr.mxu0 0.0
        %2408 = vmatpush2.msra.mxu0 0.0
        %2409 = vmatprep.subr.mxu0 0.0
        %2410 = vmatpush2.msra.mxu0 0.0
        %2411 = vmatprep.subr.mxu0 0.0
        %2412 = vmatpush2.msra.mxu0 0.0
        %2413 = vmatprep.subr.mxu0 0.0
        %2414 = vmatpush2.msra.mxu0 0.0
        %2415 = vmatprep.subr.mxu0 0.0
        %2416 = vmatpush2.msra.mxu0 0.0
        %2417 = vmatprep.subr.mxu0 0.0
        %2418 = vmatpush2.msra.mxu0 0.0
        %2419 = vmatprep.subr.mxu0 0.0
        %2420 = vmatpush2.msra.mxu0 0.0
        %2421 = vmatprep.subr.mxu0 0.0
        %2422 = vmatpush2.msra.mxu0 0.0
        %2423 = vmatprep.subr.mxu0 0.0
        %2424 = vmatpush2.msra.mxu0 0.0
        %2425 = vmatprep.subr.mxu0 0.0
        %2426 = vmatpush2.msra.mxu0 0.0
        %2427 = vmatprep.subr.mxu0 0.0
        %2428 = vmatpush2.msra.mxu0 0.0
        %2429 = vmatprep.subr.mxu0 0.0
        %2430 = vmatpush2.msra.mxu0 0.0
        %2431 = vmatprep.subr.mxu0 0.0
        %2432 = vmatpush2.msra.mxu0 0.0
        %2433 = vmatprep.subr.mxu0 0.0
        %2434 = vmatpush2.msra.mxu0 0.0
        %2435 = vmatprep.subr.mxu0 0.0
        %2436 = vmatpush2.msra.mxu0 0.0
        %2437 = vmatprep.subr.mxu0 0.0
        %2438 = vmatpush2.msra.mxu0 0.0
        %2439 = vmatprep.mubr.f32.mxu0 0.0
        %2440 = vmatmul.mubr.f32.gmra.mxu0 %v2352
        %v2441 = vpop.f32.mrf.mxu0
        %v2442 = vadd.f32 %v2313, %v2441
        %v2443 = vpop.f32.mrf.mxu0
        %v2444 = vadd.f32 %v2313, %v2443
        %2445 = vmatprep.mubr.f32.mxu0 0.0
        %2446 = vmatmul.mubr.f32.gmra.mxu0 %v2355
        %v2447 = vpop.f32.mrf.mxu0
        %v2448 = vadd.f32 %v2318, %v2447
        %v2449 = vpop.f32.mrf.mxu0
        %v2450 = vadd.f32 %v2318, %v2449
        %2451 = vmatprep.mubr.f32.mxu0 0.0
        %2452 = vmatmul.mubr.f32.gmra.mxu0 %v2358
        %v2453 = vpop.f32.mrf.mxu0
        %v2454 = vadd.f32 %v2323, %v2453
        %v2455 = vpop.f32.mrf.mxu0
        %v2456 = vadd.f32 %v2323, %v2455
        %2457 = vmatprep.mubr.f32.mxu0 0.0
        %2458 = vmatmul.mubr.f32.gmra.mxu0 %v2361
        %v2459 = vpop.f32.mrf.mxu0
        %v2460 = vadd.f32 %v2328, %v2459
        %v2461 = vpop.f32.mrf.mxu0
        %v2462 = vadd.f32 %v2328, %v2461
        %2463 = vmatprep.mubr.f32.mxu0 0.0
        %2464 = vmatmul.mubr.f32.gmra.mxu0 %v2364
        %v2465 = vpop.f32.mrf.mxu0
        %v2466 = vadd.f32 %v2333, %v2465
        %v2467 = vpop.f32.mrf.mxu0
        %v2468 = vadd.f32 %v2333, %v2467
        %2469 = vmatprep.mubr.f32.mxu0 0.0
        %2470 = vmatmul.mubr.f32.gmra.mxu0 %v2367
        %v2471 = vpop.f32.mrf.mxu0
        %v2472 = vadd.f32 %v2338, %v2471
        %v2473 = vpop.f32.mrf.mxu0
        %v2474 = vadd.f32 %v2338, %v2473
        %2475 = vmatprep.mubr.f32.mxu0 0.0
        %2476 = vmatmul.mubr.f32.gmra.mxu0 %v2370
        %v2477 = vpop.f32.mrf.mxu0
        %v2478 = vadd.f32 %v2343, %v2477
        %v2479 = vpop.f32.mrf.mxu0
        %v2480 = vadd.f32 %v2343, %v2479
        %2481 = vmatprep.mubr.f32.mxu0 0.0
        %2482 = vmatmul.mubr.f32.gmra.mxu0 %v2373
        %v2483 = vpop.f32.mrf.mxu0
        %v2484 = vadd.f32 %v2348, %v2483
        %v2485 = vpop.f32.mrf.mxu0
        %v2486 = vadd.f32 %v2348, %v2485
        %2487 = vdwg.mxu0
        %v2488 = vmax.f32 %v2442, 0.0
        %v2489 = vmax.f32 %v2444, 0.0
        %v2490 = vmax.f32 %v2448, 0.0
        %v2491 = vmax.f32 %v2450, 0.0
        %v2492 = vmax.f32 %v2454, 0.0
        %v2493 = vmax.f32 %v2456, 0.0
        %v2494 = vmax.f32 %v2460, 0.0
        %v2495 = vmax.f32 %v2462, 0.0
        %v2496 = vmax.f32 %v2466, 0.0
        %v2497 = vmax.f32 %v2468, 0.0
        %v2498 = vmax.f32 %v2472, 0.0
        %v2499 = vmax.f32 %v2474, 0.0
        %v2500 = vmax.f32 %v2478, 0.0
        %v2501 = vmax.f32 %v2480, 0.0
        %v2502 = vmax.f32 %v2484, 0.0
        %v2503 = vmax.f32 %v2486, 0.0
        %vm2504 = vcmp.ne.f32.partialorder %v2442, %v2442
        %vm2505 = vcmp.ne.f32.partialorder %v2444, %v2444
        %vm2506 = vcmp.ne.f32.partialorder %v2448, %v2448
        %vm2507 = vcmp.ne.f32.partialorder %v2450, %v2450
        %vm2508 = vcmp.ne.f32.partialorder %v2454, %v2454
        %vm2509 = vcmp.ne.f32.partialorder %v2456, %v2456
        %vm2510 = vcmp.ne.f32.partialorder %v2460, %v2460
        %vm2511 = vcmp.ne.f32.partialorder %v2462, %v2462
        %vm2512 = vcmp.ne.f32.partialorder %v2466, %v2466
        %vm2513 = vcmp.ne.f32.partialorder %v2468, %v2468
        %vm2514 = vcmp.ne.f32.partialorder %v2472, %v2472
        %vm2515 = vcmp.ne.f32.partialorder %v2474, %v2474
        %vm2516 = vcmp.ne.f32.partialorder %v2478, %v2478
        %vm2517 = vcmp.ne.f32.partialorder %v2480, %v2480
        %vm2518 = vcmp.ne.f32.partialorder %v2484, %v2484
        %vm2519 = vcmp.ne.f32.partialorder %v2486, %v2486
        %v2520 = vadd.f32 %v2442, 0.0
        %v2521 = vadd.f32 %v2444, 0.0
        %v2522 = vadd.f32 %v2448, 0.0
        %v2523 = vadd.f32 %v2450, 0.0
        %v2524 = vadd.f32 %v2454, 0.0
        %v2525 = vadd.f32 %v2456, 0.0
        %v2526 = vadd.f32 %v2460, 0.0
        %v2527 = vadd.f32 %v2462, 0.0
        %v2528 = vadd.f32 %v2466, 0.0
        %v2529 = vadd.f32 %v2468, 0.0
        %v2530 = vadd.f32 %v2472, 0.0
        %v2531 = vadd.f32 %v2474, 0.0
        %v2532 = vadd.f32 %v2478, 0.0
        %v2533 = vadd.f32 %v2480, 0.0
        %v2534 = vadd.f32 %v2484, 0.0
        %v2535 = vadd.f32 %v2486, 0.0
        %v2536 = vand.u32 2147483647, %v2442
        %v2537 = vand.u32 2147483647, %v2444
        %v2538 = vand.u32 2147483647, %v2448
        %v2539 = vand.u32 2147483647, %v2450
        %v2540 = vand.u32 2147483647, %v2454
        %v2541 = vand.u32 2147483647, %v2456
        %v2542 = vand.u32 2147483647, %v2460
        %v2543 = vand.u32 2147483647, %v2462
        %v2544 = vand.u32 2147483647, %v2466
        %v2545 = vand.u32 2147483647, %v2468
        %v2546 = vand.u32 2147483647, %v2472
        %v2547 = vand.u32 2147483647, %v2474
        %v2548 = vand.u32 2147483647, %v2478
        %v2549 = vand.u32 2147483647, %v2480
        %v2550 = vand.u32 2147483647, %v2484
        %v2551 = vand.u32 2147483647, %v2486
        %v2552 = vsub.f32 0.0, %v2536
        %v2553 = vsub.f32 0.0, %v2537
        %v2554 = vsub.f32 0.0, %v2538
        %v2555 = vsub.f32 0.0, %v2539
        %v2556 = vsub.f32 0.0, %v2540
        %v2557 = vsub.f32 0.0, %v2541
        %v2558 = vsub.f32 0.0, %v2542
        %v2559 = vsub.f32 0.0, %v2543
        %v2560 = vsub.f32 0.0, %v2544
        %v2561 = vsub.f32 0.0, %v2545
        %v2562 = vsub.f32 0.0, %v2546
        %v2563 = vsub.f32 0.0, %v2547
        %v2564 = vsub.f32 0.0, %v2548
        %v2565 = vsub.f32 0.0, %v2549
        %v2566 = vsub.f32 0.0, %v2550
        %v2567 = vsub.f32 0.0, %v2551
        %v2568 = vmul.f32 %v2552, 1.442695
        %v2569 = vpow.pop %v2568
        %v2570 = vmul.f32 %v2553, 1.442695
        %v2571 = vpow.pop %v2570
        %v2572 = vmul.f32 %v2554, 1.442695
        %v2573 = vpow.pop %v2572
        %v2574 = vmul.f32 %v2555, 1.442695
        %v2575 = vpow.pop %v2574
        %v2576 = vmul.f32 %v2556, 1.442695
        %v2577 = vpow.pop %v2576
        %v2578 = vmul.f32 %v2557, 1.442695
        %v2579 = vpow.pop %v2578
        %v2580 = vmul.f32 %v2558, 1.442695
        %v2581 = vpow.pop %v2580
        %v2582 = vmul.f32 %v2559, 1.442695
        %v2583 = vpow.pop %v2582
        %v2584 = vmul.f32 %v2560, 1.442695
        %v2585 = vpow.pop %v2584
        %v2586 = vmul.f32 %v2561, 1.442695
        %v2587 = vpow.pop %v2586
        %v2588 = vmul.f32 %v2562, 1.442695
        %v2589 = vpow.pop %v2588
        %v2590 = vmul.f32 %v2563, 1.442695
        %v2591 = vpow.pop %v2590
        %v2592 = vmul.f32 %v2564, 1.442695
        %v2593 = vpow.pop %v2592
        %v2594 = vmul.f32 %v2565, 1.442695
        %v2595 = vpow.pop %v2594
        %v2596 = vmul.f32 %v2566, 1.442695
        %v2597 = vpow.pop %v2596
        %v2598 = vmul.f32 %v2567, 1.442695
        %v2599 = vpow.pop %v2598
        %v2600 = vadd.f32 %v2569, 1.0
        %v2601 = vlog2.pop %v2600
        %v2602 = vmul.f32 %v2601, 0.6931472
        %v2603 = vmul.f32 -0.5, %v2569
        %v2604 = vadd.f32 %v2603, 1.0
        %v2605 = vmul.f32 %v2604, %v2569
        %v2606 = vand.u32 2147483647, %v2569
        %vm2607 = vcmp.lt.f32.partialorder %v2606, 0.0004427343
        %v2608 = vsel %vm2607, %v2605, %v2602
        %v2609 = vadd.f32 %v2571, 1.0
        %v2610 = vlog2.pop %v2609
        %v2611 = vmul.f32 %v2610, 0.6931472
        %v2612 = vmul.f32 -0.5, %v2571
        %v2613 = vadd.f32 %v2612, 1.0
        %v2614 = vmul.f32 %v2613, %v2571
        %v2615 = vand.u32 2147483647, %v2571
        %vm2616 = vcmp.lt.f32.partialorder %v2615, 0.0004427343
        %v2617 = vsel %vm2616, %v2614, %v2611
        %v2618 = vadd.f32 %v2573, 1.0
        %v2619 = vlog2.pop %v2618
        %v2620 = vmul.f32 %v2619, 0.6931472
        %v2621 = vmul.f32 -0.5, %v2573
        %v2622 = vadd.f32 %v2621, 1.0
        %v2623 = vmul.f32 %v2622, %v2573
        %v2624 = vand.u32 2147483647, %v2573
        %vm2625 = vcmp.lt.f32.partialorder %v2624, 0.0004427343
        %v2626 = vsel %vm2625, %v2623, %v2620
        %v2627 = vadd.f32 %v2575, 1.0
        %v2628 = vlog2.pop %v2627
        %v2629 = vmul.f32 %v2628, 0.6931472
        %v2630 = vmul.f32 -0.5, %v2575
        %v2631 = vadd.f32 %v2630, 1.0
        %v2632 = vmul.f32 %v2631, %v2575
        %v2633 = vand.u32 2147483647, %v2575
        %vm2634 = vcmp.lt.f32.partialorder %v2633, 0.0004427343
        %v2635 = vsel %vm2634, %v2632, %v2629
        %v2636 = vadd.f32 %v2577, 1.0
        %v2637 = vlog2.pop %v2636
        %v2638 = vmul.f32 %v2637, 0.6931472
        %v2639 = vmul.f32 -0.5, %v2577
        %v2640 = vadd.f32 %v2639, 1.0
        %v2641 = vmul.f32 %v2640, %v2577
        %v2642 = vand.u32 2147483647, %v2577
        %vm2643 = vcmp.lt.f32.partialorder %v2642, 0.0004427343
        %v2644 = vsel %vm2643, %v2641, %v2638
        %v2645 = vadd.f32 %v2579, 1.0
        %v2646 = vlog2.pop %v2645
        %v2647 = vmul.f32 %v2646, 0.6931472
        %v2648 = vmul.f32 -0.5, %v2579
        %v2649 = vadd.f32 %v2648, 1.0
        %v2650 = vmul.f32 %v2649, %v2579
        %v2651 = vand.u32 2147483647, %v2579
        %vm2652 = vcmp.lt.f32.partialorder %v2651, 0.0004427343
        %v2653 = vsel %vm2652, %v2650, %v2647
        %v2654 = vadd.f32 %v2581, 1.0
        %v2655 = vlog2.pop %v2654
        %v2656 = vmul.f32 %v2655, 0.6931472
        %v2657 = vmul.f32 -0.5, %v2581
        %v2658 = vadd.f32 %v2657, 1.0
        %v2659 = vmul.f32 %v2658, %v2581
        %v2660 = vand.u32 2147483647, %v2581
        %vm2661 = vcmp.lt.f32.partialorder %v2660, 0.0004427343
        %v2662 = vsel %vm2661, %v2659, %v2656
        %v2663 = vadd.f32 %v2583, 1.0
        %v2664 = vlog2.pop %v2663
        %v2665 = vmul.f32 %v2664, 0.6931472
        %v2666 = vmul.f32 -0.5, %v2583
        %v2667 = vadd.f32 %v2666, 1.0
        %v2668 = vmul.f32 %v2667, %v2583
        %v2669 = vand.u32 2147483647, %v2583
        %vm2670 = vcmp.lt.f32.partialorder %v2669, 0.0004427343
        %v2671 = vsel %vm2670, %v2668, %v2665
        %v2672 = vadd.f32 %v2585, 1.0
        %v2673 = vlog2.pop %v2672
        %v2674 = vmul.f32 %v2673, 0.6931472
        %v2675 = vmul.f32 -0.5, %v2585
        %v2676 = vadd.f32 %v2675, 1.0
        %v2677 = vmul.f32 %v2676, %v2585
        %v2678 = vand.u32 2147483647, %v2585
        %vm2679 = vcmp.lt.f32.partialorder %v2678, 0.0004427343
        %v2680 = vsel %vm2679, %v2677, %v2674
        %v2681 = vadd.f32 %v2587, 1.0
        %v2682 = vlog2.pop %v2681
        %v2683 = vmul.f32 %v2682, 0.6931472
        %v2684 = vmul.f32 -0.5, %v2587
        %v2685 = vadd.f32 %v2684, 1.0
        %v2686 = vmul.f32 %v2685, %v2587
        %v2687 = vand.u32 2147483647, %v2587
        %vm2688 = vcmp.lt.f32.partialorder %v2687, 0.0004427343
        %v2689 = vsel %vm2688, %v2686, %v2683
        %v2690 = vadd.f32 %v2589, 1.0
        %v2691 = vlog2.pop %v2690
        %v2692 = vmul.f32 %v2691, 0.6931472
        %v2693 = vmul.f32 -0.5, %v2589
        %v2694 = vadd.f32 %v2693, 1.0
        %v2695 = vmul.f32 %v2694, %v2589
        %v2696 = vand.u32 2147483647, %v2589
        %vm2697 = vcmp.lt.f32.partialorder %v2696, 0.0004427343
        %v2698 = vsel %vm2697, %v2695, %v2692
        %v2699 = vadd.f32 %v2591, 1.0
        %v2700 = vlog2.pop %v2699
        %v2701 = vmul.f32 %v2700, 0.6931472
        %v2702 = vmul.f32 -0.5, %v2591
        %v2703 = vadd.f32 %v2702, 1.0
        %v2704 = vmul.f32 %v2703, %v2591
        %v2705 = vand.u32 2147483647, %v2591
        %vm2706 = vcmp.lt.f32.partialorder %v2705, 0.0004427343
        %v2707 = vsel %vm2706, %v2704, %v2701
        %v2708 = vadd.f32 %v2593, 1.0
        %v2709 = vlog2.pop %v2708
        %v2710 = vmul.f32 %v2709, 0.6931472
        %v2711 = vmul.f32 -0.5, %v2593
        %v2712 = vadd.f32 %v2711, 1.0
        %v2713 = vmul.f32 %v2712, %v2593
        %v2714 = vand.u32 2147483647, %v2593
        %vm2715 = vcmp.lt.f32.partialorder %v2714, 0.0004427343
        %v2716 = vsel %vm2715, %v2713, %v2710
        %v2717 = vadd.f32 %v2595, 1.0
        %v2718 = vlog2.pop %v2717
        %v2719 = vmul.f32 %v2718, 0.6931472
        %v2720 = vmul.f32 -0.5, %v2595
        %v2721 = vadd.f32 %v2720, 1.0
        %v2722 = vmul.f32 %v2721, %v2595
        %v2723 = vand.u32 2147483647, %v2595
        %vm2724 = vcmp.lt.f32.partialorder %v2723, 0.0004427343
        %v2725 = vsel %vm2724, %v2722, %v2719
        %v2726 = vadd.f32 %v2597, 1.0
        %v2727 = vlog2.pop %v2726
        %v2728 = vmul.f32 %v2727, 0.6931472
        %v2729 = vmul.f32 -0.5, %v2597
        %v2730 = vadd.f32 %v2729, 1.0
        %v2731 = vmul.f32 %v2730, %v2597
        %v2732 = vand.u32 2147483647, %v2597
        %vm2733 = vcmp.lt.f32.partialorder %v2732, 0.0004427343
        %v2734 = vsel %vm2733, %v2731, %v2728
        %v2735 = vadd.f32 %v2599, 1.0
        %v2736 = vlog2.pop %v2735
        %v2737 = vmul.f32 %v2736, 0.6931472
        %v2738 = vmul.f32 -0.5, %v2599
        %v2739 = vadd.f32 %v2738, 1.0
        %v2740 = vmul.f32 %v2739, %v2599
        %v2741 = vand.u32 2147483647, %v2599
        %vm2742 = vcmp.lt.f32.partialorder %v2741, 0.0004427343
        %v2743 = vsel %vm2742, %v2740, %v2737
        %v2744 = vadd.f32 %v2488, %v2608
        %v2745 = vadd.f32 %v2489, %v2617
        %v2746 = vadd.f32 %v2490, %v2626
        %v2747 = vadd.f32 %v2491, %v2635
        %v2748 = vadd.f32 %v2492, %v2644
        %v2749 = vadd.f32 %v2493, %v2653
        %v2750 = vadd.f32 %v2494, %v2662
        %v2751 = vadd.f32 %v2495, %v2671
        %v2752 = vadd.f32 %v2496, %v2680
        %v2753 = vadd.f32 %v2497, %v2689
        %v2754 = vadd.f32 %v2498, %v2698
        %v2755 = vadd.f32 %v2499, %v2707
        %v2756 = vadd.f32 %v2500, %v2716
        %v2757 = vadd.f32 %v2501, %v2725
        %v2758 = vadd.f32 %v2502, %v2734
        %v2759 = vadd.f32 %v2503, %v2743
        %v2760 = vsel %vm2504, %v2520, %v2744
        %v2761 = vsel %vm2505, %v2521, %v2745
        %v2762 = vsel %vm2506, %v2522, %v2746
        %v2763 = vsel %vm2507, %v2523, %v2747
        %v2764 = vsel %vm2508, %v2524, %v2748
        %v2765 = vsel %vm2509, %v2525, %v2749
        %v2766 = vsel %vm2510, %v2526, %v2750
        %v2767 = vsel %vm2511, %v2527, %v2751
        %v2768 = vsel %vm2512, %v2528, %v2752
        %v2769 = vsel %vm2513, %v2529, %v2753
        %v2770 = vsel %vm2514, %v2530, %v2754
        %v2771 = vsel %vm2515, %v2531, %v2755
        %v2772 = vsel %vm2516, %v2532, %v2756
        %v2773 = vsel %vm2517, %v2533, %v2757
        %v2774 = vsel %vm2518, %v2534, %v2758
        %v2775 = vsel %vm2519, %v2535, %v2759
        %v2776 = vld [vmem:[#allocation5] sm:$0xff]
        %v2777 = vld [vmem:[#allocation5 + $0x8] sm:$0xff]
        %v2778 = vld [vmem:[#allocation5 + $0x10] sm:$0xff]
        %v2779 = vld [vmem:[#allocation5 + $0x18] sm:$0xff]
        %v2780 = vld [vmem:[#allocation5 + $0x20] sm:$0x1]
        %v2781 = vld [vmem:[%s6] sm:$0xff]
        %v2782 = vld [vmem:[%s6 + $0x8] sm:$0xff]
        %v2783 = vld [vmem:[%s6 + $0x10] sm:$0xff]
        %v2784 = vld [vmem:[%s6 + $0x18] sm:$0xff]
        %v2785 = vld [vmem:[%s6 + $0x20] sm:$0x1]
        %2787 = vset.pattern.permute.xlu0 0
        %2788 = vperm.xlu0 %2787, %v2781
        %v2789 = vpop.permute.xlu0 %2788
        %2792 = vset.pattern.permute.xlu0 0
        %2793 = vperm.xlu0 %2792, %v2782
        %v2794 = vpop.permute.xlu0 %2793
        %2797 = vset.pattern.permute.xlu0 0
        %2798 = vperm.xlu0 %2797, %v2783
        %v2799 = vpop.permute.xlu0 %2798
        %2802 = vset.pattern.permute.xlu0 0
        %2803 = vperm.xlu0 %2802, %v2784
        %v2804 = vpop.permute.xlu0 %2803
        %2807 = vset.pattern.permute.xlu0 0
        %2808 = vperm.xlu0 %2807, %v2785
        %v2809 = vpop.permute.xlu0 %2808
        %vm2811 = vcmask 523264
        %v2813 = vsel %vm2811, %v2776, 0
        %v2816 = vsel %vm2811, %v2777, 0
        %v2819 = vsel %vm2811, %v2778, 0
        %v2822 = vsel %vm2811, %v2779, 0
        %v2825 = vsel %vm2811, %v2780, 0
        %2827 = vmatprep.subr.mxu0 0.0
        %2828 = vmatpush1.msra.mxu0 0.0
        %2829 = vmatprep.subr.mxu0 0.0
        %2830 = vmatpush1.msra.mxu0 0.0
        %2831 = vmatprep.subr.mxu0 0.0
        %2832 = vmatpush1.msra.mxu0 0.0
        %2833 = vmatprep.subr.mxu0 0.0
        %2834 = vmatpush1.msra.mxu0 0.0
        %2835 = vmatprep.subr.mxu0 0.0
        %2836 = vmatpush1.msra.mxu0 0.0
        %2837 = vmatprep.subr.mxu0 0.0
        %2838 = vmatpush1.msra.mxu0 0.0
        %2839 = vmatprep.subr.mxu0 0.0
        %2840 = vmatpush1.msra.mxu0 0.0
        %2841 = vmatprep.subr.mxu0 0.0
        %2842 = vmatpush1.msra.mxu0 0.0
        %2843 = vmatprep.subr.mxu0 %v2775
        %2844 = vmatpush1.msra.mxu0 %v2774
        %2845 = vmatprep.subr.mxu0 %v2773
        %2846 = vmatpush1.msra.mxu0 %v2772
        %2847 = vmatprep.subr.mxu0 %v2771
        %2848 = vmatpush1.msra.mxu0 %v2770
        %2849 = vmatprep.subr.mxu0 %v2769
        %2850 = vmatpush1.msra.mxu0 %v2768
        %2851 = vmatprep.subr.mxu0 %v2767
        %2852 = vmatpush1.msra.mxu0 %v2766
        %2853 = vmatprep.subr.mxu0 %v2765
        %2854 = vmatpush1.msra.mxu0 %v2764
        %2855 = vmatprep.subr.mxu0 %v2763
        %2856 = vmatpush1.msra.mxu0 %v2762
        %2857 = vmatprep.subr.mxu0 %v2761
        %2858 = vmatpush1.msra.mxu0 %v2760
        %2859 = vmatprep.subr.mxu0 0.0
        %2860 = vmatpush2.msra.mxu0 0.0
        %2861 = vmatprep.subr.mxu0 0.0
        %2862 = vmatpush2.msra.mxu0 0.0
        %2863 = vmatprep.subr.mxu0 0.0
        %2864 = vmatpush2.msra.mxu0 0.0
        %2865 = vmatprep.subr.mxu0 0.0
        %2866 = vmatpush2.msra.mxu0 0.0
        %2867 = vmatprep.subr.mxu0 0.0
        %2868 = vmatpush2.msra.mxu0 0.0
        %2869 = vmatprep.subr.mxu0 0.0
        %2870 = vmatpush2.msra.mxu0 0.0
        %2871 = vmatprep.subr.mxu0 0.0
        %2872 = vmatpush2.msra.mxu0 0.0
        %2873 = vmatprep.subr.mxu0 0.0
        %2874 = vmatpush2.msra.mxu0 0.0
        %2875 = vmatprep.subr.mxu0 0.0
        %2876 = vmatpush2.msra.mxu0 0.0
        %2877 = vmatprep.subr.mxu0 0.0
        %2878 = vmatpush2.msra.mxu0 0.0
        %2879 = vmatprep.subr.mxu0 0.0
        %2880 = vmatpush2.msra.mxu0 0.0
        %2881 = vmatprep.subr.mxu0 0.0
        %2882 = vmatpush2.msra.mxu0 0.0
        %2883 = vmatprep.subr.mxu0 0.0
        %2884 = vmatpush2.msra.mxu0 0.0
        %2885 = vmatprep.subr.mxu0 0.0
        %2886 = vmatpush2.msra.mxu0 0.0
        %2887 = vmatprep.subr.mxu0 0.0
        %2888 = vmatpush2.msra.mxu0 0.0
        %2889 = vmatprep.subr.mxu0 0.0
        %2890 = vmatpush2.msra.mxu0 0.0
        %2891 = vmatprep.mubr.f32.mxu0 0.0
        %2892 = vmatmul.mubr.f32.gmra.mxu0 %v2813
        %v2893 = vpop.f32.mrf.mxu0
        %v2894 = vadd.f32 %v2789, %v2893
        %v2895 = vpop.f32.mrf.mxu0
        %v2896 = vadd.f32 %v2789, %v2895
        %2897 = vmatprep.mubr.f32.mxu0 0.0
        %2898 = vmatmul.mubr.f32.gmra.mxu0 %v2816
        %v2899 = vpop.f32.mrf.mxu0
        %v2900 = vadd.f32 %v2794, %v2899
        %v2901 = vpop.f32.mrf.mxu0
        %v2902 = vadd.f32 %v2794, %v2901
        %2903 = vmatprep.mubr.f32.mxu0 0.0
        %2904 = vmatmul.mubr.f32.gmra.mxu0 %v2819
        %v2905 = vpop.f32.mrf.mxu0
        %v2906 = vadd.f32 %v2799, %v2905
        %v2907 = vpop.f32.mrf.mxu0
        %v2908 = vadd.f32 %v2799, %v2907
        %2909 = vmatprep.mubr.f32.mxu0 0.0
        %2910 = vmatmul.mubr.f32.gmra.mxu0 %v2822
        %v2911 = vpop.f32.mrf.mxu0
        %v2912 = vadd.f32 %v2804, %v2911
        %v2913 = vpop.f32.mrf.mxu0
        %v2914 = vadd.f32 %v2804, %v2913
        %2915 = vmatprep.mubr.f32.mxu0 0.0
        %2916 = vmatmul.mubr.f32.gmra.mxu0 %v2825
        %v2917 = vpop.f32.mrf.mxu0
        %v2918 = vadd.f32 %v2809, %v2917
        %v2919 = vpop.f32.mrf.mxu0
        %v2920 = vadd.f32 %v2809, %v2919
        %2921 = vdwg.mxu0
        %v2922 = vxor.u32 %v2894, 2147483648
        %v2923 = vxor.u32 %v2896, 2147483648
        %v2924 = vxor.u32 %v2900, 2147483648
        %v2925 = vxor.u32 %v2902, 2147483648
        %v2926 = vxor.u32 %v2906, 2147483648
        %v2927 = vxor.u32 %v2908, 2147483648
        %v2928 = vxor.u32 %v2912, 2147483648
        %v2929 = vxor.u32 %v2914, 2147483648
        %v2930 = vmul.f32 %v2922, 1.442695
        %v2931 = vpow.pop %v2930
        %v2932 = vmul.f32 %v2923, 1.442695
        %v2933 = vpow.pop %v2932
        %v2934 = vmul.f32 %v2924, 1.442695
        %v2935 = vpow.pop %v2934
        %v2936 = vmul.f32 %v2925, 1.442695
        %v2937 = vpow.pop %v2936
        %v2938 = vmul.f32 %v2926, 1.442695
        %v2939 = vpow.pop %v2938
        %v2940 = vmul.f32 %v2927, 1.442695
        %v2941 = vpow.pop %v2940
        %v2942 = vmul.f32 %v2928, 1.442695
        %v2943 = vpow.pop %v2942
        %v2944 = vmul.f32 %v2929, 1.442695
        %v2945 = vpow.pop %v2944
        %v2946 = vadd.f32 %v2931, 1.0
        %v2947 = vadd.f32 %v2933, 1.0
        %v2948 = vadd.f32 %v2935, 1.0
        %v2949 = vadd.f32 %v2937, 1.0
        %v2950 = vadd.f32 %v2939, 1.0
        %v2951 = vadd.f32 %v2941, 1.0
        %v2952 = vadd.f32 %v2943, 1.0
        %v2953 = vadd.f32 %v2945, 1.0
        %v2954 = vrcp.pop %v2946
        %v2955 = vmul.f32 1.0, %v2954
        %v2956 = vrcp.pop %v2947
        %v2957 = vmul.f32 1.0, %v2956
        %v2958 = vrcp.pop %v2948
        %v2959 = vmul.f32 1.0, %v2958
        %v2960 = vrcp.pop %v2949
        %v2961 = vmul.f32 1.0, %v2960
        %v2962 = vrcp.pop %v2950
        %v2963 = vmul.f32 1.0, %v2962
        %v2964 = vrcp.pop %v2951
        %v2965 = vmul.f32 1.0, %v2964
        %v2966 = vrcp.pop %v2952
        %v2967 = vmul.f32 1.0, %v2966
        %v2968 = vrcp.pop %v2953
        %v2969 = vmul.f32 1.0, %v2968
        %v2970 = vmul.f32 %v2955, 1.002
        %v2971 = vmul.f32 %v2957, 1.002
        %v2972 = vmul.f32 %v2959, 1.002
        %v2973 = vmul.f32 %v2961, 1.002
        %v2974 = vmul.f32 %v2963, 1.002
        %v2975 = vmul.f32 %v2965, 1.002
        %v2976 = vmul.f32 %v2967, 1.002
        %v2977 = vmul.f32 %v2969, 1.002
        %v2978 = vsub.f32 %v2970, 0.001
        %v2979 = vsub.f32 %v2971, 0.001
        %v2980 = vsub.f32 %v2972, 0.001
        %v2981 = vsub.f32 %v2973, 0.001
        %v2982 = vsub.f32 %v2974, 0.001
        %v2983 = vsub.f32 %v2975, 0.001
        %v2984 = vsub.f32 %v2976, 0.001
        %v2985 = vsub.f32 %v2977, 0.001
        %v2986 = vld [vmem:[%s458] sm:$0x3]
        %v2988 = vlaneseq
        %v2989 = vshrl.u32 %v2988, 7
        %v2990 = vsub.s32 0, %v2989
        %v2991 = vrot.slane %v2986, %v2990
        %v2992 = vlaneseq
        %v2993 = vshrl.u32 %v2992, 7
        %v2994 = vsub.s32 1, %v2993
        %v2995 = vrot.slane %v2986, %v2994
        %v2998 = vadd.f32 %v2918, %v2991
        %v2999 = vadd.f32 %v2920, %v2995
        %v3000 = vsub.f32 0.0, %v2998
        %v3001 = vsub.f32 0.0, %v2999
        %v3002 = vrcp.pop 0.1
        %v3003 = vmul.f32 %v3000, %v3002
        %v3004 = vmul.f32 %v3001, %v3002
        %v3005 = vxor.u32 %v3003, 2147483648
        %v3006 = vxor.u32 %v3004, 2147483648
        %v3007 = vmul.f32 %v3005, 1.442695
        %v3008 = vpow.pop %v3007
        %v3009 = vmul.f32 %v3006, 1.442695
        %v3010 = vpow.pop %v3009
        %v3011 = vadd.f32 %v3008, 1.0
        %v3012 = vadd.f32 %v3010, 1.0
        %v3013 = vrcp.pop %v3011
        %v3014 = vmul.f32 1.0, %v3013
        %v3015 = vrcp.pop %v3012
        %v3016 = vmul.f32 1.0, %v3015
        %v3017 = vmul.f32 %v3014, %v3002
        %v3018 = vmul.f32 %v3016, %v3002
        %3019 = vst [vmem:[%s430] sm:$0xff] %v2978
        %3020 = vst [vmem:[%s430 + $0x8] sm:$0xff] %v2979
        %3021 = vst [vmem:[%s430 + $0x10] sm:$0xff] %v2980
        %3022 = vst [vmem:[%s430 + $0x18] sm:$0xff] %v2981
        %3023 = vst [vmem:[%s430 + $0x20] sm:$0xff] %v2982
        %3024 = vst [vmem:[%s430 + $0x28] sm:$0xff] %v2983
        %3025 = vst [vmem:[%s430 + $0x30] sm:$0xff] %v2984
        %3026 = vst [vmem:[%s430 + $0x38] sm:$0xff] %v2985
        %v3029 = vcombine.low %v3017, %v3018
        %v3031 = vunpack.c.l.s4 1966171168
        %v3032 = vunpack.c.0.s8 %v3031
        %v3033 = vlaneseq
        %v3034 = vshrl.u32 %v3033, 7
        %v3035 = vsub.s32 %v3032, %v3034
        %v3036 = vrot.slane %v3029, %v3035
        %v3038 = vunpack.c.l.s4 1966171168
        %v3039 = vunpack.c.0.s8 %v3038
        %v3040 = vlaneseq
        %v3041 = vshrl.u32 %v3040, 7
        %v3042 = vsub.s32 %v3039, %v3041
        %v3043 = vrot.slane %v3036, %v3042
        %v3045 = vlaneseq
        %vm3046 = vcmp.ge.s32.totalorder %v3045, 0
        %vm3047 = vcmp.lt.s32.totalorder %v3045, 256
        %vm3048 = vmand %vm3046, %vm3047
        %3049 = vst.msk [vmem:[%s437] sm:$0x3] %vm3048, %v3043
        %v3052 = vcombine.low %v2998, %v2999
        %v3054 = vunpack.c.l.s4 1966171168
        %v3055 = vunpack.c.0.s8 %v3054
        %v3056 = vlaneseq
        %v3057 = vshrl.u32 %v3056, 7
        %v3058 = vsub.s32 %v3055, %v3057
        %v3059 = vrot.slane %v3052, %v3058
        %v3061 = vunpack.c.l.s4 1966171168
        %v3062 = vunpack.c.0.s8 %v3061
        %v3063 = vlaneseq
        %v3064 = vshrl.u32 %v3063, 7
        %v3065 = vsub.s32 %v3062, %v3064
        %v3066 = vrot.slane %v3059, %v3065
        %3068 = vst.msk [vmem:[%s444] sm:$0x3] %vm3048, %v3066
        %s3069 = sand.u32 %s219, 1
        %s3070 = scalar_lea.sflag [#allocation4], %s3069
        %s3071 = sand.u32 %s219, 1
        %s3072 = smul.addr %s3071, 64
        %s3073 = scalar_lea.vmem [#allocation7], %s3072
        %s3074 = sand.u32 %s31, 1
        %s3075 = scalar_lea.sflag [#allocation9], %s3074
        %s3076 = sand.u32 %s247, 1
        %s3077 = smul.addr %s3076, 2
        %s3078 = scalar_lea.vmem [#allocation8], %s3077
        %s3079 = sand.u32 %s31, 1
        %s3080 = scalar_lea.sflag [#allocation9], %s3079
        %s3081 = sand.u32 %s275, 1
        %s3082 = smul.addr %s3081, 2
        %s3083 = scalar_lea.vmem [#allocation10], %s3082
        // Predicated region
        $region57: #{tpu_custom_call.1} parent=47 // pred_check
          %p3084 = pneg %p229
        $region58: #{tpu_custom_call.1} parent=47 // pred_check_branch
          %3086 = sbr.rel (%p3084) target = $region60
        $region59: #{tpu_custom_call.1} parent=47 // pred_region
          %s3087 = smul.u32 2, %s36
          %s3089 = ssub.s32 1024, 1024
          %3090 = vsyncadd %s3070, %s3089
          %s3091 = smul.addr %s35, 16
          %s3092 = sadd.s32 %s3087, %s3091
          %s3093 = smul.addr %s3092, 128
          %s3094 = scalar_lea.hbm %s7, %s3093
          %s3095 = sshll.u32 %s3073, 4
          %s3096 = int_to_ptr.vmem [resolvable:$true] %s3095
          %3101 = dma.vmem_to_hbm [thread:$0]  %s3096, 1024, %s3094, %s3070, 256, 512, 16
        $region60: #{tpu_custom_call.1} parent=47 // pred_fallthru
          _
        // Predicated region
        $region61: #{tpu_custom_call.1} parent=47 // pred_check
          %p3102 = pneg %p257
        $region62: #{tpu_custom_call.1} parent=47 // pred_check_branch
          %3104 = sbr.rel (%p3102) target = $region64
        $region63: #{tpu_custom_call.1} parent=47 // pred_region
          %s3105 = smul.u32 2, %s36
          %s3107 = ssub.s32 32, 32
          %3108 = vsyncadd %s3075, %s3107
          %s3109 = smul.addr %s35, 4
          %s3110 = sadd.s32 %s3105, %s3109
          %s3111 = smul.addr %s3110, 16
          %s3112 = scalar_lea.hbm %s8, %s3111
          %s3114 = sshll.u32 %s3078, 4
          %s3115 = int_to_ptr.vmem [resolvable:$true] %s3114
          %3117 = dma.vmem_to_hbm [thread:$0]  %s3115, 32, %s3112, %s3075
        $region64: #{tpu_custom_call.1} parent=47 // pred_fallthru
          _
        // Predicated region
        $region65: #{tpu_custom_call.1} parent=47 // pred_check
          %p3118 = pneg %p285
        $region66: #{tpu_custom_call.1} parent=47 // pred_check_branch
          %3120 = sbr.rel (%p3118) target = $region68
        $region67: #{tpu_custom_call.1} parent=47 // pred_region
          %s3121 = smul.u32 2, %s36
          %s3123 = ssub.s32 32, 32
          %3124 = vsyncadd %s3080, %s3123
          %s3125 = smul.addr %s35, 4
          %s3126 = sadd.s32 %s3121, %s3125
          %s3127 = smul.addr %s3126, 16
          %s3128 = scalar_lea.hbm %s9, %s3127
          %s3130 = sshll.u32 %s3083, 4
          %s3131 = int_to_ptr.vmem [resolvable:$true] %s3130
          %3133 = dma.vmem_to_hbm [thread:$0]  %s3131, 32, %s3128, %s3080
        $region68: #{tpu_custom_call.1} parent=47 // pred_fallthru
          _
      $region48: #{tpu_custom_call.1} parent=5 // pred_fallthru
        _
      %p3134 = scmp.le.s32.totalorder 2, %s26
      // Predicated region
      $region69: #{tpu_custom_call.1} parent=5 // pred_check
        %p3135 = pneg %p3134
      $region70: #{tpu_custom_call.1} parent=5 // pred_check_branch
        %3137 = sbr.rel (%p3135) target = $region72
      $region71: #{tpu_custom_call.1} parent=5 // pred_region
        %s3138 = ssub.s32 %s26, 2
        // Predicated region
        $region73: #{tpu_custom_call.1} parent=71 // pred_check
          %p3139 = pneg %p235
        $region74: #{tpu_custom_call.1} parent=71 // pred_check_branch
          %3141 = sbr.rel (%p3139) target = $region76
        $region75: #{tpu_custom_call.1} parent=71 // pred_region
          %s3142 = sand.u32 %s220, 1
          %s3143 = scalar_lea.sflag [#allocation4], %s3142
          %s3144 = sand.u32 %s220, 1
          %s3145 = smul.addr %s3144, 64
          %s3146 = scalar_lea.vmem [#allocation7], %s3145
          %3147 = dma.done %s3143, 1024
        $region76: #{tpu_custom_call.1} parent=71 // pred_fallthru
          _
        // Predicated region
        $region77: #{tpu_custom_call.1} parent=71 // pred_check
          %p3148 = pneg %p263
        $region78: #{tpu_custom_call.1} parent=71 // pred_check_branch
          %3150 = sbr.rel (%p3148) target = $region80
        $region79: #{tpu_custom_call.1} parent=71 // pred_region
          %s3151 = sand.u32 %s32, 1
          %s3152 = scalar_lea.sflag [#allocation9], %s3151
          %s3153 = sand.u32 %s248, 1
          %s3154 = smul.addr %s3153, 2
          %s3155 = scalar_lea.vmem [#allocation8], %s3154
          %3156 = dma.done %s3152, 32
        $region80: #{tpu_custom_call.1} parent=71 // pred_fallthru
          _
        // Predicated region
        $region81: #{tpu_custom_call.1} parent=71 // pred_check
          %p3157 = pneg %p291
        $region82: #{tpu_custom_call.1} parent=71 // pred_check_branch
          %3159 = sbr.rel (%p3157) target = $region84
        $region83: #{tpu_custom_call.1} parent=71 // pred_region
          %s3160 = sand.u32 %s32, 1
          %s3161 = scalar_lea.sflag [#allocation9], %s3160
          %s3162 = sand.u32 %s276, 1
          %s3163 = smul.addr %s3162, 2
          %s3164 = scalar_lea.vmem [#allocation10], %s3163
          %3165 = dma.done %s3161, 32
        $region84: #{tpu_custom_call.1} parent=71 // pred_fallthru
          _
      $region72: #{tpu_custom_call.1} parent=5 // pred_fallthru
        _
    $region6: #{tpu_custom_call.1} parent=1 // loop_footer
      %s30 = sadd.s32 1, %s26
    $region7: #{tpu_custom_call.1} parent=1 // loop_footer_branch
      %25 = sbr.rel target = $region3
    $region8: #{tpu_custom_call.1} parent=1 // loop_exit
      _
    %3166 = vsyncpa [#allocation3], 1
    %s3167 = scalar_lea.sflag [#allocation3], 1
    %3168 = vsyncpa %s3167, 1
    %3169 = vsyncpa [#allocation6], 1
    %3170 = vsyncpa [#allocation4], 1
    %s3171 = scalar_lea.sflag [#allocation4], 1
    %3172 = vsyncpa %s3171, 1
    %3173 = vsyncpa [#allocation9], 1
    %s3174 = scalar_lea.sflag [#allocation9], 1
    %3175 = vsyncpa %s3174, 1

</llo_original>
